<compile_context>
chip_gen: v7x
topology: tpu7x:2x2x1
jax: 0.10.0
libtpu: 0.0.40
codegen_flags: <defaults>
</compile_context>

<pallas_src>
import functools

import jax
import jax.numpy as jnp
from jax.experimental import pallas as pl
from jax.experimental.pallas import tpu as pltpu

# ----------------------------- configuration --------------------------------
BATCH = 2
IN_CH = 4
IMG = 16
PATCH = 4
EMB = 32
HEADS = 4
HEAD_DIM = EMB // HEADS
DEPTH = 2
EXPANSION = 4
HIDDEN = EMB * EXPANSION
N_CLASSES = 10
N_PATCH = (IMG // PATCH) ** 2          # 16
SEQ = N_PATCH + 1                      # 17 (cls token)
S_PAD = 24                             # SEQ padded to a multiple of 8 sublanes
CPP = IN_CH * PATCH * PATCH            # flattened patch length (64)
LN_EPS = 1e-5
SCALE = float(HEAD_DIM) ** -0.5
NEG_INF = -1e30
HEAD_PAD = 128                         # classifier output padded to 128 lanes


# ----------------------------- in-kernel math --------------------------------
def _gelu(x):
    # tanh-form GELU (EUP tanh; VALU-light).  ~1e-3 vs torch.nn.GELU(erf).
    c0 = 0.7978845608028654            # sqrt(2/pi)
    return 0.5 * x * (1.0 + jnp.tanh(c0 * (x + 0.044715 * x * x * x)))


def _layernorm(x, g, b):
    mean = jnp.mean(x, axis=-1, keepdims=True)
    xc = x - mean
    var = jnp.mean(xc * xc, axis=-1, keepdims=True)
    return xc * jax.lax.rsqrt(var + LN_EPS) * g + b


# ----------------------------- fused kernel ----------------------------------
def _vit_kernel(patches_ref, patch_w_ref, add_ref, kbias_ref, hmask_ref,
                blk_ref, pool_ref, norms_ref, attn_w_ref, attn_b_ref,
                fc1_w_ref, fc1_b_ref, fc2_w_ref, head_w_ref, head_b_ref,
                out_ref):
    f32 = jnp.float32
    hmask = hmask_ref[...]     # (H*R, E)   head-column multiplicative mask
    kbias = kbias_ref[...]     # (R, H*R)   additive key-validity / same-sample mask
    blk = blk_ref[...]         # (H*R, H*R) block-diag ones: per-head denom broadcast

    # patch embedding; add_ref folds cls token + positional emb + conv bias
    x = jnp.dot(patches_ref[...], patch_w_ref[...],
                preferred_element_type=f32) + add_ref[...]            # (R, E)

    for l in range(DEPTH):
        # ---------------- attention sub-block ----------------
        h = _layernorm(x, norms_ref[4 * l], norms_ref[4 * l + 1])
        # softmax scale is pre-folded into the q weights/bias
        q = jnp.dot(h, attn_w_ref[4 * l + 0], preferred_element_type=f32) + attn_b_ref[5 * l + 0]
        k = jnp.dot(h, attn_w_ref[4 * l + 1], preferred_element_type=f32) + attn_b_ref[5 * l + 1]
        v = jnp.dot(h, attn_w_ref[4 * l + 2], preferred_element_type=f32) + attn_b_ref[5 * l + 2]

        # Replicate k/v once per head (sublane concat) and mask each replica to
        # that head's feature columns -> all-head scores in ONE matmul, no
        # 8-lane slices, no K=8 matmuls.
        k_rep = jnp.concatenate([k] * HEADS, axis=0) * hmask          # (H*R, E)
        v_rep = jnp.concatenate([v] * HEADS, axis=0) * hmask          # (H*R, E)

        s = jax.lax.dot_general(q, k_rep, (((1,), (1,)), ((), ())),
                                preferred_element_type=f32)           # (R, H*R)
        s = s + kbias                         # mask padded keys / other samples
        # global row max is constant within each head group -> softmax-safe
        s = s - jnp.max(s, axis=-1, keepdims=True)
        e = jnp.exp(s)
        denom = jnp.dot(e, blk, preferred_element_type=f32)           # per-head sums
        p_attn = e * pl.reciprocal(denom, approx=True)
        o = jnp.dot(p_attn, v_rep, preferred_element_type=f32)        # (R, E) head-concat
        x = x + jnp.dot(o, attn_w_ref[4 * l + 3],
                        preferred_element_type=f32) + attn_b_ref[5 * l + 3]

        # ---------------- MLP sub-block ----------------
        h = _layernorm(x, norms_ref[4 * l + 2], norms_ref[4 * l + 3])
        h = jnp.dot(h, fc1_w_ref[l], preferred_element_type=f32) + fc1_b_ref[l]
        h = _gelu(h)
        x = x + jnp.dot(h, fc2_w_ref[l],
                        preferred_element_type=f32) + attn_b_ref[5 * l + 4]

    # mean over the SEQ real tokens of each sample -> LN -> linear head
    pooled = jnp.dot(pool_ref[...], x, preferred_element_type=f32)    # (CB, E)
    pooled = _layernorm(pooled, norms_ref[4 * DEPTH], norms_ref[4 * DEPTH + 1])
    out_ref[...] = (jnp.dot(pooled, head_w_ref[...],
                            preferred_element_type=f32) + head_b_ref[...])


# ----------------------------- one-time preparation ---------------------------
def _default_num_chunks(batch=BATCH):
    """One grid step per TensorCore: single step on 1-TC chips (v5e/v6e),
    one sample per step on dual-TC v7x so the parallel grid maps onto cores."""
    try:
        kind = jax.devices()[0].device_kind.lower()
    except Exception:
        return 1
    if "v7" in kind and batch % 2 == 0:
        return 2
    return 1


def _build_consts(cb):
    """Constant masks for a chunk of `cb` samples (rows = cb * S_PAD)."""
    rows = cb * S_PAD
    hs = HEADS * rows

    q_sample = jnp.arange(rows) // S_PAD                       # (rows,)
    k_idx = jnp.arange(hs)
    k_within = k_idx % rows
    k_sample = k_within // S_PAD
    k_tok = k_within % S_PAD
    valid = (k_sample[None, :] == q_sample[:, None]) & (k_tok[None, :] < SEQ)
    kbias = jnp.where(valid, 0.0, NEG_INF).astype(jnp.float32)          # (rows, hs)

    head_of_row = k_idx // rows                                         # (hs,)
    head_of_col = jnp.arange(EMB) // HEAD_DIM                           # (EMB,)
    head_mask = (head_of_row[:, None] == head_of_col[None, :]).astype(jnp.float32)   # (hs, E)

    blk_ones = (head_of_row[:, None] == head_of_row[None, :]).astype(jnp.float32)    # (hs, hs)

    r = jnp.arange(rows)
    pool = jnp.where((r[None, :] // S_PAD == jnp.arange(cb)[:, None])
                     & ((r % S_PAD)[None, :] < SEQ),
                     1.0 / SEQ, 0.0).astype(jnp.float32)                # (cb, rows)
    return kbias, head_mask, blk_ones, pool


def prepare_params(params, batch=BATCH, num_chunks=None):
    """One-time conversion of module params into kernel-ready operands.
    (All per-call weight preprocessing is hoisted here, out of the forward.)"""
    if num_chunks is None:
        num_chunks = _default_num_chunks(batch)
    assert batch % num_chunks == 0
    cb = batch // num_chunks

    # Conv2d (E, C, p, p) -> (C*p*p, E) matmul weight
    w_patch = params["patch_w"].reshape(EMB, CPP).T

    # fold cls token + positional embedding + conv bias into one additive map
    pos = params["positions"]
    cls = params["cls_token"].reshape(1, EMB)
    add1 = jnp.concatenate([cls + pos[:1], pos[1:] + params["patch_b"][None, :]], axis=0)
    add1 = jnp.pad(add1, ((0, S_PAD - SEQ), (0, 0)))             # (S_PAD, E)
    add_const = jnp.tile(add1, (cb, 1))                          # (cb*S_PAD, E)

    kbias, head_mask, blk_ones, pool_mat = _build_consts(cb)

    layers = params["layers"]
    # per-layer matrices packed: [q*SCALE, k, v, proj] per layer
    attn_w = jnp.concatenate([
        jnp.stack([l["qkv_w"][:, :EMB] * SCALE,
                   l["qkv_w"][:, EMB:2 * EMB],
                   l["qkv_w"][:, 2 * EMB:],
                   l["proj_w"]], axis=0)
        for l in layers], axis=0)                                # (4*D, E, E)
    # per-layer EMB-length vectors packed: [q_b*SCALE, k_b, v_b, proj_b, fc2_b]
    attn_b = jnp.concatenate([
        jnp.stack([l["qkv_b"][:EMB] * SCALE,
                   l["qkv_b"][EMB:2 * EMB],
                   l["qkv_b"][2 * EMB:],
                   l["proj_b"],
                   l["fc2_b"]], axis=0)
        for l in layers], axis=0)[:, None, :]                    # (5*D, 1, E)
    # LayerNorm params: [ln1_g, ln1_b, ln2_g, ln2_b] per layer + head LN g/b
    norms = jnp.concatenate(
        [jnp.stack([l["ln1_g"], l["ln1_b"], l["ln2_g"], l["ln2_b"]], axis=0)
         for l in layers]
        + [params["head_ln_g"][None, :], params["head_ln_b"][None, :]],
        axis=0)[:, None, :]                                      # (4*D+2, 1, E)
    fc1_w = jnp.stack([l["fc1_w"] for l in layers], axis=0)      # (D, E, HID)
    fc1_b = jnp.stack([l["fc1_b"] for l in layers], axis=0)[:, None, :]   # (D, 1, HID)
    fc2_w = jnp.stack([l["fc2_w"] for l in layers], axis=0)      # (D, HID, E)

    # classifier padded to 128 lanes for a lane-dense output store
    head_w = jnp.pad(params["head_w"], ((0, 0), (0, HEAD_PAD - N_CLASSES)))
    head_b = jnp.pad(params["head_b"], (0, HEAD_PAD - N_CLASSES))[None, :]

    consts = (w_patch, add_const, kbias, head_mask, blk_ones, pool_mat,
              norms, attn_w, attn_b, fc1_w, fc1_b, fc2_w, head_w, head_b)
    consts = tuple(jnp.asarray(c, jnp.float32) for c in consts)
    return {"num_chunks": num_chunks, "chunk": cb, "consts": consts}


# ----------------------------- forward wrapper --------------------------------
def _const_spec(shape):
    zeros = (0,) * len(shape)
    return pl.BlockSpec(shape, lambda g, zeros=zeros: zeros)


def vit_forward(prep, x):
    consts = prep["consts"]
    num_chunks = prep["num_chunks"]
    cb = prep["chunk"]
    rows = cb * S_PAD

    B, C, H, W = x.shape
    p = PATCH
    # extract non-overlapping patches, flattened in (C, ph, pw) order to match
    # the flattened Conv2d weight (E, C, ph, pw)
    patches = x.reshape(B, C, H // p, p, W // p, p)
    patches = patches.transpose(0, 2, 4, 1, 3, 5).reshape(B, N_PATCH, CPP)
    # row 0 of each sample reserved for cls, rows SEQ..S_PAD-1 are zero padding
    patches = jnp.pad(patches, ((0, 0), (1, S_PAD - SEQ), (0, 0)))   # (B, S_PAD, CPP)
    patches = patches.reshape(B * S_PAD, CPP)

    in_specs = [pl.BlockSpec((rows, CPP), lambda g: (g, 0))]
    in_specs += [_const_spec(c.shape) for c in consts]

    out = pl.pallas_call(
        _vit_kernel,
        out_shape=jax.ShapeDtypeStruct((num_chunks, cb, HEAD_PAD), jnp.float32),
        grid=(num_chunks,),
        in_specs=in_specs,
        out_specs=pl.BlockSpec((None, cb, HEAD_PAD), lambda g: (g, 0, 0)),
        compiler_params=pltpu.CompilerParams(
            dimension_semantics=("parallel",)),
    )(patches, *consts)
    return out.reshape(B, HEAD_PAD)[:, :N_CLASSES]                    # (B, n_classes)


# ----------------------------- parameters ------------------------------------
def init_params(key):
    def normal(k, shape, std=0.02):
        return std * jax.random.normal(k, shape, dtype=jnp.float32)

    keys = iter(jax.random.split(key, 8 + DEPTH * 8))
    params = {
        # Conv2d weight kept in PyTorch layout (E, C, p, p); bias (E,)
        "patch_w": normal(next(keys), (EMB, IN_CH, PATCH, PATCH)),
        "patch_b": normal(next(keys), (EMB,)),
        "cls_token": normal(next(keys), (1, 1, EMB)),
        "positions": normal(next(keys), (SEQ, EMB)),
        "head_ln_g": jnp.ones((EMB,), jnp.float32),
        "head_ln_b": jnp.zeros((EMB,), jnp.float32),
        "head_w": normal(next(keys), (EMB, N_CLASSES)),
        "head_b": jnp.zeros((N_CLASSES,), jnp.float32),
        "layers": [],
    }
    for _ in range(DEPTH):
        layer = {
            "ln1_g": jnp.ones((EMB,), jnp.float32),
            "ln1_b": jnp.zeros((EMB,), jnp.float32),
            # Linear weights stored as (in, out) so the kernel does x @ w
            "qkv_w": normal(next(keys), (EMB, 3 * EMB)),
            "qkv_b": jnp.zeros((3 * EMB,), jnp.float32),
            "proj_w": normal(next(keys), (EMB, EMB)),
            "proj_b": jnp.zeros((EMB,), jnp.float32),
            "ln2_g": jnp.ones((EMB,), jnp.float32),
            "ln2_b": jnp.zeros((EMB,), jnp.float32),
            "fc1_w": normal(next(keys), (EMB, HIDDEN)),
            "fc1_b": jnp.zeros((HIDDEN,), jnp.float32),
            "fc2_w": normal(next(keys), (HIDDEN, EMB)),
            "fc2_b": jnp.zeros((EMB,), jnp.float32),
        }
        params["layers"].append(layer)
    return params


# ----------------------------- main -------------------------------------------
if __name__ == "__main__":
    key = jax.random.PRNGKey(0)
    k_params, k_input = jax.random.split(key)
    params = init_params(k_params)
    prep = prepare_params(params)          # one-time weight prep (outside jit)
    x = jax.random.normal(k_input, (BATCH, IN_CH, IMG, IMG), dtype=jnp.float32)

    fwd = jax.jit(functools.partial(vit_forward, prep))
    logits = jax.block_until_ready(fwd(x))

    assert logits.shape == (BATCH, N_CLASSES)
    assert bool(jnp.all(jnp.isfinite(logits)))
    print("KERNEL_OK")
</pallas_src>

<mosaic_0001>
module attributes {stable_mosaic.version = 11 : i64} {
  func.func @_vit_kernel(%arg0: i32, %arg1: memref<48x64xf32, #tpu.memory_space<vmem>>, %arg2: memref<64x32xf32, #tpu.memory_space<vmem>>, %arg3: memref<48x32xf32, #tpu.memory_space<vmem>>, %arg4: memref<48x192xf32, #tpu.memory_space<vmem>>, %arg5: memref<192x32xf32, #tpu.memory_space<vmem>>, %arg6: memref<192x192xf32, #tpu.memory_space<vmem>>, %arg7: memref<2x48xf32, #tpu.memory_space<vmem>>, %arg8: memref<10x1x32xf32, #tpu.memory_space<vmem>>, %arg9: memref<8x32x32xf32, #tpu.memory_space<vmem>>, %arg10: memref<10x1x32xf32, #tpu.memory_space<vmem>>, %arg11: memref<2x32x128xf32, #tpu.memory_space<vmem>>, %arg12: memref<2x1x128xf32, #tpu.memory_space<vmem>>, %arg13: memref<2x128x32xf32, #tpu.memory_space<vmem>>, %arg14: memref<32x128xf32, #tpu.memory_space<vmem>>, %arg15: memref<1x128xf32, #tpu.memory_space<vmem>>, %arg16: memref<1x2x128xf32, #tpu.memory_space<vmem>>) attributes {dimension_semantics = [#tpu.dimension_semantics<parallel>], iteration_bounds = array<i64: 1>, scalar_prefetch = 0 : i64, scratch_operands = 0 : i64, tpu.core_type = #tpu.core_type<tc>, window_params = [{transform_indices = @transform_0, window_bounds = array<i64: 48, 64>}, {pipeline_mode = #tpu.pipeline_mode<synchronous>, transform_indices = @transform_1, window_bounds = array<i64: 64, 32>}, {pipeline_mode = #tpu.pipeline_mode<synchronous>, transform_indices = @transform_2, window_bounds = array<i64: 48, 32>}, {pipeline_mode = #tpu.pipeline_mode<synchronous>, transform_indices = @transform_3, window_bounds = array<i64: 48, 192>}, {pipeline_mode = #tpu.pipeline_mode<synchronous>, transform_indices = @transform_4, window_bounds = array<i64: 192, 32>}, {pipeline_mode = #tpu.pipeline_mode<synchronous>, transform_indices = @transform_5, window_bounds = array<i64: 192, 192>}, {pipeline_mode = #tpu.pipeline_mode<synchronous>, transform_indices = @transform_6, window_bounds = array<i64: 2, 48>}, {pipeline_mode = #tpu.pipeline_mode<synchronous>, transform_indices = @transform_7, window_bounds = array<i64: 10, 1, 32>}, {pipeline_mode = #tpu.pipeline_mode<synchronous>, transform_indices = @transform_8, window_bounds = array<i64: 8, 32, 32>}, {pipeline_mode = #tpu.pipeline_mode<synchronous>, transform_indices = @transform_9, window_bounds = array<i64: 10, 1, 32>}, {pipeline_mode = #tpu.pipeline_mode<synchronous>, transform_indices = @transform_10, window_bounds = array<i64: 2, 32, 128>}, {pipeline_mode = #tpu.pipeline_mode<synchronous>, transform_indices = @transform_11, window_bounds = array<i64: 2, 1, 128>}, {pipeline_mode = #tpu.pipeline_mode<synchronous>, transform_indices = @transform_12, window_bounds = array<i64: 2, 128, 32>}, {pipeline_mode = #tpu.pipeline_mode<synchronous>, transform_indices = @transform_13, window_bounds = array<i64: 32, 128>}, {pipeline_mode = #tpu.pipeline_mode<synchronous>, transform_indices = @transform_14, window_bounds = array<i64: 1, 128>}, {transform_indices = @transform_15, window_bounds = array<i64: 1, 2, 128>}]} {
    %c0 = arith.constant 0 : index
    %c0_0 = arith.constant 0 : index
    %0 = vector.load %arg5[%c0, %c0_0] : memref<192x32xf32, #tpu.memory_space<vmem>>, vector<192x32xf32>
    %c0_1 = arith.constant 0 : index
    %c0_2 = arith.constant 0 : index
    %1 = vector.load %arg4[%c0_1, %c0_2] : memref<48x192xf32, #tpu.memory_space<vmem>>, vector<48x192xf32>
    %c0_3 = arith.constant 0 : index
    %c0_4 = arith.constant 0 : index
    %2 = vector.load %arg6[%c0_3, %c0_4] : memref<192x192xf32, #tpu.memory_space<vmem>>, vector<192x192xf32>
    %c0_5 = arith.constant 0 : index
    %c0_6 = arith.constant 0 : index
    %3 = vector.load %arg1[%c0_5, %c0_6] : memref<48x64xf32, #tpu.memory_space<vmem>>, vector<48x64xf32>
    %c0_7 = arith.constant 0 : index
    %c0_8 = arith.constant 0 : index
    %4 = vector.load %arg2[%c0_7, %c0_8] : memref<64x32xf32, #tpu.memory_space<vmem>>, vector<64x32xf32>
    %cst = arith.constant dense<0.000000e+00> : vector<48x32xf32>
    %5 = tpu.matmul %3, %4, %cst {dimension_numbers = #tpu.dot_dimension_numbers<[1], [0], [0], [1], [0, 0, 1, 1], [], []>} : vector<48x64xf32>, vector<64x32xf32>, vector<48x32xf32> -> vector<48x32xf32>
    %c0_9 = arith.constant 0 : index
    %c0_10 = arith.constant 0 : index
    %6 = vector.load %arg3[%c0_9, %c0_10] : memref<48x32xf32, #tpu.memory_space<vmem>>, vector<48x32xf32>
    %7 = arith.addf %5, %6 : vector<48x32xf32>
    %c0_11 = arith.constant 0 : index
    %c0_12 = arith.constant 0 : index
    %c0_13 = arith.constant 0 : index
    %8 = vector.load %arg8[%c0_11, %c0_12, %c0_13] : memref<10x1x32xf32, #tpu.memory_space<vmem>>, vector<1x1x32xf32>
    %9 = vector.shape_cast %8 : vector<1x1x32xf32> to vector<1x32xf32>
    %c1 = arith.constant 1 : index
    %c0_14 = arith.constant 0 : index
    %c0_15 = arith.constant 0 : index
    %10 = vector.load %arg8[%c1, %c0_14, %c0_15] : memref<10x1x32xf32, #tpu.memory_space<vmem>>, vector<1x1x32xf32>
    %11 = vector.shape_cast %10 : vector<1x1x32xf32> to vector<1x32xf32>
    %cst_16 = arith.constant dense<0.000000e+00> : vector<48xf32>
    %12 = vector.multi_reduction <add>, %7, %cst_16 [1] : vector<48x32xf32> to vector<48xf32>
    %13 = vector.shape_cast %12 : vector<48xf32> to vector<48x1xf32>
    %cst_17 = arith.constant 3.200000e+01 : f32
    %14 = vector.broadcast %cst_17 : f32 to vector<48x1xf32>
    %15 = arith.divf %13, %14 : vector<48x1xf32>
    %16 = vector.broadcast %15 : vector<48x1xf32> to vector<48x32xf32>
    %17 = arith.subf %7, %16 : vector<48x32xf32>
    %18 = arith.mulf %17, %17 : vector<48x32xf32>
    %cst_18 = arith.constant dense<0.000000e+00> : vector<48xf32>
    %19 = vector.multi_reduction <add>, %18, %cst_18 [1] : vector<48x32xf32> to vector<48xf32>
    %20 = vector.shape_cast %19 : vector<48xf32> to vector<48x1xf32>
    %cst_19 = arith.constant 3.200000e+01 : f32
    %21 = vector.broadcast %cst_19 : f32 to vector<48x1xf32>
    %22 = arith.divf %20, %21 : vector<48x1xf32>
    %cst_20 = arith.constant 9.99999974E-6 : f32
    %23 = vector.broadcast %cst_20 : f32 to vector<48x1xf32>
    %24 = arith.addf %22, %23 : vector<48x1xf32>
    %25 = math.rsqrt %24 : vector<48x1xf32>
    %26 = vector.broadcast %25 : vector<48x1xf32> to vector<48x32xf32>
    %27 = arith.mulf %17, %26 : vector<48x32xf32>
    %28 = vector.broadcast %9 : vector<1x32xf32> to vector<48x32xf32>
    %29 = arith.mulf %27, %28 : vector<48x32xf32>
    %30 = vector.broadcast %11 : vector<1x32xf32> to vector<48x32xf32>
    %31 = arith.addf %29, %30 : vector<48x32xf32>
    %c0_21 = arith.constant 0 : index
    %c0_22 = arith.constant 0 : index
    %c0_23 = arith.constant 0 : index
    %32 = vector.load %arg9[%c0_21, %c0_22, %c0_23] : memref<8x32x32xf32, #tpu.memory_space<vmem>>, vector<1x32x32xf32>
    %33 = vector.shape_cast %32 : vector<1x32x32xf32> to vector<32x32xf32>
    %cst_24 = arith.constant dense<0.000000e+00> : vector<48x32xf32>
    %34 = tpu.matmul %31, %33, %cst_24 {dimension_numbers = #tpu.dot_dimension_numbers<[1], [0], [0], [1], [0, 0, 1, 1], [], []>} : vector<48x32xf32>, vector<32x32xf32>, vector<48x32xf32> -> vector<48x32xf32>
    %c0_25 = arith.constant 0 : index
    %c0_26 = arith.constant 0 : index
    %c0_27 = arith.constant 0 : index
    %35 = vector.load %arg10[%c0_25, %c0_26, %c0_27] : memref<10x1x32xf32, #tpu.memory_space<vmem>>, vector<1x1x32xf32>
    %36 = vector.shape_cast %35 : vector<1x1x32xf32> to vector<1x32xf32>
    %37 = vector.broadcast %36 : vector<1x32xf32> to vector<48x32xf32>
    %38 = arith.addf %34, %37 : vector<48x32xf32>
    %c1_28 = arith.constant 1 : index
    %c0_29 = arith.constant 0 : index
    %c0_30 = arith.constant 0 : index
    %39 = vector.load %arg9[%c1_28, %c0_29, %c0_30] : memref<8x32x32xf32, #tpu.memory_space<vmem>>, vector<1x32x32xf32>
    %40 = vector.shape_cast %39 : vector<1x32x32xf32> to vector<32x32xf32>
    %cst_31 = arith.constant dense<0.000000e+00> : vector<48x32xf32>
    %41 = tpu.matmul %31, %40, %cst_31 {dimension_numbers = #tpu.dot_dimension_numbers<[1], [0], [0], [1], [0, 0, 1, 1], [], []>} : vector<48x32xf32>, vector<32x32xf32>, vector<48x32xf32> -> vector<48x32xf32>
    %c1_32 = arith.constant 1 : index
    %c0_33 = arith.constant 0 : index
    %c0_34 = arith.constant 0 : index
    %42 = vector.load %arg10[%c1_32, %c0_33, %c0_34] : memref<10x1x32xf32, #tpu.memory_space<vmem>>, vector<1x1x32xf32>
    %43 = vector.shape_cast %42 : vector<1x1x32xf32> to vector<1x32xf32>
    %44 = vector.broadcast %43 : vector<1x32xf32> to vector<48x32xf32>
    %45 = arith.addf %41, %44 : vector<48x32xf32>
    %c2 = arith.constant 2 : index
    %c0_35 = arith.constant 0 : index
    %c0_36 = arith.constant 0 : index
    %46 = vector.load %arg9[%c2, %c0_35, %c0_36] : memref<8x32x32xf32, #tpu.memory_space<vmem>>, vector<1x32x32xf32>
    %47 = vector.shape_cast %46 : vector<1x32x32xf32> to vector<32x32xf32>
    %cst_37 = arith.constant dense<0.000000e+00> : vector<48x32xf32>
    %48 = tpu.matmul %31, %47, %cst_37 {dimension_numbers = #tpu.dot_dimension_numbers<[1], [0], [0], [1], [0, 0, 1, 1], [], []>} : vector<48x32xf32>, vector<32x32xf32>, vector<48x32xf32> -> vector<48x32xf32>
    %c2_38 = arith.constant 2 : index
    %c0_39 = arith.constant 0 : index
    %c0_40 = arith.constant 0 : index
    %49 = vector.load %arg10[%c2_38, %c0_39, %c0_40] : memref<10x1x32xf32, #tpu.memory_space<vmem>>, vector<1x1x32xf32>
    %50 = vector.shape_cast %49 : vector<1x1x32xf32> to vector<1x32xf32>
    %51 = vector.broadcast %50 : vector<1x32xf32> to vector<48x32xf32>
    %52 = arith.addf %48, %51 : vector<48x32xf32>
    %53 = tpu.concatenate %45, %45, %45, %45 in 0 : vector<48x32xf32>, vector<48x32xf32>, vector<48x32xf32>, vector<48x32xf32> -> vector<192x32xf32>
    %54 = arith.mulf %53, %0 : vector<192x32xf32>
    %55 = tpu.concatenate %52, %52, %52, %52 in 0 : vector<48x32xf32>, vector<48x32xf32>, vector<48x32xf32>, vector<48x32xf32> -> vector<192x32xf32>
    %56 = arith.mulf %55, %0 : vector<192x32xf32>
    %cst_41 = arith.constant dense<0.000000e+00> : vector<48x192xf32>
    %57 = tpu.matmul %38, %54, %cst_41 {dimension_numbers = #tpu.dot_dimension_numbers<[1], [1], [0], [0], [0, 0, 1, 0], [], []>} : vector<48x32xf32>, vector<192x32xf32>, vector<48x192xf32> -> vector<48x192xf32>
    %58 = arith.addf %57, %1 : vector<48x192xf32>
    %cst_42 = arith.constant dense<0xFF800000> : vector<48xf32>
    %59 = vector.multi_reduction <maximumf>, %58, %cst_42 [1] : vector<48x192xf32> to vector<48xf32>
    %60 = vector.shape_cast %59 : vector<48xf32> to vector<48x1xf32>
    %61 = vector.broadcast %60 : vector<48x1xf32> to vector<48x192xf32>
    %62 = arith.subf %58, %61 : vector<48x192xf32>
    %63 = math.exp %62 : vector<48x192xf32>
    %cst_43 = arith.constant dense<0.000000e+00> : vector<48x192xf32>
    %64 = tpu.matmul %63, %2, %cst_43 {dimension_numbers = #tpu.dot_dimension_numbers<[1], [0], [0], [1], [0, 0, 1, 1], [], []>} : vector<48x192xf32>, vector<192x192xf32>, vector<48x192xf32> -> vector<48x192xf32>
    %65 = tpu.reciprocal %64 {approx = true} : vector<48x192xf32> -> vector<48x192xf32>
    %66 = arith.mulf %63, %65 : vector<48x192xf32>
    %cst_44 = arith.constant dense<0.000000e+00> : vector<48x32xf32>
    %67 = tpu.matmul %66, %56, %cst_44 {dimension_numbers = #tpu.dot_dimension_numbers<[1], [0], [0], [1], [0, 0, 1, 1], [], []>} : vector<48x192xf32>, vector<192x32xf32>, vector<48x32xf32> -> vector<48x32xf32>
    %c3 = arith.constant 3 : index
    %c0_45 = arith.constant 0 : index
    %c0_46 = arith.constant 0 : index
    %68 = vector.load %arg9[%c3, %c0_45, %c0_46] : memref<8x32x32xf32, #tpu.memory_space<vmem>>, vector<1x32x32xf32>
    %69 = vector.shape_cast %68 : vector<1x32x32xf32> to vector<32x32xf32>
    %cst_47 = arith.constant dense<0.000000e+00> : vector<48x32xf32>
    %70 = tpu.matmul %67, %69, %cst_47 {dimension_numbers = #tpu.dot_dimension_numbers<[1], [0], [0], [1], [0, 0, 1, 1], [], []>} : vector<48x32xf32>, vector<32x32xf32>, vector<48x32xf32> -> vector<48x32xf32>
    %71 = arith.addf %7, %70 : vector<48x32xf32>
    %c3_48 = arith.constant 3 : index
    %c0_49 = arith.constant 0 : index
    %c0_50 = arith.constant 0 : index
    %72 = vector.load %arg10[%c3_48, %c0_49, %c0_50] : memref<10x1x32xf32, #tpu.memory_space<vmem>>, vector<1x1x32xf32>
    %73 = vector.shape_cast %72 : vector<1x1x32xf32> to vector<1x32xf32>
    %74 = vector.broadcast %73 : vector<1x32xf32> to vector<48x32xf32>
    %75 = arith.addf %71, %74 : vector<48x32xf32>
    %c2_51 = arith.constant 2 : index
    %c0_52 = arith.constant 0 : index
    %c0_53 = arith.constant 0 : index
    %76 = vector.load %arg8[%c2_51, %c0_52, %c0_53] : memref<10x1x32xf32, #tpu.memory_space<vmem>>, vector<1x1x32xf32>
    %77 = vector.shape_cast %76 : vector<1x1x32xf32> to vector<1x32xf32>
    %c3_54 = arith.constant 3 : index
    %c0_55 = arith.constant 0 : index
    %c0_56 = arith.constant 0 : index
    %78 = vector.load %arg8[%c3_54, %c0_55, %c0_56] : memref<10x1x32xf32, #tpu.memory_space<vmem>>, vector<1x1x32xf32>
    %79 = vector.shape_cast %78 : vector<1x1x32xf32> to vector<1x32xf32>
    %cst_57 = arith.constant dense<0.000000e+00> : vector<48xf32>
    %80 = vector.multi_reduction <add>, %75, %cst_57 [1] : vector<48x32xf32> to vector<48xf32>
    %81 = vector.shape_cast %80 : vector<48xf32> to vector<48x1xf32>
    %cst_58 = arith.constant 3.200000e+01 : f32
    %82 = vector.broadcast %cst_58 : f32 to vector<48x1xf32>
    %83 = arith.divf %81, %82 : vector<48x1xf32>
    %84 = vector.broadcast %83 : vector<48x1xf32> to vector<48x32xf32>
    %85 = arith.subf %75, %84 : vector<48x32xf32>
    %86 = arith.mulf %85, %85 : vector<48x32xf32>
    %cst_59 = arith.constant dense<0.000000e+00> : vector<48xf32>
    %87 = vector.multi_reduction <add>, %86, %cst_59 [1] : vector<48x32xf32> to vector<48xf32>
    %88 = vector.shape_cast %87 : vector<48xf32> to vector<48x1xf32>
    %cst_60 = arith.constant 3.200000e+01 : f32
    %89 = vector.broadcast %cst_60 : f32 to vector<48x1xf32>
    %90 = arith.divf %88, %89 : vector<48x1xf32>
    %cst_61 = arith.constant 9.99999974E-6 : f32
    %91 = vector.broadcast %cst_61 : f32 to vector<48x1xf32>
    %92 = arith.addf %90, %91 : vector<48x1xf32>
    %93 = math.rsqrt %92 : vector<48x1xf32>
    %94 = vector.broadcast %93 : vector<48x1xf32> to vector<48x32xf32>
    %95 = arith.mulf %85, %94 : vector<48x32xf32>
    %96 = vector.broadcast %77 : vector<1x32xf32> to vector<48x32xf32>
    %97 = arith.mulf %95, %96 : vector<48x32xf32>
    %98 = vector.broadcast %79 : vector<1x32xf32> to vector<48x32xf32>
    %99 = arith.addf %97, %98 : vector<48x32xf32>
    %c0_62 = arith.constant 0 : index
    %c0_63 = arith.constant 0 : index
    %c0_64 = arith.constant 0 : index
    %100 = vector.load %arg11[%c0_62, %c0_63, %c0_64] : memref<2x32x128xf32, #tpu.memory_space<vmem>>, vector<1x32x128xf32>
    %101 = vector.shape_cast %100 : vector<1x32x128xf32> to vector<32x128xf32>
    %cst_65 = arith.constant dense<0.000000e+00> : vector<48x128xf32>
    %102 = tpu.matmul %99, %101, %cst_65 {dimension_numbers = #tpu.dot_dimension_numbers<[1], [0], [0], [1], [0, 0, 1, 1], [], []>} : vector<48x32xf32>, vector<32x128xf32>, vector<48x128xf32> -> vector<48x128xf32>
    %c0_66 = arith.constant 0 : index
    %c0_67 = arith.constant 0 : index
    %c0_68 = arith.constant 0 : index
    %103 = vector.load %arg12[%c0_66, %c0_67, %c0_68] : memref<2x1x128xf32, #tpu.memory_space<vmem>>, vector<1x1x128xf32>
    %104 = vector.shape_cast %103 : vector<1x1x128xf32> to vector<1x128xf32>
    %105 = vector.broadcast %104 : vector<1x128xf32> to vector<48x128xf32>
    %106 = arith.addf %102, %105 : vector<48x128xf32>
    %cst_69 = arith.constant 5.000000e-01 : f32
    %107 = vector.broadcast %cst_69 : f32 to vector<48x128xf32>
    %108 = arith.mulf %107, %106 : vector<48x128xf32>
    %cst_70 = arith.constant 4.471500e-02 : f32
    %109 = vector.broadcast %cst_70 : f32 to vector<48x128xf32>
    %110 = arith.mulf %109, %106 : vector<48x128xf32>
    %111 = arith.mulf %110, %106 : vector<48x128xf32>
    %112 = arith.mulf %111, %106 : vector<48x128xf32>
    %113 = arith.addf %106, %112 : vector<48x128xf32>
    %cst_71 = arith.constant 0.797884583 : f32
    %114 = vector.broadcast %cst_71 : f32 to vector<48x128xf32>
    %115 = arith.mulf %114, %113 : vector<48x128xf32>
    %116 = math.tanh %115 : vector<48x128xf32>
    %cst_72 = arith.constant 1.000000e+00 : f32
    %117 = vector.broadcast %cst_72 : f32 to vector<48x128xf32>
    %118 = arith.addf %117, %116 : vector<48x128xf32>
    %119 = arith.mulf %108, %118 : vector<48x128xf32>
    %c0_73 = arith.constant 0 : index
    %c0_74 = arith.constant 0 : index
    %c0_75 = arith.constant 0 : index
    %120 = vector.load %arg13[%c0_73, %c0_74, %c0_75] : memref<2x128x32xf32, #tpu.memory_space<vmem>>, vector<1x128x32xf32>
    %121 = vector.shape_cast %120 : vector<1x128x32xf32> to vector<128x32xf32>
    %cst_76 = arith.constant dense<0.000000e+00> : vector<48x32xf32>
    %122 = tpu.matmul %119, %121, %cst_76 {dimension_numbers = #tpu.dot_dimension_numbers<[1], [0], [0], [1], [0, 0, 1, 1], [], []>} : vector<48x128xf32>, vector<128x32xf32>, vector<48x32xf32> -> vector<48x32xf32>
    %123 = arith.addf %75, %122 : vector<48x32xf32>
    %c4 = arith.constant 4 : index
    %c0_77 = arith.constant 0 : index
    %c0_78 = arith.constant 0 : index
    %124 = vector.load %arg10[%c4, %c0_77, %c0_78] : memref<10x1x32xf32, #tpu.memory_space<vmem>>, vector<1x1x32xf32>
    %125 = vector.shape_cast %124 : vector<1x1x32xf32> to vector<1x32xf32>
    %126 = vector.broadcast %125 : vector<1x32xf32> to vector<48x32xf32>
    %127 = arith.addf %123, %126 : vector<48x32xf32>
    %c4_79 = arith.constant 4 : index
    %c0_80 = arith.constant 0 : index
    %c0_81 = arith.constant 0 : index
    %128 = vector.load %arg8[%c4_79, %c0_80, %c0_81] : memref<10x1x32xf32, #tpu.memory_space<vmem>>, vector<1x1x32xf32>
    %129 = vector.shape_cast %128 : vector<1x1x32xf32> to vector<1x32xf32>
    %c5 = arith.constant 5 : index
    %c0_82 = arith.constant 0 : index
    %c0_83 = arith.constant 0 : index
    %130 = vector.load %arg8[%c5, %c0_82, %c0_83] : memref<10x1x32xf32, #tpu.memory_space<vmem>>, vector<1x1x32xf32>
    %131 = vector.shape_cast %130 : vector<1x1x32xf32> to vector<1x32xf32>
    %cst_84 = arith.constant dense<0.000000e+00> : vector<48xf32>
    %132 = vector.multi_reduction <add>, %127, %cst_84 [1] : vector<48x32xf32> to vector<48xf32>
    %133 = vector.shape_cast %132 : vector<48xf32> to vector<48x1xf32>
    %cst_85 = arith.constant 3.200000e+01 : f32
    %134 = vector.broadcast %cst_85 : f32 to vector<48x1xf32>
    %135 = arith.divf %133, %134 : vector<48x1xf32>
    %136 = vector.broadcast %135 : vector<48x1xf32> to vector<48x32xf32>
    %137 = arith.subf %127, %136 : vector<48x32xf32>
    %138 = arith.mulf %137, %137 : vector<48x32xf32>
    %cst_86 = arith.constant dense<0.000000e+00> : vector<48xf32>
    %139 = vector.multi_reduction <add>, %138, %cst_86 [1] : vector<48x32xf32> to vector<48xf32>
    %140 = vector.shape_cast %139 : vector<48xf32> to vector<48x1xf32>
    %cst_87 = arith.constant 3.200000e+01 : f32
    %141 = vector.broadcast %cst_87 : f32 to vector<48x1xf32>
    %142 = arith.divf %140, %141 : vector<48x1xf32>
    %cst_88 = arith.constant 9.99999974E-6 : f32
    %143 = vector.broadcast %cst_88 : f32 to vector<48x1xf32>
    %144 = arith.addf %142, %143 : vector<48x1xf32>
    %145 = math.rsqrt %144 : vector<48x1xf32>
    %146 = vector.broadcast %145 : vector<48x1xf32> to vector<48x32xf32>
    %147 = arith.mulf %137, %146 : vector<48x32xf32>
    %148 = vector.broadcast %129 : vector<1x32xf32> to vector<48x32xf32>
    %149 = arith.mulf %147, %148 : vector<48x32xf32>
    %150 = vector.broadcast %131 : vector<1x32xf32> to vector<48x32xf32>
    %151 = arith.addf %149, %150 : vector<48x32xf32>
    %c4_89 = arith.constant 4 : index
    %c0_90 = arith.constant 0 : index
    %c0_91 = arith.constant 0 : index
    %152 = vector.load %arg9[%c4_89, %c0_90, %c0_91] : memref<8x32x32xf32, #tpu.memory_space<vmem>>, vector<1x32x32xf32>
    %153 = vector.shape_cast %152 : vector<1x32x32xf32> to vector<32x32xf32>
    %cst_92 = arith.constant dense<0.000000e+00> : vector<48x32xf32>
    %154 = tpu.matmul %151, %153, %cst_92 {dimension_numbers = #tpu.dot_dimension_numbers<[1], [0], [0], [1], [0, 0, 1, 1], [], []>} : vector<48x32xf32>, vector<32x32xf32>, vector<48x32xf32> -> vector<48x32xf32>
    %c5_93 = arith.constant 5 : index
    %c0_94 = arith.constant 0 : index
    %c0_95 = arith.constant 0 : index
    %155 = vector.load %arg10[%c5_93, %c0_94, %c0_95] : memref<10x1x32xf32, #tpu.memory_space<vmem>>, vector<1x1x32xf32>
    %156 = vector.shape_cast %155 : vector<1x1x32xf32> to vector<1x32xf32>
    %157 = vector.broadcast %156 : vector<1x32xf32> to vector<48x32xf32>
    %158 = arith.addf %154, %157 : vector<48x32xf32>
    %c5_96 = arith.constant 5 : index
    %c0_97 = arith.constant 0 : index
    %c0_98 = arith.constant 0 : index
    %159 = vector.load %arg9[%c5_96, %c0_97, %c0_98] : memref<8x32x32xf32, #tpu.memory_space<vmem>>, vector<1x32x32xf32>
    %160 = vector.shape_cast %159 : vector<1x32x32xf32> to vector<32x32xf32>
    %cst_99 = arith.constant dense<0.000000e+00> : vector<48x32xf32>
    %161 = tpu.matmul %151, %160, %cst_99 {dimension_numbers = #tpu.dot_dimension_numbers<[1], [0], [0], [1], [0, 0, 1, 1], [], []>} : vector<48x32xf32>, vector<32x32xf32>, vector<48x32xf32> -> vector<48x32xf32>
    %c6 = arith.constant 6 : index
    %c0_100 = arith.constant 0 : index
    %c0_101 = arith.constant 0 : index
    %162 = vector.load %arg10[%c6, %c0_100, %c0_101] : memref<10x1x32xf32, #tpu.memory_space<vmem>>, vector<1x1x32xf32>
    %163 = vector.shape_cast %162 : vector<1x1x32xf32> to vector<1x32xf32>
    %164 = vector.broadcast %163 : vector<1x32xf32> to vector<48x32xf32>
    %165 = arith.addf %161, %164 : vector<48x32xf32>
    %c6_102 = arith.constant 6 : index
    %c0_103 = arith.constant 0 : index
    %c0_104 = arith.constant 0 : index
    %166 = vector.load %arg9[%c6_102, %c0_103, %c0_104] : memref<8x32x32xf32, #tpu.memory_space<vmem>>, vector<1x32x32xf32>
    %167 = vector.shape_cast %166 : vector<1x32x32xf32> to vector<32x32xf32>
    %cst_105 = arith.constant dense<0.000000e+00> : vector<48x32xf32>
    %168 = tpu.matmul %151, %167, %cst_105 {dimension_numbers = #tpu.dot_dimension_numbers<[1], [0], [0], [1], [0, 0, 1, 1], [], []>} : vector<48x32xf32>, vector<32x32xf32>, vector<48x32xf32> -> vector<48x32xf32>
    %c7 = arith.constant 7 : index
    %c0_106 = arith.constant 0 : index
    %c0_107 = arith.constant 0 : index
    %169 = vector.load %arg10[%c7, %c0_106, %c0_107] : memref<10x1x32xf32, #tpu.memory_space<vmem>>, vector<1x1x32xf32>
    %170 = vector.shape_cast %169 : vector<1x1x32xf32> to vector<1x32xf32>
    %171 = vector.broadcast %170 : vector<1x32xf32> to vector<48x32xf32>
    %172 = arith.addf %168, %171 : vector<48x32xf32>
    %173 = tpu.concatenate %165, %165, %165, %165 in 0 : vector<48x32xf32>, vector<48x32xf32>, vector<48x32xf32>, vector<48x32xf32> -> vector<192x32xf32>
    %174 = arith.mulf %173, %0 : vector<192x32xf32>
    %175 = tpu.concatenate %172, %172, %172, %172 in 0 : vector<48x32xf32>, vector<48x32xf32>, vector<48x32xf32>, vector<48x32xf32> -> vector<192x32xf32>
    %176 = arith.mulf %175, %0 : vector<192x32xf32>
    %cst_108 = arith.constant dense<0.000000e+00> : vector<48x192xf32>
    %177 = tpu.matmul %158, %174, %cst_108 {dimension_numbers = #tpu.dot_dimension_numbers<[1], [1], [0], [0], [0, 0, 1, 0], [], []>} : vector<48x32xf32>, vector<192x32xf32>, vector<48x192xf32> -> vector<48x192xf32>
    %178 = arith.addf %177, %1 : vector<48x192xf32>
    %cst_109 = arith.constant dense<0xFF800000> : vector<48xf32>
    %179 = vector.multi_reduction <maximumf>, %178, %cst_109 [1] : vector<48x192xf32> to vector<48xf32>
    %180 = vector.shape_cast %179 : vector<48xf32> to vector<48x1xf32>
    %181 = vector.broadcast %180 : vector<48x1xf32> to vector<48x192xf32>
    %182 = arith.subf %178, %181 : vector<48x192xf32>
    %183 = math.exp %182 : vector<48x192xf32>
    %cst_110 = arith.constant dense<0.000000e+00> : vector<48x192xf32>
    %184 = tpu.matmul %183, %2, %cst_110 {dimension_numbers = #tpu.dot_dimension_numbers<[1], [0], [0], [1], [0, 0, 1, 1], [], []>} : vector<48x192xf32>, vector<192x192xf32>, vector<48x192xf32> -> vector<48x192xf32>
    %185 = tpu.reciprocal %184 {approx = true} : vector<48x192xf32> -> vector<48x192xf32>
    %186 = arith.mulf %183, %185 : vector<48x192xf32>
    %cst_111 = arith.constant dense<0.000000e+00> : vector<48x32xf32>
    %187 = tpu.matmul %186, %176, %cst_111 {dimension_numbers = #tpu.dot_dimension_numbers<[1], [0], [0], [1], [0, 0, 1, 1], [], []>} : vector<48x192xf32>, vector<192x32xf32>, vector<48x32xf32> -> vector<48x32xf32>
    %c7_112 = arith.constant 7 : index
    %c0_113 = arith.constant 0 : index
    %c0_114 = arith.constant 0 : index
    %188 = vector.load %arg9[%c7_112, %c0_113, %c0_114] : memref<8x32x32xf32, #tpu.memory_space<vmem>>, vector<1x32x32xf32>
    %189 = vector.shape_cast %188 : vector<1x32x32xf32> to vector<32x32xf32>
    %cst_115 = arith.constant dense<0.000000e+00> : vector<48x32xf32>
    %190 = tpu.matmul %187, %189, %cst_115 {dimension_numbers = #tpu.dot_dimension_numbers<[1], [0], [0], [1], [0, 0, 1, 1], [], []>} : vector<48x32xf32>, vector<32x32xf32>, vector<48x32xf32> -> vector<48x32xf32>
    %191 = arith.addf %127, %190 : vector<48x32xf32>
    %c8 = arith.constant 8 : index
    %c0_116 = arith.constant 0 : index
    %c0_117 = arith.constant 0 : index
    %192 = vector.load %arg10[%c8, %c0_116, %c0_117] : memref<10x1x32xf32, #tpu.memory_space<vmem>>, vector<1x1x32xf32>
    %193 = vector.shape_cast %192 : vector<1x1x32xf32> to vector<1x32xf32>
    %194 = vector.broadcast %193 : vector<1x32xf32> to vector<48x32xf32>
    %195 = arith.addf %191, %194 : vector<48x32xf32>
    %c6_118 = arith.constant 6 : index
    %c0_119 = arith.constant 0 : index
    %c0_120 = arith.constant 0 : index
    %196 = vector.load %arg8[%c6_118, %c0_119, %c0_120] : memref<10x1x32xf32, #tpu.memory_space<vmem>>, vector<1x1x32xf32>
    %197 = vector.shape_cast %196 : vector<1x1x32xf32> to vector<1x32xf32>
    %c7_121 = arith.constant 7 : index
    %c0_122 = arith.constant 0 : index
    %c0_123 = arith.constant 0 : index
    %198 = vector.load %arg8[%c7_121, %c0_122, %c0_123] : memref<10x1x32xf32, #tpu.memory_space<vmem>>, vector<1x1x32xf32>
    %199 = vector.shape_cast %198 : vector<1x1x32xf32> to vector<1x32xf32>
    %cst_124 = arith.constant dense<0.000000e+00> : vector<48xf32>
    %200 = vector.multi_reduction <add>, %195, %cst_124 [1] : vector<48x32xf32> to vector<48xf32>
    %201 = vector.shape_cast %200 : vector<48xf32> to vector<48x1xf32>
    %cst_125 = arith.constant 3.200000e+01 : f32
    %202 = vector.broadcast %cst_125 : f32 to vector<48x1xf32>
    %203 = arith.divf %201, %202 : vector<48x1xf32>
    %204 = vector.broadcast %203 : vector<48x1xf32> to vector<48x32xf32>
    %205 = arith.subf %195, %204 : vector<48x32xf32>
    %206 = arith.mulf %205, %205 : vector<48x32xf32>
    %cst_126 = arith.constant dense<0.000000e+00> : vector<48xf32>
    %207 = vector.multi_reduction <add>, %206, %cst_126 [1] : vector<48x32xf32> to vector<48xf32>
    %208 = vector.shape_cast %207 : vector<48xf32> to vector<48x1xf32>
    %cst_127 = arith.constant 3.200000e+01 : f32
    %209 = vector.broadcast %cst_127 : f32 to vector<48x1xf32>
    %210 = arith.divf %208, %209 : vector<48x1xf32>
    %cst_128 = arith.constant 9.99999974E-6 : f32
    %211 = vector.broadcast %cst_128 : f32 to vector<48x1xf32>
    %212 = arith.addf %210, %211 : vector<48x1xf32>
    %213 = math.rsqrt %212 : vector<48x1xf32>
    %214 = vector.broadcast %213 : vector<48x1xf32> to vector<48x32xf32>
    %215 = arith.mulf %205, %214 : vector<48x32xf32>
    %216 = vector.broadcast %197 : vector<1x32xf32> to vector<48x32xf32>
    %217 = arith.mulf %215, %216 : vector<48x32xf32>
    %218 = vector.broadcast %199 : vector<1x32xf32> to vector<48x32xf32>
    %219 = arith.addf %217, %218 : vector<48x32xf32>
    %c1_129 = arith.constant 1 : index
    %c0_130 = arith.constant 0 : index
    %c0_131 = arith.constant 0 : index
    %220 = vector.load %arg11[%c1_129, %c0_130, %c0_131] : memref<2x32x128xf32, #tpu.memory_space<vmem>>, vector<1x32x128xf32>
    %221 = vector.shape_cast %220 : vector<1x32x128xf32> to vector<32x128xf32>
    %cst_132 = arith.constant dense<0.000000e+00> : vector<48x128xf32>
    %222 = tpu.matmul %219, %221, %cst_132 {dimension_numbers = #tpu.dot_dimension_numbers<[1], [0], [0], [1], [0, 0, 1, 1], [], []>} : vector<48x32xf32>, vector<32x128xf32>, vector<48x128xf32> -> vector<48x128xf32>
    %c1_133 = arith.constant 1 : index
    %c0_134 = arith.constant 0 : index
    %c0_135 = arith.constant 0 : index
    %223 = vector.load %arg12[%c1_133, %c0_134, %c0_135] : memref<2x1x128xf32, #tpu.memory_space<vmem>>, vector<1x1x128xf32>
    %224 = vector.shape_cast %223 : vector<1x1x128xf32> to vector<1x128xf32>
    %225 = vector.broadcast %224 : vector<1x128xf32> to vector<48x128xf32>
    %226 = arith.addf %222, %225 : vector<48x128xf32>
    %cst_136 = arith.constant 5.000000e-01 : f32
    %227 = vector.broadcast %cst_136 : f32 to vector<48x128xf32>
    %228 = arith.mulf %227, %226 : vector<48x128xf32>
    %cst_137 = arith.constant 4.471500e-02 : f32
    %229 = vector.broadcast %cst_137 : f32 to vector<48x128xf32>
    %230 = arith.mulf %229, %226 : vector<48x128xf32>
    %231 = arith.mulf %230, %226 : vector<48x128xf32>
    %232 = arith.mulf %231, %226 : vector<48x128xf32>
    %233 = arith.addf %226, %232 : vector<48x128xf32>
    %cst_138 = arith.constant 0.797884583 : f32
    %234 = vector.broadcast %cst_138 : f32 to vector<48x128xf32>
    %235 = arith.mulf %234, %233 : vector<48x128xf32>
    %236 = math.tanh %235 : vector<48x128xf32>
    %cst_139 = arith.constant 1.000000e+00 : f32
    %237 = vector.broadcast %cst_139 : f32 to vector<48x128xf32>
    %238 = arith.addf %237, %236 : vector<48x128xf32>
    %239 = arith.mulf %228, %238 : vector<48x128xf32>
    %c1_140 = arith.constant 1 : index
    %c0_141 = arith.constant 0 : index
    %c0_142 = arith.constant 0 : index
    %240 = vector.load %arg13[%c1_140, %c0_141, %c0_142] : memref<2x128x32xf32, #tpu.memory_space<vmem>>, vector<1x128x32xf32>
    %241 = vector.shape_cast %240 : vector<1x128x32xf32> to vector<128x32xf32>
    %cst_143 = arith.constant dense<0.000000e+00> : vector<48x32xf32>
    %242 = tpu.matmul %239, %241, %cst_143 {dimension_numbers = #tpu.dot_dimension_numbers<[1], [0], [0], [1], [0, 0, 1, 1], [], []>} : vector<48x128xf32>, vector<128x32xf32>, vector<48x32xf32> -> vector<48x32xf32>
    %243 = arith.addf %195, %242 : vector<48x32xf32>
    %c9 = arith.constant 9 : index
    %c0_144 = arith.constant 0 : index
    %c0_145 = arith.constant 0 : index
    %244 = vector.load %arg10[%c9, %c0_144, %c0_145] : memref<10x1x32xf32, #tpu.memory_space<vmem>>, vector<1x1x32xf32>
    %245 = vector.shape_cast %244 : vector<1x1x32xf32> to vector<1x32xf32>
    %246 = vector.broadcast %245 : vector<1x32xf32> to vector<48x32xf32>
    %247 = arith.addf %243, %246 : vector<48x32xf32>
    %c0_146 = arith.constant 0 : index
    %c0_147 = arith.constant 0 : index
    %248 = vector.load %arg7[%c0_146, %c0_147] : memref<2x48xf32, #tpu.memory_space<vmem>>, vector<2x48xf32>
    %cst_148 = arith.constant dense<0.000000e+00> : vector<2x32xf32>
    %249 = tpu.matmul %248, %247, %cst_148 {dimension_numbers = #tpu.dot_dimension_numbers<[1], [0], [0], [1], [0, 0, 1, 1], [], []>} : vector<2x48xf32>, vector<48x32xf32>, vector<2x32xf32> -> vector<2x32xf32>
    %c8_149 = arith.constant 8 : index
    %c0_150 = arith.constant 0 : index
    %c0_151 = arith.constant 0 : index
    %250 = vector.load %arg8[%c8_149, %c0_150, %c0_151] : memref<10x1x32xf32, #tpu.memory_space<vmem>>, vector<1x1x32xf32>
    %251 = vector.shape_cast %250 : vector<1x1x32xf32> to vector<1x32xf32>
    %c9_152 = arith.constant 9 : index
    %c0_153 = arith.constant 0 : index
    %c0_154 = arith.constant 0 : index
    %252 = vector.load %arg8[%c9_152, %c0_153, %c0_154] : memref<10x1x32xf32, #tpu.memory_space<vmem>>, vector<1x1x32xf32>
    %253 = vector.shape_cast %252 : vector<1x1x32xf32> to vector<1x32xf32>
    %cst_155 = arith.constant dense<0.000000e+00> : vector<2xf32>
    %254 = vector.multi_reduction <add>, %249, %cst_155 [1] : vector<2x32xf32> to vector<2xf32>
    %255 = vector.shape_cast %254 : vector<2xf32> to vector<2x1xf32>
    %cst_156 = arith.constant 3.200000e+01 : f32
    %256 = vector.broadcast %cst_156 : f32 to vector<2x1xf32>
    %257 = arith.divf %255, %256 : vector<2x1xf32>
    %258 = vector.broadcast %257 : vector<2x1xf32> to vector<2x32xf32>
    %259 = arith.subf %249, %258 : vector<2x32xf32>
    %260 = arith.mulf %259, %259 : vector<2x32xf32>
    %cst_157 = arith.constant dense<0.000000e+00> : vector<2xf32>
    %261 = vector.multi_reduction <add>, %260, %cst_157 [1] : vector<2x32xf32> to vector<2xf32>
    %262 = vector.shape_cast %261 : vector<2xf32> to vector<2x1xf32>
    %cst_158 = arith.constant 3.200000e+01 : f32
    %263 = vector.broadcast %cst_158 : f32 to vector<2x1xf32>
    %264 = arith.divf %262, %263 : vector<2x1xf32>
    %cst_159 = arith.constant 9.99999974E-6 : f32
    %265 = vector.broadcast %cst_159 : f32 to vector<2x1xf32>
    %266 = arith.addf %264, %265 : vector<2x1xf32>
    %267 = math.rsqrt %266 : vector<2x1xf32>
    %268 = vector.broadcast %267 : vector<2x1xf32> to vector<2x32xf32>
    %269 = arith.mulf %259, %268 : vector<2x32xf32>
    %270 = vector.broadcast %251 : vector<1x32xf32> to vector<2x32xf32>
    %271 = arith.mulf %269, %270 : vector<2x32xf32>
    %272 = vector.broadcast %253 : vector<1x32xf32> to vector<2x32xf32>
    %273 = arith.addf %271, %272 : vector<2x32xf32>
    %c0_160 = arith.constant 0 : index
    %c0_161 = arith.constant 0 : index
    %274 = vector.load %arg14[%c0_160, %c0_161] : memref<32x128xf32, #tpu.memory_space<vmem>>, vector<32x128xf32>
    %cst_162 = arith.constant dense<0.000000e+00> : vector<2x128xf32>
    %275 = tpu.matmul %273, %274, %cst_162 {dimension_numbers = #tpu.dot_dimension_numbers<[1], [0], [0], [1], [0, 0, 1, 1], [], []>} : vector<2x32xf32>, vector<32x128xf32>, vector<2x128xf32> -> vector<2x128xf32>
    %c0_163 = arith.constant 0 : index
    %c0_164 = arith.constant 0 : index
    %276 = vector.load %arg15[%c0_163, %c0_164] : memref<1x128xf32, #tpu.memory_space<vmem>>, vector<1x128xf32>
    %277 = vector.broadcast %276 : vector<1x128xf32> to vector<2x128xf32>
    %278 = arith.addf %275, %277 : vector<2x128xf32>
    %c0_165 = arith.constant 0 : index
    %c0_166 = arith.constant 0 : index
    %c0_167 = arith.constant 0 : index
    %279 = vector.load %arg16[%c0_165, %c0_166, %c0_167] : memref<1x2x128xf32, #tpu.memory_space<vmem>>, vector<1x2x128xf32>
    %280 = vector.shape_cast %279 : vector<1x2x128xf32> to vector<2x128xf32>
    %281 = vector.shape_cast %278 : vector<2x128xf32> to vector<1x2x128xf32>
    tpu.vector_store %arg16[%c0_165, %c0_166, %c0_167], %281 {strides = array<i32>} : memref<1x2x128xf32, #tpu.memory_space<vmem>>, vector<1x2x128xf32>,
    return
  }
  func.func @transform_0(%arg0: i32) -> (i32, i32) {
    %c0_i32 = arith.constant 0 : i32
    %c0_i32_0 = arith.constant 0 : i32
    return %arg0, %c0_i32 : i32, i32
  }
  func.func @transform_1(%arg0: i32) -> (i32, i32) {
    %c0_i32 = arith.constant 0 : i32
    %c0_i32_0 = arith.constant 0 : i32
    %c0_i32_1 = arith.constant 0 : i32
    return %c0_i32, %c0_i32_0 : i32, i32
  }
  func.func @transform_2(%arg0: i32) -> (i32, i32) {
    %c0_i32 = arith.constant 0 : i32
    %c0_i32_0 = arith.constant 0 : i32
    %c0_i32_1 = arith.constant 0 : i32
    return %c0_i32, %c0_i32_0 : i32, i32
  }
  func.func @transform_3(%arg0: i32) -> (i32, i32) {
    %c0_i32 = arith.constant 0 : i32
    %c0_i32_0 = arith.constant 0 : i32
    %c0_i32_1 = arith.constant 0 : i32
    return %c0_i32, %c0_i32_0 : i32, i32
  }
  func.func @transform_4(%arg0: i32) -> (i32, i32) {
    %c0_i32 = arith.constant 0 : i32
    %c0_i32_0 = arith.constant 0 : i32
    %c0_i32_1 = arith.constant 0 : i32
    return %c0_i32, %c0_i32_0 : i32, i32
  }
  func.func @transform_5(%arg0: i32) -> (i32, i32) {
    %c0_i32 = arith.constant 0 : i32
    %c0_i32_0 = arith.constant 0 : i32
    %c0_i32_1 = arith.constant 0 : i32
    return %c0_i32, %c0_i32_0 : i32, i32
  }
  func.func @transform_6(%arg0: i32) -> (i32, i32) {
    %c0_i32 = arith.constant 0 : i32
    %c0_i32_0 = arith.constant 0 : i32
    %c0_i32_1 = arith.constant 0 : i32
    return %c0_i32, %c0_i32_0 : i32, i32
  }
  func.func @transform_7(%arg0: i32) -> (i32, i32, i32) {
    %c0_i32 = arith.constant 0 : i32
    %c0_i32_0 = arith.constant 0 : i32
    %c0_i32_1 = arith.constant 0 : i32
    %c0_i32_2 = arith.constant 0 : i32
    return %c0_i32, %c0_i32_0, %c0_i32_1 : i32, i32, i32
  }
  func.func @transform_8(%arg0: i32) -> (i32, i32, i32) {
    %c0_i32 = arith.constant 0 : i32
    %c0_i32_0 = arith.constant 0 : i32
    %c0_i32_1 = arith.constant 0 : i32
    %c0_i32_2 = arith.constant 0 : i32
    return %c0_i32, %c0_i32_0, %c0_i32_1 : i32, i32, i32
  }
  func.func @transform_9(%arg0: i32) -> (i32, i32, i32) {
    %c0_i32 = arith.constant 0 : i32
    %c0_i32_0 = arith.constant 0 : i32
    %c0_i32_1 = arith.constant 0 : i32
    %c0_i32_2 = arith.constant 0 : i32
    return %c0_i32, %c0_i32_0, %c0_i32_1 : i32, i32, i32
  }
  func.func @transform_10(%arg0: i32) -> (i32, i32, i32) {
    %c0_i32 = arith.constant 0 : i32
    %c0_i32_0 = arith.constant 0 : i32
    %c0_i32_1 = arith.constant 0 : i32
    %c0_i32_2 = arith.constant 0 : i32
    return %c0_i32, %c0_i32_0, %c0_i32_1 : i32, i32, i32
  }
  func.func @transform_11(%arg0: i32) -> (i32, i32, i32) {
    %c0_i32 = arith.constant 0 : i32
    %c0_i32_0 = arith.constant 0 : i32
    %c0_i32_1 = arith.constant 0 : i32
    %c0_i32_2 = arith.constant 0 : i32
    return %c0_i32, %c0_i32_0, %c0_i32_1 : i32, i32, i32
  }
  func.func @transform_12(%arg0: i32) -> (i32, i32, i32) {
    %c0_i32 = arith.constant 0 : i32
    %c0_i32_0 = arith.constant 0 : i32
    %c0_i32_1 = arith.constant 0 : i32
    %c0_i32_2 = arith.constant 0 : i32
    return %c0_i32, %c0_i32_0, %c0_i32_1 : i32, i32, i32
  }
  func.func @transform_13(%arg0: i32) -> (i32, i32) {
    %c0_i32 = arith.constant 0 : i32
    %c0_i32_0 = arith.constant 0 : i32
    %c0_i32_1 = arith.constant 0 : i32
    return %c0_i32, %c0_i32_0 : i32, i32
  }
  func.func @transform_14(%arg0: i32) -> (i32, i32) {
    %c0_i32 = arith.constant 0 : i32
    %c0_i32_0 = arith.constant 0 : i32
    %c0_i32_1 = arith.constant 0 : i32
    return %c0_i32, %c0_i32_0 : i32, i32
  }
  func.func @transform_15(%arg0: i32) -> (i32, i32, i32) {
    %c0_i32 = arith.constant 0 : i32
    %c0_i32_0 = arith.constant 0 : i32
    %c0_i32_1 = arith.constant 0 : i32
    return %arg0, %c0_i32, %c0_i32_0 : i32, i32, i32
  }
}

</mosaic_0001>

<llo_original>
// kernel: vit_forward.1
$region0: #{vit_forward.1}
  #allocation0 [shape = 'u32[]', space=smem, size = 0x4, offset = 0x4, fixed_abs, tag = 'smem constant byte address 0x4 - core index']
  #allocation1 [shape = 'u32[144,128]{1,0:T(1,128)}', space=vmem, size = 0x12000, scoped, tag = 'internal scratch']
  %s0 = inlined_call_operand.vmem [shape: f32[48,64], index: 0, kind: input, shape index: {}]
  %s1 = inlined_call_operand.vmem [shape: f32[64,32], index: 1, kind: input, shape index: {}]
  %s2 = inlined_call_operand.vmem [shape: f32[48,32], index: 2, kind: input, shape index: {}]
  %s3 = inlined_call_operand.vmem [shape: f32[48,192], index: 3, kind: input, shape index: {}]
  %s4 = inlined_call_operand.vmem [shape: f32[192,32], index: 4, kind: input, shape index: {}]
  %s5 = inlined_call_operand.vmem [shape: f32[192,192], index: 5, kind: input, shape index: {}]
  %s6 = inlined_call_operand.vmem [shape: f32[2,48], index: 6, kind: input, shape index: {}]
  %s7 = inlined_call_operand.vmem [shape: f32[10,1,32], index: 7, kind: input, shape index: {}]
  %s8 = inlined_call_operand.vmem [shape: f32[8,32,32], index: 8, kind: input, shape index: {}]
  %s9 = inlined_call_operand.vmem [shape: f32[10,1,32], index: 9, kind: input, shape index: {}]
  %s10 = inlined_call_operand.vmem [shape: f32[2,32,128], index: 10, kind: input, shape index: {}]
  %s11 = inlined_call_operand.vmem [shape: f32[2,1,128], index: 11, kind: input, shape index: {}]
  %s12 = inlined_call_operand.vmem [shape: f32[2,128,32], index: 12, kind: input, shape index: {}]
  %s13 = inlined_call_operand.vmem [shape: f32[32,128], index: 13, kind: input, shape index: {}]
  %s14 = inlined_call_operand.vmem [shape: f32[1,128], index: 14, kind: input, shape index: {}]
  %s15 = inlined_call_operand.hbm [shape: f32[1,2,128], index: 15, kind: output, shape index: {}]
  %s16 = sld [smem:[#allocation0]]
  $region70: #{vit_forward.1} parent=0
    _
  %s18 = ssub.s32 1, %s16
  %s19 = scalar_select 0, %s18, %s16
  $region1: #{vit_forward.1} parent=0
    #allocation2 [shape = 'u8[1024]{0}', space=vmem, size = 0x400, scoped, tag = 'output window, operand 0, single buffered']
    #allocation3 [shape = 's32[1]{0}', space=sflag, size = 0x4, scoped, tag = 'scoped memory for vit_forward.1']
    %20 = vsyncpa [#allocation3], 0
    // Predicated region
    $region2: #{vit_forward.1} parent=1 // pred_check
      _
    $region3: #{vit_forward.1} parent=1 // pred_check_branch
      %22 = sbr.rel (0) target = $region5
    $region4: #{vit_forward.1} parent=1 // pred_region
      _
    $region5: #{vit_forward.1} parent=1 // pred_fallthru
      _
    // Predicated region
    $region6: #{vit_forward.1} parent=1 // pred_check
      _
    $region7: #{vit_forward.1} parent=1 // pred_check_branch
      %24 = sbr.rel (0) target = $region9
    $region8: #{vit_forward.1} parent=1 // pred_region
      _
    $region9: #{vit_forward.1} parent=1 // pred_fallthru
      _
    // Predicated region
    $region10: #{vit_forward.1} parent=1 // pred_check
      _
    $region11: #{vit_forward.1} parent=1 // pred_check_branch
      %26 = sbr.rel (0) target = $region13
    $region12: #{vit_forward.1} parent=1 // pred_region
      _
    $region13: #{vit_forward.1} parent=1 // pred_fallthru
      _
    // Predicated region
    $region14: #{vit_forward.1} parent=1 // pred_check
      _
    $region15: #{vit_forward.1} parent=1 // pred_check_branch
      %28 = sbr.rel (0) target = $region17
    $region16: #{vit_forward.1} parent=1 // pred_region
      _
    $region17: #{vit_forward.1} parent=1 // pred_fallthru
      _
    // Predicated region
    $region18: #{vit_forward.1} parent=1 // pred_check
      _
    $region19: #{vit_forward.1} parent=1 // pred_check_branch
      %30 = sbr.rel (0) target = $region21
    $region20: #{vit_forward.1} parent=1 // pred_region
      _
    $region21: #{vit_forward.1} parent=1 // pred_fallthru
      _
    // Predicated region
    $region22: #{vit_forward.1} parent=1 // pred_check
      _
    $region23: #{vit_forward.1} parent=1 // pred_check_branch
      %32 = sbr.rel (0) target = $region25
    $region24: #{vit_forward.1} parent=1 // pred_region
      _
    $region25: #{vit_forward.1} parent=1 // pred_fallthru
      _
    // Predicated region
    $region26: #{vit_forward.1} parent=1 // pred_check
      _
    $region27: #{vit_forward.1} parent=1 // pred_check_branch
      %34 = sbr.rel (0) target = $region29
    $region28: #{vit_forward.1} parent=1 // pred_region
      _
    $region29: #{vit_forward.1} parent=1 // pred_fallthru
      _
    // Predicated region
    $region30: #{vit_forward.1} parent=1 // pred_check
      _
    $region31: #{vit_forward.1} parent=1 // pred_check_branch
      %36 = sbr.rel (0) target = $region33
    $region32: #{vit_forward.1} parent=1 // pred_region
      _
    $region33: #{vit_forward.1} parent=1 // pred_fallthru
      _
    // Predicated region
    $region34: #{vit_forward.1} parent=1 // pred_check
      _
    $region35: #{vit_forward.1} parent=1 // pred_check_branch
      %38 = sbr.rel (0) target = $region37
    $region36: #{vit_forward.1} parent=1 // pred_region
      _
    $region37: #{vit_forward.1} parent=1 // pred_fallthru
      _
    // Predicated region
    $region38: #{vit_forward.1} parent=1 // pred_check
      _
    $region39: #{vit_forward.1} parent=1 // pred_check_branch
      %40 = sbr.rel (0) target = $region41
    $region40: #{vit_forward.1} parent=1 // pred_region
      _
    $region41: #{vit_forward.1} parent=1 // pred_fallthru
      _
    // Predicated region
    $region42: #{vit_forward.1} parent=1 // pred_check
      _
    $region43: #{vit_forward.1} parent=1 // pred_check_branch
      %42 = sbr.rel (0) target = $region45
    $region44: #{vit_forward.1} parent=1 // pred_region
      _
    $region45: #{vit_forward.1} parent=1 // pred_fallthru
      _
    // Predicated region
    $region46: #{vit_forward.1} parent=1 // pred_check
      _
    $region47: #{vit_forward.1} parent=1 // pred_check_branch
      %44 = sbr.rel (0) target = $region49
    $region48: #{vit_forward.1} parent=1 // pred_region
      _
    $region49: #{vit_forward.1} parent=1 // pred_fallthru
      _
    // Predicated region
    $region50: #{vit_forward.1} parent=1 // pred_check
      _
    $region51: #{vit_forward.1} parent=1 // pred_check_branch
      %46 = sbr.rel (0) target = $region53
    $region52: #{vit_forward.1} parent=1 // pred_region
      _
    $region53: #{vit_forward.1} parent=1 // pred_fallthru
      _
    // Predicated region
    $region54: #{vit_forward.1} parent=1 // pred_check
      _
    $region55: #{vit_forward.1} parent=1 // pred_check_branch
      %48 = sbr.rel (0) target = $region57
    $region56: #{vit_forward.1} parent=1 // pred_region
      _
    $region57: #{vit_forward.1} parent=1 // pred_fallthru
      _
    // Predicated region
    $region58: #{vit_forward.1} parent=1 // pred_check
      _
    $region59: #{vit_forward.1} parent=1 // pred_check_branch
      %50 = sbr.rel (0) target = $region61
    $region60: #{vit_forward.1} parent=1 // pred_region
      _
    $region61: #{vit_forward.1} parent=1 // pred_fallthru
      _
    %v51 = vld [vmem:[%s4] sm:$0xff]
    %v52 = vld [vmem:[%s4 + $0x8] sm:$0xff]
    %v53 = vld [vmem:[%s4 + $0x10] sm:$0xff]
    %v54 = vld [vmem:[%s4 + $0x18] sm:$0xff]
    %v55 = vld [vmem:[%s4 + $0x20] sm:$0xff]
    %v56 = vld [vmem:[%s4 + $0x28] sm:$0xff]
    %v57 = vld [vmem:[%s4 + $0x30] sm:$0xff]
    %v58 = vld [vmem:[%s4 + $0x38] sm:$0xff]
    %v59 = vld [vmem:[%s4 + $0x40] sm:$0xff]
    %v60 = vld [vmem:[%s4 + $0x48] sm:$0xff]
    %v61 = vld [vmem:[%s4 + $0x50] sm:$0xff]
    %v62 = vld [vmem:[%s4 + $0x58] sm:$0xff]
    %v63 = vld [vmem:[%s4 + $0x60] sm:$0xff]
    %v64 = vld [vmem:[%s4 + $0x68] sm:$0xff]
    %v65 = vld [vmem:[%s4 + $0x70] sm:$0xff]
    %v66 = vld [vmem:[%s4 + $0x78] sm:$0xff]
    %v67 = vld [vmem:[%s4 + $0x80] sm:$0xff]
    %v68 = vld [vmem:[%s4 + $0x88] sm:$0xff]
    %v69 = vld [vmem:[%s4 + $0x90] sm:$0xff]
    %v70 = vld [vmem:[%s4 + $0x98] sm:$0xff]
    %v71 = vld [vmem:[%s4 + $0xa0] sm:$0xff]
    %v72 = vld [vmem:[%s4 + $0xa8] sm:$0xff]
    %v73 = vld [vmem:[%s4 + $0xb0] sm:$0xff]
    %v74 = vld [vmem:[%s4 + $0xb8] sm:$0xff]
    %v75 = vld [vmem:[%s3] sm:$0xff]
    %v76 = vld [vmem:[%s3 + $0x8] sm:$0xff]
    %v77 = vld [vmem:[%s3 + $0x10] sm:$0xff]
    %v78 = vld [vmem:[%s3 + $0x18] sm:$0xff]
    %v79 = vld [vmem:[%s3 + $0x20] sm:$0xff]
    %v80 = vld [vmem:[%s3 + $0x28] sm:$0xff]
    %v81 = vld [vmem:[%s3 + $0x30] sm:$0xff]
    %v82 = vld [vmem:[%s3 + $0x38] sm:$0xff]
    %v83 = vld [vmem:[%s3 + $0x40] sm:$0xff]
    %v84 = vld [vmem:[%s3 + $0x48] sm:$0xff]
    %v85 = vld [vmem:[%s3 + $0x50] sm:$0xff]
    %v86 = vld [vmem:[%s3 + $0x58] sm:$0xff]
    %v87 = vld [vmem:[%s5] sm:$0xff]
    %v88 = vld [vmem:[%s5 + $0x8] sm:$0xff]
    %v89 = vld [vmem:[%s5 + $0x10] sm:$0xff]
    %v90 = vld [vmem:[%s5 + $0x18] sm:$0xff]
    %v91 = vld [vmem:[%s5 + $0x20] sm:$0xff]
    %v92 = vld [vmem:[%s5 + $0x28] sm:$0xff]
    %v93 = vld [vmem:[%s5 + $0x30] sm:$0xff]
    %v94 = vld [vmem:[%s5 + $0x38] sm:$0xff]
    %v95 = vld [vmem:[%s5 + $0x40] sm:$0xff]
    %v96 = vld [vmem:[%s5 + $0x48] sm:$0xff]
    %v97 = vld [vmem:[%s5 + $0x50] sm:$0xff]
    %v98 = vld [vmem:[%s5 + $0x58] sm:$0xff]
    %v99 = vld [vmem:[%s5 + $0x60] sm:$0xff]
    %v100 = vld [vmem:[%s5 + $0x68] sm:$0xff]
    %v101 = vld [vmem:[%s5 + $0x70] sm:$0xff]
    %v102 = vld [vmem:[%s5 + $0x78] sm:$0xff]
    %v103 = vld [vmem:[%s5 + $0x80] sm:$0xff]
    %v104 = vld [vmem:[%s5 + $0x88] sm:$0xff]
    %v105 = vld [vmem:[%s5 + $0x90] sm:$0xff]
    %v106 = vld [vmem:[%s5 + $0x98] sm:$0xff]
    %v107 = vld [vmem:[%s5 + $0xa0] sm:$0xff]
    %v108 = vld [vmem:[%s5 + $0xa8] sm:$0xff]
    %v109 = vld [vmem:[%s5 + $0xb0] sm:$0xff]
    %v110 = vld [vmem:[%s5 + $0xb8] sm:$0xff]
    %v111 = vld [vmem:[%s5 + $0xc0] sm:$0xff]
    %v112 = vld [vmem:[%s5 + $0xc8] sm:$0xff]
    %v113 = vld [vmem:[%s5 + $0xd0] sm:$0xff]
    %v114 = vld [vmem:[%s5 + $0xd8] sm:$0xff]
    %v115 = vld [vmem:[%s5 + $0xe0] sm:$0xff]
    %v116 = vld [vmem:[%s5 + $0xe8] sm:$0xff]
    %v117 = vld [vmem:[%s5 + $0xf0] sm:$0xff]
    %v118 = vld [vmem:[%s5 + $0xf8] sm:$0xff]
    %v119 = vld [vmem:[%s5 + $0x100] sm:$0xff]
    %v120 = vld [vmem:[%s5 + $0x108] sm:$0xff]
    %v121 = vld [vmem:[%s5 + $0x110] sm:$0xff]
    %v122 = vld [vmem:[%s5 + $0x118] sm:$0xff]
    %v123 = vld [vmem:[%s5 + $0x120] sm:$0xff]
    %v124 = vld [vmem:[%s5 + $0x128] sm:$0xff]
    %v125 = vld [vmem:[%s5 + $0x130] sm:$0xff]
    %v126 = vld [vmem:[%s5 + $0x138] sm:$0xff]
    %v127 = vld [vmem:[%s5 + $0x140] sm:$0xff]
    %v128 = vld [vmem:[%s5 + $0x148] sm:$0xff]
    %v129 = vld [vmem:[%s5 + $0x150] sm:$0xff]
    %v130 = vld [vmem:[%s5 + $0x158] sm:$0xff]
    %v131 = vld [vmem:[%s5 + $0x160] sm:$0xff]
    %v132 = vld [vmem:[%s5 + $0x168] sm:$0xff]
    %v133 = vld [vmem:[%s5 + $0x170] sm:$0xff]
    %v134 = vld [vmem:[%s5 + $0x178] sm:$0xff]
    %v135 = vld [vmem:[%s0] sm:$0xff]
    %v136 = vld [vmem:[%s0 + $0x8] sm:$0xff]
    %v137 = vld [vmem:[%s0 + $0x10] sm:$0xff]
    %v138 = vld [vmem:[%s0 + $0x18] sm:$0xff]
    %v139 = vld [vmem:[%s0 + $0x20] sm:$0xff]
    %v140 = vld [vmem:[%s0 + $0x28] sm:$0xff]
    %v141 = vld [vmem:[%s1] sm:$0xff]
    %v142 = vld [vmem:[%s1 + $0x8] sm:$0xff]
    %v143 = vld [vmem:[%s1 + $0x10] sm:$0xff]
    %v144 = vld [vmem:[%s1 + $0x18] sm:$0xff]
    %v145 = vld [vmem:[%s1 + $0x20] sm:$0xff]
    %v146 = vld [vmem:[%s1 + $0x28] sm:$0xff]
    %v147 = vld [vmem:[%s1 + $0x30] sm:$0xff]
    %v148 = vld [vmem:[%s1 + $0x38] sm:$0xff]
    %v149 = vld [vmem:[%s2] sm:$0xff]
    %v150 = vld [vmem:[%s2 + $0x8] sm:$0xff]
    %v151 = vld [vmem:[%s2 + $0x10] sm:$0xff]
    %v152 = vld [vmem:[%s2 + $0x18] sm:$0xff]
    %v153 = vld [vmem:[%s2 + $0x20] sm:$0xff]
    %v154 = vld [vmem:[%s2 + $0x28] sm:$0xff]
    %vm155 = vcmask 523264
    %v157 = vsel %vm155, %v135, 0
    %v160 = vsel %vm155, %v136, 0
    %v163 = vsel %vm155, %v137, 0
    %v166 = vsel %vm155, %v138, 0
    %v169 = vsel %vm155, %v139, 0
    %v172 = vsel %vm155, %v140, 0
    %174 = vmatprep.subr.mxu0 0.0
    %175 = vmatpush1.msra.mxu0 %v141
    %176 = vmatprep.subr.mxu0 0.0
    %177 = vmatpush1.msra.mxu0 %v142
    %178 = vmatprep.subr.mxu0 0.0
    %179 = vmatpush1.msra.mxu0 %v143
    %180 = vmatprep.subr.mxu0 0.0
    %181 = vmatpush1.msra.mxu0 %v144
    %182 = vmatprep.subr.mxu0 0.0
    %183 = vmatpush1.msra.mxu0 %v145
    %184 = vmatprep.subr.mxu0 0.0
    %185 = vmatpush1.msra.mxu0 %v146
    %186 = vmatprep.subr.mxu0 0.0
    %187 = vmatpush1.msra.mxu0 %v147
    %188 = vmatprep.subr.mxu0 0.0
    %189 = vmatpush1.msra.mxu0 %v148
    %190 = vmatprep.subr.mxu0 0.0
    %191 = vmatpush1.msra.mxu0 0.0
    %192 = vmatprep.subr.mxu0 0.0
    %193 = vmatpush1.msra.mxu0 0.0
    %194 = vmatprep.subr.mxu0 0.0
    %195 = vmatpush1.msra.mxu0 0.0
    %196 = vmatprep.subr.mxu0 0.0
    %197 = vmatpush1.msra.mxu0 0.0
    %198 = vmatprep.subr.mxu0 0.0
    %199 = vmatpush1.msra.mxu0 0.0
    %200 = vmatprep.subr.mxu0 0.0
    %201 = vmatpush1.msra.mxu0 0.0
    %202 = vmatprep.subr.mxu0 0.0
    %203 = vmatpush1.msra.mxu0 0.0
    %204 = vmatprep.subr.mxu0 0.0
    %205 = vmatpush1.msra.mxu0 0.0
    %206 = vmatprep.subr.mxu0 0.0
    %207 = vmatpush1.msra.mxu0 0.0
    %208 = vmatprep.subr.mxu0 0.0
    %209 = vmatpush1.msra.mxu0 0.0
    %210 = vmatprep.subr.mxu0 0.0
    %211 = vmatpush1.msra.mxu0 0.0
    %212 = vmatprep.subr.mxu0 0.0
    %213 = vmatpush1.msra.mxu0 0.0
    %214 = vmatprep.subr.mxu0 0.0
    %215 = vmatpush1.msra.mxu0 0.0
    %216 = vmatprep.subr.mxu0 0.0
    %217 = vmatpush1.msra.mxu0 0.0
    %218 = vmatprep.subr.mxu0 0.0
    %219 = vmatpush1.msra.mxu0 0.0
    %220 = vmatprep.subr.mxu0 0.0
    %221 = vmatpush1.msra.mxu0 0.0
    %222 = vmatprep.subr.mxu0 0.0
    %223 = vmatpush1.msra.mxu0 0.0
    %224 = vmatprep.subr.mxu0 0.0
    %225 = vmatpush1.msra.mxu0 0.0
    %226 = vmatprep.subr.mxu0 0.0
    %227 = vmatpush1.msra.mxu0 0.0
    %228 = vmatprep.subr.mxu0 0.0
    %229 = vmatpush1.msra.mxu0 0.0
    %230 = vmatprep.subr.mxu0 0.0
    %231 = vmatpush1.msra.mxu0 0.0
    %232 = vmatprep.subr.mxu0 0.0
    %233 = vmatpush1.msra.mxu0 0.0
    %234 = vmatprep.subr.mxu0 0.0
    %235 = vmatpush1.msra.mxu0 0.0
    %236 = vmatprep.subr.mxu0 0.0
    %237 = vmatpush1.msra.mxu0 0.0
    %238 = vmatprep.mubr.f32.mxu0 0.0
    %239 = vmatmul.mubr.f32.gmra.mrb[0].mxu0 %v157
    %v240 = vpop.f32.mrb[0].mxu0
    %v241 = vadd.f32 %v149, %v240
    %v242 = vpop.f32.mrb[0].mxu0
    %243 = vmatprep.mubr.f32.mxu0 0.0
    %244 = vmatmul.mubr.f32.gmra.mrb[0].mxu0 %v160
    %v245 = vpop.f32.mrb[0].mxu0
    %v246 = vadd.f32 %v150, %v245
    %v247 = vpop.f32.mrb[0].mxu0
    %248 = vmatprep.mubr.f32.mxu0 0.0
    %249 = vmatmul.mubr.f32.gmra.mrb[0].mxu0 %v163
    %v250 = vpop.f32.mrb[0].mxu0
    %v251 = vadd.f32 %v151, %v250
    %v252 = vpop.f32.mrb[0].mxu0
    %253 = vmatprep.mubr.f32.mxu0 0.0
    %254 = vmatmul.mubr.f32.gmra.mrb[0].mxu0 %v166
    %v255 = vpop.f32.mrb[0].mxu0
    %v256 = vadd.f32 %v152, %v255
    %v257 = vpop.f32.mrb[0].mxu0
    %258 = vmatprep.mubr.f32.mxu0 0.0
    %259 = vmatmul.mubr.f32.gmra.mrb[0].mxu0 %v169
    %v260 = vpop.f32.mrb[0].mxu0
    %v261 = vadd.f32 %v153, %v260
    %v262 = vpop.f32.mrb[0].mxu0
    %263 = vmatprep.mubr.f32.mxu0 0.0
    %264 = vmatmul.mubr.f32.gmra.mrb[0].mxu0 %v172
    %v265 = vpop.f32.mrb[0].mxu0
    %v266 = vadd.f32 %v154, %v265
    %v267 = vpop.f32.mrb[0].mxu0
    %268 = vdwg.mxu0
    %v269 = vld [vmem:[%s7] sm:$0x1]
    %s270 = scalar_lea.vmem %s7, 1
    %v271 = vld [vmem:[%s270] sm:$0x1]
    %vm272 = vcmask 261120
    %v273 = vsel %vm272, %v241, 0.0
    %274 = vadd.xlane.f32.xlu0 %v273
    %v275 = vpop.xlane.xlu0 %274
    %v276 = vsel %vm272, %v246, 0.0
    %277 = vadd.xlane.f32.xlu0 %v276
    %v278 = vpop.xlane.xlu0 %277
    %v279 = vsel %vm272, %v251, 0.0
    %280 = vadd.xlane.f32.xlu0 %v279
    %v281 = vpop.xlane.xlu0 %280
    %v282 = vsel %vm272, %v256, 0.0
    %283 = vadd.xlane.f32.xlu0 %v282
    %v284 = vpop.xlane.xlu0 %283
    %v285 = vsel %vm272, %v261, 0.0
    %286 = vadd.xlane.f32.xlu0 %v285
    %v287 = vpop.xlane.xlu0 %286
    %v288 = vsel %vm272, %v266, 0.0
    %289 = vadd.xlane.f32.xlu0 %v288
    %v290 = vpop.xlane.xlu0 %289
    %v291 = vrcp.pop 32.0
    %v292 = vmul.f32 %v275, %v291
    %v293 = vmul.f32 %v278, %v291
    %v294 = vmul.f32 %v281, %v291
    %v295 = vmul.f32 %v284, %v291
    %v296 = vmul.f32 %v287, %v291
    %v297 = vmul.f32 %v290, %v291
    %v298 = vsub.f32 %v241, %v292
    %v299 = vsub.f32 %v246, %v293
    %v300 = vsub.f32 %v251, %v294
    %v301 = vsub.f32 %v256, %v295
    %v302 = vsub.f32 %v261, %v296
    %v303 = vsub.f32 %v266, %v297
    %v304 = vmul.f32 %v298, %v298
    %v305 = vmul.f32 %v299, %v299
    %v306 = vmul.f32 %v300, %v300
    %v307 = vmul.f32 %v301, %v301
    %v308 = vmul.f32 %v302, %v302
    %v309 = vmul.f32 %v303, %v303
    %v310 = vsel %vm272, %v304, 0.0
    %311 = vadd.xlane.f32.xlu0 %v310
    %v312 = vpop.xlane.xlu0 %311
    %v313 = vsel %vm272, %v305, 0.0
    %314 = vadd.xlane.f32.xlu0 %v313
    %v315 = vpop.xlane.xlu0 %314
    %v316 = vsel %vm272, %v306, 0.0
    %317 = vadd.xlane.f32.xlu0 %v316
    %v318 = vpop.xlane.xlu0 %317
    %v319 = vsel %vm272, %v307, 0.0
    %320 = vadd.xlane.f32.xlu0 %v319
    %v321 = vpop.xlane.xlu0 %320
    %v322 = vsel %vm272, %v308, 0.0
    %323 = vadd.xlane.f32.xlu0 %v322
    %v324 = vpop.xlane.xlu0 %323
    %v325 = vsel %vm272, %v309, 0.0
    %326 = vadd.xlane.f32.xlu0 %v325
    %v327 = vpop.xlane.xlu0 %326
    %v328 = vmul.f32 %v312, %v291
    %v329 = vmul.f32 %v315, %v291
    %v330 = vmul.f32 %v318, %v291
    %v331 = vmul.f32 %v321, %v291
    %v332 = vmul.f32 %v324, %v291
    %v333 = vmul.f32 %v327, %v291
    %v334 = vadd.f32 %v328, 1e-05
    %v335 = vadd.f32 %v329, 1e-05
    %v336 = vadd.f32 %v330, 1e-05
    %v337 = vadd.f32 %v331, 1e-05
    %v338 = vadd.f32 %v332, 1e-05
    %v339 = vadd.f32 %v333, 1e-05
    %v340 = vrsqrt.pop %v334
    %v341 = vrsqrt.pop %v335
    %v342 = vrsqrt.pop %v336
    %v343 = vrsqrt.pop %v337
    %v344 = vrsqrt.pop %v338
    %v345 = vrsqrt.pop %v339
    %v346 = vmul.f32 %v298, %v340
    %v347 = vmul.f32 %v299, %v341
    %v348 = vmul.f32 %v300, %v342
    %v349 = vmul.f32 %v301, %v343
    %v350 = vmul.f32 %v302, %v344
    %v351 = vmul.f32 %v303, %v345
    %v353 = vlaneseq
    %v354 = vshrl.u32 %v353, 7
    %v355 = vsub.s32 0, %v354
    %v356 = vrot.slane %v269, %v355
    %v358 = vmul.f32 %v346, %v356
    %v359 = vmul.f32 %v347, %v356
    %v360 = vmul.f32 %v348, %v356
    %v361 = vmul.f32 %v349, %v356
    %v362 = vmul.f32 %v350, %v356
    %v363 = vmul.f32 %v351, %v356
    %v365 = vlaneseq
    %v366 = vshrl.u32 %v365, 7
    %v367 = vsub.s32 0, %v366
    %v368 = vrot.slane %v271, %v367
    %v370 = vadd.f32 %v358, %v368
    %v371 = vadd.f32 %v359, %v368
    %v372 = vadd.f32 %v360, %v368
    %v373 = vadd.f32 %v361, %v368
    %v374 = vadd.f32 %v362, %v368
    %v375 = vadd.f32 %v363, %v368
    %v376 = vld [vmem:[%s8] sm:$0xff]
    %v377 = vld [vmem:[%s8 + $0x8] sm:$0xff]
    %v378 = vld [vmem:[%s8 + $0x10] sm:$0xff]
    %v379 = vld [vmem:[%s8 + $0x18] sm:$0xff]
    %v380 = vld [vmem:[%s9] sm:$0x1]
    %v382 = vlaneseq
    %v383 = vshrl.u32 %v382, 7
    %v384 = vsub.s32 0, %v383
    %v385 = vrot.slane %v380, %v384
    %v388 = vsel %vm272, %v370, 0
    %v391 = vsel %vm272, %v371, 0
    %v394 = vsel %vm272, %v372, 0
    %v397 = vsel %vm272, %v373, 0
    %v400 = vsel %vm272, %v374, 0
    %v403 = vsel %vm272, %v375, 0
    %405 = vmatprep.subr.mxu0 0.0
    %406 = vmatpush1.msra.mxu0 %v376
    %407 = vmatprep.subr.mxu0 0.0
    %408 = vmatpush1.msra.mxu0 %v377
    %409 = vmatprep.subr.mxu0 0.0
    %410 = vmatpush1.msra.mxu0 %v378
    %411 = vmatprep.subr.mxu0 0.0
    %412 = vmatpush1.msra.mxu0 %v379
    %413 = vmatprep.subr.mxu0 0.0
    %414 = vmatpush1.msra.mxu0 0.0
    %415 = vmatprep.subr.mxu0 0.0
    %416 = vmatpush1.msra.mxu0 0.0
    %417 = vmatprep.subr.mxu0 0.0
    %418 = vmatpush1.msra.mxu0 0.0
    %419 = vmatprep.subr.mxu0 0.0
    %420 = vmatpush1.msra.mxu0 0.0
    %421 = vmatprep.subr.mxu0 0.0
    %422 = vmatpush1.msra.mxu0 0.0
    %423 = vmatprep.subr.mxu0 0.0
    %424 = vmatpush1.msra.mxu0 0.0
    %425 = vmatprep.subr.mxu0 0.0
    %426 = vmatpush1.msra.mxu0 0.0
    %427 = vmatprep.subr.mxu0 0.0
    %428 = vmatpush1.msra.mxu0 0.0
    %429 = vmatprep.subr.mxu0 0.0
    %430 = vmatpush1.msra.mxu0 0.0
    %431 = vmatprep.subr.mxu0 0.0
    %432 = vmatpush1.msra.mxu0 0.0
    %433 = vmatprep.subr.mxu0 0.0
    %434 = vmatpush1.msra.mxu0 0.0
    %435 = vmatprep.subr.mxu0 0.0
    %436 = vmatpush1.msra.mxu0 0.0
    %437 = vmatprep.subr.mxu0 0.0
    %438 = vmatpush1.msra.mxu0 0.0
    %439 = vmatprep.subr.mxu0 0.0
    %440 = vmatpush1.msra.mxu0 0.0
    %441 = vmatprep.subr.mxu0 0.0
    %442 = vmatpush1.msra.mxu0 0.0
    %443 = vmatprep.subr.mxu0 0.0
    %444 = vmatpush1.msra.mxu0 0.0
    %445 = vmatprep.subr.mxu0 0.0
    %446 = vmatpush1.msra.mxu0 0.0
    %447 = vmatprep.subr.mxu0 0.0
    %448 = vmatpush1.msra.mxu0 0.0
    %449 = vmatprep.subr.mxu0 0.0
    %450 = vmatpush1.msra.mxu0 0.0
    %451 = vmatprep.subr.mxu0 0.0
    %452 = vmatpush1.msra.mxu0 0.0
    %453 = vmatprep.subr.mxu0 0.0
    %454 = vmatpush1.msra.mxu0 0.0
    %455 = vmatprep.subr.mxu0 0.0
    %456 = vmatpush1.msra.mxu0 0.0
    %457 = vmatprep.subr.mxu0 0.0
    %458 = vmatpush1.msra.mxu0 0.0
    %459 = vmatprep.subr.mxu0 0.0
    %460 = vmatpush1.msra.mxu0 0.0
    %461 = vmatprep.subr.mxu0 0.0
    %462 = vmatpush1.msra.mxu0 0.0
    %463 = vmatprep.subr.mxu0 0.0
    %464 = vmatpush1.msra.mxu0 0.0
    %465 = vmatprep.subr.mxu0 0.0
    %466 = vmatpush1.msra.mxu0 0.0
    %467 = vmatprep.subr.mxu0 0.0
    %468 = vmatpush1.msra.mxu0 0.0
    %469 = vmatprep.mubr.f32.mxu0 0.0
    %470 = vmatmul.mubr.f32.gmra.mrb[0].mxu0 %v388
    %v471 = vpop.f32.mrb[0].mxu0
    %v472 = vadd.f32 %v385, %v471
    %v473 = vpop.f32.mrb[0].mxu0
    %474 = vmatprep.mubr.f32.mxu0 0.0
    %475 = vmatmul.mubr.f32.gmra.mrb[0].mxu0 %v391
    %v476 = vpop.f32.mrb[0].mxu0
    %v477 = vadd.f32 %v385, %v476
    %v478 = vpop.f32.mrb[0].mxu0
    %479 = vmatprep.mubr.f32.mxu0 0.0
    %480 = vmatmul.mubr.f32.gmra.mrb[0].mxu0 %v394
    %v481 = vpop.f32.mrb[0].mxu0
    %v482 = vadd.f32 %v385, %v481
    %v483 = vpop.f32.mrb[0].mxu0
    %484 = vmatprep.mubr.f32.mxu0 0.0
    %485 = vmatmul.mubr.f32.gmra.mrb[0].mxu0 %v397
    %v486 = vpop.f32.mrb[0].mxu0
    %v487 = vadd.f32 %v385, %v486
    %v488 = vpop.f32.mrb[0].mxu0
    %489 = vmatprep.mubr.f32.mxu0 0.0
    %490 = vmatmul.mubr.f32.gmra.mrb[0].mxu0 %v400
    %v491 = vpop.f32.mrb[0].mxu0
    %v492 = vadd.f32 %v385, %v491
    %v493 = vpop.f32.mrb[0].mxu0
    %494 = vmatprep.mubr.f32.mxu0 0.0
    %495 = vmatmul.mubr.f32.gmra.mrb[0].mxu0 %v403
    %v496 = vpop.f32.mrb[0].mxu0
    %v497 = vadd.f32 %v385, %v496
    %v498 = vpop.f32.mrb[0].mxu0
    %499 = vdwg.mxu0
    %s500 = scalar_lea.vmem %s8, 32
    %v501 = vld [vmem:[%s500] sm:$0xff]
    %v502 = vld [vmem:[%s500 + $0x8] sm:$0xff]
    %v503 = vld [vmem:[%s500 + $0x10] sm:$0xff]
    %v504 = vld [vmem:[%s500 + $0x18] sm:$0xff]
    %s505 = scalar_lea.vmem %s9, 1
    %v506 = vld [vmem:[%s505] sm:$0x1]
    %v508 = vlaneseq
    %v509 = vshrl.u32 %v508, 7
    %v510 = vsub.s32 0, %v509
    %v511 = vrot.slane %v506, %v510
    %513 = vmatprep.subr.mxu0 0.0
    %514 = vmatpush1.msra.mxu0 %v501
    %515 = vmatprep.subr.mxu0 0.0
    %516 = vmatpush1.msra.mxu0 %v502
    %517 = vmatprep.subr.mxu0 0.0
    %518 = vmatpush1.msra.mxu0 %v503
    %519 = vmatprep.subr.mxu0 0.0
    %520 = vmatpush1.msra.mxu0 %v504
    %521 = vmatprep.subr.mxu0 0.0
    %522 = vmatpush1.msra.mxu0 0.0
    %523 = vmatprep.subr.mxu0 0.0
    %524 = vmatpush1.msra.mxu0 0.0
    %525 = vmatprep.subr.mxu0 0.0
    %526 = vmatpush1.msra.mxu0 0.0
    %527 = vmatprep.subr.mxu0 0.0
    %528 = vmatpush1.msra.mxu0 0.0
    %529 = vmatprep.subr.mxu0 0.0
    %530 = vmatpush1.msra.mxu0 0.0
    %531 = vmatprep.subr.mxu0 0.0
    %532 = vmatpush1.msra.mxu0 0.0
    %533 = vmatprep.subr.mxu0 0.0
    %534 = vmatpush1.msra.mxu0 0.0
    %535 = vmatprep.subr.mxu0 0.0
    %536 = vmatpush1.msra.mxu0 0.0
    %537 = vmatprep.subr.mxu0 0.0
    %538 = vmatpush1.msra.mxu0 0.0
    %539 = vmatprep.subr.mxu0 0.0
    %540 = vmatpush1.msra.mxu0 0.0
    %541 = vmatprep.subr.mxu0 0.0
    %542 = vmatpush1.msra.mxu0 0.0
    %543 = vmatprep.subr.mxu0 0.0
    %544 = vmatpush1.msra.mxu0 0.0
    %545 = vmatprep.subr.mxu0 0.0
    %546 = vmatpush1.msra.mxu0 0.0
    %547 = vmatprep.subr.mxu0 0.0
    %548 = vmatpush1.msra.mxu0 0.0
    %549 = vmatprep.subr.mxu0 0.0
    %550 = vmatpush1.msra.mxu0 0.0
    %551 = vmatprep.subr.mxu0 0.0
    %552 = vmatpush1.msra.mxu0 0.0
    %553 = vmatprep.subr.mxu0 0.0
    %554 = vmatpush1.msra.mxu0 0.0
    %555 = vmatprep.subr.mxu0 0.0
    %556 = vmatpush1.msra.mxu0 0.0
    %557 = vmatprep.subr.mxu0 0.0
    %558 = vmatpush1.msra.mxu0 0.0
    %559 = vmatprep.subr.mxu0 0.0
    %560 = vmatpush1.msra.mxu0 0.0
    %561 = vmatprep.subr.mxu0 0.0
    %562 = vmatpush1.msra.mxu0 0.0
    %563 = vmatprep.subr.mxu0 0.0
    %564 = vmatpush1.msra.mxu0 0.0
    %565 = vmatprep.subr.mxu0 0.0
    %566 = vmatpush1.msra.mxu0 0.0
    %567 = vmatprep.subr.mxu0 0.0
    %568 = vmatpush1.msra.mxu0 0.0
    %569 = vmatprep.subr.mxu0 0.0
    %570 = vmatpush1.msra.mxu0 0.0
    %571 = vmatprep.subr.mxu0 0.0
    %572 = vmatpush1.msra.mxu0 0.0
    %573 = vmatprep.subr.mxu0 0.0
    %574 = vmatpush1.msra.mxu0 0.0
    %575 = vmatprep.subr.mxu0 0.0
    %576 = vmatpush1.msra.mxu0 0.0
    %577 = vmatprep.mubr.f32.mxu0 0.0
    %578 = vmatmul.mubr.f32.gmra.mrb[0].mxu0 %v388
    %v579 = vpop.f32.mrb[0].mxu0
    %v580 = vadd.f32 %v511, %v579
    %v581 = vpop.f32.mrb[0].mxu0
    %582 = vmatprep.mubr.f32.mxu0 0.0
    %583 = vmatmul.mubr.f32.gmra.mrb[0].mxu0 %v391
    %v584 = vpop.f32.mrb[0].mxu0
    %v585 = vadd.f32 %v511, %v584
    %v586 = vpop.f32.mrb[0].mxu0
    %587 = vmatprep.mubr.f32.mxu0 0.0
    %588 = vmatmul.mubr.f32.gmra.mrb[0].mxu0 %v394
    %v589 = vpop.f32.mrb[0].mxu0
    %v590 = vadd.f32 %v511, %v589
    %v591 = vpop.f32.mrb[0].mxu0
    %592 = vmatprep.mubr.f32.mxu0 0.0
    %593 = vmatmul.mubr.f32.gmra.mrb[0].mxu0 %v397
    %v594 = vpop.f32.mrb[0].mxu0
    %v595 = vadd.f32 %v511, %v594
    %v596 = vpop.f32.mrb[0].mxu0
    %597 = vmatprep.mubr.f32.mxu0 0.0
    %598 = vmatmul.mubr.f32.gmra.mrb[0].mxu0 %v400
    %v599 = vpop.f32.mrb[0].mxu0
    %v600 = vadd.f32 %v511, %v599
    %v601 = vpop.f32.mrb[0].mxu0
    %602 = vmatprep.mubr.f32.mxu0 0.0
    %603 = vmatmul.mubr.f32.gmra.mrb[0].mxu0 %v403
    %v604 = vpop.f32.mrb[0].mxu0
    %v605 = vadd.f32 %v511, %v604
    %v606 = vpop.f32.mrb[0].mxu0
    %607 = vdwg.mxu0
    %s608 = scalar_lea.vmem %s8, 64
    %v609 = vld [vmem:[%s608] sm:$0xff]
    %v610 = vld [vmem:[%s608 + $0x8] sm:$0xff]
    %v611 = vld [vmem:[%s608 + $0x10] sm:$0xff]
    %v612 = vld [vmem:[%s608 + $0x18] sm:$0xff]
    %s613 = scalar_lea.vmem %s9, 2
    %v614 = vld [vmem:[%s613] sm:$0x1]
    %v616 = vlaneseq
    %v617 = vshrl.u32 %v616, 7
    %v618 = vsub.s32 0, %v617
    %v619 = vrot.slane %v614, %v618
    %621 = vmatprep.subr.mxu0 0.0
    %622 = vmatpush1.msra.mxu0 %v609
    %623 = vmatprep.subr.mxu0 0.0
    %624 = vmatpush1.msra.mxu0 %v610
    %625 = vmatprep.subr.mxu0 0.0
    %626 = vmatpush1.msra.mxu0 %v611
    %627 = vmatprep.subr.mxu0 0.0
    %628 = vmatpush1.msra.mxu0 %v612
    %629 = vmatprep.subr.mxu0 0.0
    %630 = vmatpush1.msra.mxu0 0.0
    %631 = vmatprep.subr.mxu0 0.0
    %632 = vmatpush1.msra.mxu0 0.0
    %633 = vmatprep.subr.mxu0 0.0
    %634 = vmatpush1.msra.mxu0 0.0
    %635 = vmatprep.subr.mxu0 0.0
    %636 = vmatpush1.msra.mxu0 0.0
    %637 = vmatprep.subr.mxu0 0.0
    %638 = vmatpush1.msra.mxu0 0.0
    %639 = vmatprep.subr.mxu0 0.0
    %640 = vmatpush1.msra.mxu0 0.0
    %641 = vmatprep.subr.mxu0 0.0
    %642 = vmatpush1.msra.mxu0 0.0
    %643 = vmatprep.subr.mxu0 0.0
    %644 = vmatpush1.msra.mxu0 0.0
    %645 = vmatprep.subr.mxu0 0.0
    %646 = vmatpush1.msra.mxu0 0.0
    %647 = vmatprep.subr.mxu0 0.0
    %648 = vmatpush1.msra.mxu0 0.0
    %649 = vmatprep.subr.mxu0 0.0
    %650 = vmatpush1.msra.mxu0 0.0
    %651 = vmatprep.subr.mxu0 0.0
    %652 = vmatpush1.msra.mxu0 0.0
    %653 = vmatprep.subr.mxu0 0.0
    %654 = vmatpush1.msra.mxu0 0.0
    %655 = vmatprep.subr.mxu0 0.0
    %656 = vmatpush1.msra.mxu0 0.0
    %657 = vmatprep.subr.mxu0 0.0
    %658 = vmatpush1.msra.mxu0 0.0
    %659 = vmatprep.subr.mxu0 0.0
    %660 = vmatpush1.msra.mxu0 0.0
    %661 = vmatprep.subr.mxu0 0.0
    %662 = vmatpush1.msra.mxu0 0.0
    %663 = vmatprep.subr.mxu0 0.0
    %664 = vmatpush1.msra.mxu0 0.0
    %665 = vmatprep.subr.mxu0 0.0
    %666 = vmatpush1.msra.mxu0 0.0
    %667 = vmatprep.subr.mxu0 0.0
    %668 = vmatpush1.msra.mxu0 0.0
    %669 = vmatprep.subr.mxu0 0.0
    %670 = vmatpush1.msra.mxu0 0.0
    %671 = vmatprep.subr.mxu0 0.0
    %672 = vmatpush1.msra.mxu0 0.0
    %673 = vmatprep.subr.mxu0 0.0
    %674 = vmatpush1.msra.mxu0 0.0
    %675 = vmatprep.subr.mxu0 0.0
    %676 = vmatpush1.msra.mxu0 0.0
    %677 = vmatprep.subr.mxu0 0.0
    %678 = vmatpush1.msra.mxu0 0.0
    %679 = vmatprep.subr.mxu0 0.0
    %680 = vmatpush1.msra.mxu0 0.0
    %681 = vmatprep.subr.mxu0 0.0
    %682 = vmatpush1.msra.mxu0 0.0
    %683 = vmatprep.subr.mxu0 0.0
    %684 = vmatpush1.msra.mxu0 0.0
    %685 = vmatprep.mubr.f32.mxu0 0.0
    %686 = vmatmul.mubr.f32.gmra.mrb[0].mxu0 %v388
    %v687 = vpop.f32.mrb[0].mxu0
    %v688 = vadd.f32 %v619, %v687
    %v689 = vpop.f32.mrb[0].mxu0
    %690 = vmatprep.mubr.f32.mxu0 0.0
    %691 = vmatmul.mubr.f32.gmra.mrb[0].mxu0 %v391
    %v692 = vpop.f32.mrb[0].mxu0
    %v693 = vadd.f32 %v619, %v692
    %v694 = vpop.f32.mrb[0].mxu0
    %695 = vmatprep.mubr.f32.mxu0 0.0
    %696 = vmatmul.mubr.f32.gmra.mrb[0].mxu0 %v394
    %v697 = vpop.f32.mrb[0].mxu0
    %v698 = vadd.f32 %v619, %v697
    %v699 = vpop.f32.mrb[0].mxu0
    %700 = vmatprep.mubr.f32.mxu0 0.0
    %701 = vmatmul.mubr.f32.gmra.mrb[0].mxu0 %v397
    %v702 = vpop.f32.mrb[0].mxu0
    %v703 = vadd.f32 %v619, %v702
    %v704 = vpop.f32.mrb[0].mxu0
    %705 = vmatprep.mubr.f32.mxu0 0.0
    %706 = vmatmul.mubr.f32.gmra.mrb[0].mxu0 %v400
    %v707 = vpop.f32.mrb[0].mxu0
    %v708 = vadd.f32 %v619, %v707
    %v709 = vpop.f32.mrb[0].mxu0
    %710 = vmatprep.mubr.f32.mxu0 0.0
    %711 = vmatmul.mubr.f32.gmra.mrb[0].mxu0 %v403
    %v712 = vpop.f32.mrb[0].mxu0
    %v713 = vadd.f32 %v619, %v712
    %v714 = vpop.f32.mrb[0].mxu0
    %715 = vdwg.mxu0
    %v716 = vmul.f32 %v580, %v51
    %v717 = vmul.f32 %v585, %v52
    %v718 = vmul.f32 %v590, %v53
    %v719 = vmul.f32 %v595, %v54
    %v720 = vmul.f32 %v600, %v55
    %v721 = vmul.f32 %v605, %v56
    %v722 = vmul.f32 %v580, %v57
    %v723 = vmul.f32 %v585, %v58
    %v724 = vmul.f32 %v590, %v59
    %v725 = vmul.f32 %v595, %v60
    %v726 = vmul.f32 %v600, %v61
    %v727 = vmul.f32 %v605, %v62
    %v728 = vmul.f32 %v580, %v63
    %v729 = vmul.f32 %v585, %v64
    %v730 = vmul.f32 %v590, %v65
    %v731 = vmul.f32 %v595, %v66
    %v732 = vmul.f32 %v600, %v67
    %v733 = vmul.f32 %v605, %v68
    %v734 = vmul.f32 %v580, %v69
    %v735 = vmul.f32 %v585, %v70
    %v736 = vmul.f32 %v590, %v71
    %v737 = vmul.f32 %v595, %v72
    %v738 = vmul.f32 %v600, %v73
    %v739 = vmul.f32 %v605, %v74
    %v740 = vmul.f32 %v688, %v51
    %v741 = vmul.f32 %v693, %v52
    %v742 = vmul.f32 %v698, %v53
    %v743 = vmul.f32 %v703, %v54
    %v744 = vmul.f32 %v708, %v55
    %v745 = vmul.f32 %v713, %v56
    %v746 = vmul.f32 %v688, %v57
    %v747 = vmul.f32 %v693, %v58
    %v748 = vmul.f32 %v698, %v59
    %v749 = vmul.f32 %v703, %v60
    %v750 = vmul.f32 %v708, %v61
    %v751 = vmul.f32 %v713, %v62
    %v752 = vmul.f32 %v688, %v63
    %v753 = vmul.f32 %v693, %v64
    %v754 = vmul.f32 %v698, %v65
    %v755 = vmul.f32 %v703, %v66
    %v756 = vmul.f32 %v708, %v67
    %v757 = vmul.f32 %v713, %v68
    %v758 = vmul.f32 %v688, %v69
    %v759 = vmul.f32 %v693, %v70
    %v760 = vmul.f32 %v698, %v71
    %v761 = vmul.f32 %v703, %v72
    %v762 = vmul.f32 %v708, %v73
    %v763 = vmul.f32 %v713, %v74
    %v765 = vsel %vm272, %v472, 0
    %v768 = vsel %vm272, %v477, 0
    %v771 = vsel %vm272, %v482, 0
    %v774 = vsel %vm272, %v487, 0
    %v777 = vsel %vm272, %v492, 0
    %v780 = vsel %vm272, %v497, 0
    %v783 = vsel %vm272, %v716, 0
    %v786 = vsel %vm272, %v717, 0
    %v789 = vsel %vm272, %v718, 0
    %v792 = vsel %vm272, %v719, 0
    %v795 = vsel %vm272, %v720, 0
    %v798 = vsel %vm272, %v721, 0
    %v801 = vsel %vm272, %v722, 0
    %v804 = vsel %vm272, %v723, 0
    %v807 = vsel %vm272, %v724, 0
    %v810 = vsel %vm272, %v725, 0
    %v813 = vsel %vm272, %v726, 0
    %v816 = vsel %vm272, %v727, 0
    %v819 = vsel %vm272, %v728, 0
    %v822 = vsel %vm272, %v729, 0
    %v825 = vsel %vm272, %v730, 0
    %v828 = vsel %vm272, %v731, 0
    %v831 = vsel %vm272, %v732, 0
    %v834 = vsel %vm272, %v733, 0
    %v837 = vsel %vm272, %v734, 0
    %v840 = vsel %vm272, %v735, 0
    %v843 = vsel %vm272, %v736, 0
    %v846 = vsel %vm272, %v737, 0
    %v849 = vsel %vm272, %v738, 0
    %v852 = vsel %vm272, %v739, 0
    %854 = vmatprep.subr.mxu0 0.0
    %855 = vmatpush1.xpose.msra.mxu0 %v783
    %856 = vmatprep.subr.mxu0 0.0
    %857 = vmatpush1.xpose.msra.mxu0 %v786
    %858 = vmatprep.subr.mxu0 0.0
    %859 = vmatpush1.xpose.msra.mxu0 %v789
    %860 = vmatprep.subr.mxu0 0.0
    %861 = vmatpush1.xpose.msra.mxu0 %v792
    %862 = vmatprep.subr.mxu0 0.0
    %863 = vmatpush1.xpose.msra.mxu0 %v795
    %864 = vmatprep.subr.mxu0 0.0
    %865 = vmatpush1.xpose.msra.mxu0 %v798
    %866 = vmatprep.subr.mxu0 0.0
    %867 = vmatpush1.xpose.msra.mxu0 %v801
    %868 = vmatprep.subr.mxu0 0.0
    %869 = vmatpush1.xpose.msra.mxu0 %v804
    %870 = vmatprep.subr.mxu0 0.0
    %871 = vmatpush1.xpose.msra.mxu0 %v807
    %872 = vmatprep.subr.mxu0 0.0
    %873 = vmatpush1.xpose.msra.mxu0 %v810
    %874 = vmatprep.subr.mxu0 0.0
    %875 = vmatpush1.xpose.msra.mxu0 %v813
    %876 = vmatprep.subr.mxu0 0.0
    %877 = vmatpush1.xpose.msra.mxu0 %v816
    %878 = vmatprep.subr.mxu0 0.0
    %879 = vmatpush1.xpose.msra.mxu0 %v819
    %880 = vmatprep.subr.mxu0 0.0
    %881 = vmatpush1.xpose.msra.mxu0 %v822
    %882 = vmatprep.subr.mxu0 0.0
    %883 = vmatpush1.xpose.msra.mxu0 %v825
    %884 = vmatprep.subr.mxu0 0.0
    %885 = vmatpush1.xpose.msra.mxu0 %v828
    %886 = vmatprep.subr.mxu0 0.0
    %887 = vmatpush1.xpose.msra.mxu0 %v831
    %888 = vmatprep.subr.mxu0 0.0
    %889 = vmatpush1.xpose.msra.mxu0 %v834
    %890 = vmatprep.subr.mxu0 0.0
    %891 = vmatpush1.xpose.msra.mxu0 %v837
    %892 = vmatprep.subr.mxu0 0.0
    %893 = vmatpush1.xpose.msra.mxu0 %v840
    %894 = vmatprep.subr.mxu0 0.0
    %895 = vmatpush1.xpose.msra.mxu0 %v843
    %896 = vmatprep.subr.mxu0 0.0
    %897 = vmatpush1.xpose.msra.mxu0 %v846
    %898 = vmatprep.subr.mxu0 0.0
    %899 = vmatpush1.xpose.msra.mxu0 %v849
    %900 = vmatprep.subr.mxu0 0.0
    %901 = vmatpush1.xpose.msra.mxu0 %v852
    %902 = vmatprep.subr.mxu0 0.0
    %903 = vmatpush1.xpose.msra.mxu0 0.0
    %904 = vmatprep.subr.mxu0 0.0
    %905 = vmatpush1.xpose.msra.mxu0 0.0
    %906 = vmatprep.subr.mxu0 0.0
    %907 = vmatpush1.xpose.msra.mxu0 0.0
    %908 = vmatprep.subr.mxu0 0.0
    %909 = vmatpush1.xpose.msra.mxu0 0.0
    %910 = vmatprep.subr.mxu0 0.0
    %911 = vmatpush1.xpose.msra.mxu0 0.0
    %912 = vmatprep.subr.mxu0 0.0
    %913 = vmatpush1.xpose.msra.mxu0 0.0
    %914 = vmatprep.subr.mxu0 0.0
    %915 = vmatpush1.xpose.msra.mxu0 0.0
    %916 = vmatprep.subr.mxu0 0.0
    %917 = vmatpush1.xpose.msra.mxu0 0.0
    %918 = vmatprep.mubr.f32.mxu0 0.0
    %919 = vmatmul.mubr.f32.gmra.mrb[0].mxu0 %v765
    %v920 = vpop.f32.mrb[0].mxu0
    %v921 = vadd.f32 %v75, %v920
    %v922 = vpop.f32.mrb[0].mxu0
    %v923 = vadd.f32 %v76, %v922
    %924 = vmatprep.mubr.f32.mxu0 0.0
    %925 = vmatmul.mubr.f32.gmra.mrb[0].mxu0 %v768
    %v926 = vpop.f32.mrb[0].mxu0
    %v927 = vadd.f32 %v77, %v926
    %v928 = vpop.f32.mrb[0].mxu0
    %v929 = vadd.f32 %v78, %v928
    %930 = vmatprep.mubr.f32.mxu0 0.0
    %931 = vmatmul.mubr.f32.gmra.mrb[0].mxu0 %v771
    %v932 = vpop.f32.mrb[0].mxu0
    %v933 = vadd.f32 %v79, %v932
    %v934 = vpop.f32.mrb[0].mxu0
    %v935 = vadd.f32 %v80, %v934
    %936 = vmatprep.mubr.f32.mxu0 0.0
    %937 = vmatmul.mubr.f32.gmra.mrb[0].mxu0 %v774
    %v938 = vpop.f32.mrb[0].mxu0
    %v939 = vadd.f32 %v81, %v938
    %v940 = vpop.f32.mrb[0].mxu0
    %v941 = vadd.f32 %v82, %v940
    %942 = vmatprep.mubr.f32.mxu0 0.0
    %943 = vmatmul.mubr.f32.gmra.mrb[0].mxu0 %v777
    %v944 = vpop.f32.mrb[0].mxu0
    %v945 = vadd.f32 %v83, %v944
    %v946 = vpop.f32.mrb[0].mxu0
    %v947 = vadd.f32 %v84, %v946
    %948 = vmatprep.mubr.f32.mxu0 0.0
    %949 = vmatmul.mubr.f32.gmra.mrb[0].mxu0 %v780
    %v950 = vpop.f32.mrb[0].mxu0
    %v951 = vadd.f32 %v85, %v950
    %v952 = vpop.f32.mrb[0].mxu0
    %v953 = vadd.f32 %v86, %v952
    %954 = vdwg.mxu0
    %v955 = vsel %vm155, %v923, -inf
    %v956 = vmax.f32 %v921, %v955
    %957 = vmax.xlane.f32.xlu0 %v956
    %v958 = vpop.xlane.xlu0 %957
    %v959 = vsel %vm155, %v929, -inf
    %v960 = vmax.f32 %v927, %v959
    %961 = vmax.xlane.f32.xlu0 %v960
    %v962 = vpop.xlane.xlu0 %961
    %v963 = vsel %vm155, %v935, -inf
    %v964 = vmax.f32 %v933, %v963
    %965 = vmax.xlane.f32.xlu0 %v964
    %v966 = vpop.xlane.xlu0 %965
    %v967 = vsel %vm155, %v941, -inf
    %v968 = vmax.f32 %v939, %v967
    %969 = vmax.xlane.f32.xlu0 %v968
    %v970 = vpop.xlane.xlu0 %969
    %v971 = vsel %vm155, %v947, -inf
    %v972 = vmax.f32 %v945, %v971
    %973 = vmax.xlane.f32.xlu0 %v972
    %v974 = vpop.xlane.xlu0 %973
    %v975 = vsel %vm155, %v953, -inf
    %v976 = vmax.f32 %v951, %v975
    %977 = vmax.xlane.f32.xlu0 %v976
    %v978 = vpop.xlane.xlu0 %977
    %v979 = vsub.f32 %v921, %v958
    %v980 = vsub.f32 %v923, %v958
    %v981 = vsub.f32 %v927, %v962
    %v982 = vsub.f32 %v929, %v962
    %v983 = vsub.f32 %v933, %v966
    %v984 = vsub.f32 %v935, %v966
    %v985 = vsub.f32 %v939, %v970
    %v986 = vsub.f32 %v941, %v970
    %v987 = vsub.f32 %v945, %v974
    %v988 = vsub.f32 %v947, %v974
    %v989 = vsub.f32 %v951, %v978
    %v990 = vsub.f32 %v953, %v978
    %v991 = vmul.f32 %v979, 1.442695
    %v992 = vpow.pop %v991
    %v993 = vmul.f32 %v980, 1.442695
    %v994 = vpow.pop %v993
    %v995 = vmul.f32 %v981, 1.442695
    %v996 = vpow.pop %v995
    %v997 = vmul.f32 %v982, 1.442695
    %v998 = vpow.pop %v997
    %v999 = vmul.f32 %v983, 1.442695
    %v1000 = vpow.pop %v999
    %v1001 = vmul.f32 %v984, 1.442695
    %v1002 = vpow.pop %v1001
    %v1003 = vmul.f32 %v985, 1.442695
    %v1004 = vpow.pop %v1003
    %v1005 = vmul.f32 %v986, 1.442695
    %v1006 = vpow.pop %v1005
    %v1007 = vmul.f32 %v987, 1.442695
    %v1008 = vpow.pop %v1007
    %v1009 = vmul.f32 %v988, 1.442695
    %v1010 = vpow.pop %v1009
    %v1011 = vmul.f32 %v989, 1.442695
    %v1012 = vpow.pop %v1011
    %v1013 = vmul.f32 %v990, 1.442695
    %v1014 = vpow.pop %v1013
    %v1016 = vsel %vm155, %v994, 0
    %v1019 = vsel %vm155, %v998, 0
    %v1022 = vsel %vm155, %v1002, 0
    %v1025 = vsel %vm155, %v1006, 0
    %v1028 = vsel %vm155, %v1010, 0
    %v1031 = vsel %vm155, %v1014, 0
    %1033 = vmatprep.subr.mxu0 %v88
    %1034 = vmatpush1.msra.mxu0 %v87
    %1035 = vmatprep.subr.mxu0 %v90
    %1036 = vmatpush1.msra.mxu0 %v89
    %1037 = vmatprep.subr.mxu0 %v92
    %1038 = vmatpush1.msra.mxu0 %v91
    %1039 = vmatprep.subr.mxu0 %v94
    %1040 = vmatpush1.msra.mxu0 %v93
    %1041 = vmatprep.subr.mxu0 %v96
    %1042 = vmatpush1.msra.mxu0 %v95
    %1043 = vmatprep.subr.mxu0 %v98
    %1044 = vmatpush1.msra.mxu0 %v97
    %1045 = vmatprep.subr.mxu0 %v100
    %1046 = vmatpush1.msra.mxu0 %v99
    %1047 = vmatprep.subr.mxu0 %v102
    %1048 = vmatpush1.msra.mxu0 %v101
    %1049 = vmatprep.subr.mxu0 %v104
    %1050 = vmatpush1.msra.mxu0 %v103
    %1051 = vmatprep.subr.mxu0 %v106
    %1052 = vmatpush1.msra.mxu0 %v105
    %1053 = vmatprep.subr.mxu0 %v108
    %1054 = vmatpush1.msra.mxu0 %v107
    %1055 = vmatprep.subr.mxu0 %v110
    %1056 = vmatpush1.msra.mxu0 %v109
    %1057 = vmatprep.subr.mxu0 %v112
    %1058 = vmatpush1.msra.mxu0 %v111
    %1059 = vmatprep.subr.mxu0 %v114
    %1060 = vmatpush1.msra.mxu0 %v113
    %1061 = vmatprep.subr.mxu0 %v116
    %1062 = vmatpush1.msra.mxu0 %v115
    %1063 = vmatprep.subr.mxu0 %v118
    %1064 = vmatpush1.msra.mxu0 %v117
    %1065 = vmatprep.subr.mxu0 %v120
    %1066 = vmatpush1.msra.mxu0 %v119
    %1067 = vmatprep.subr.mxu0 %v122
    %1068 = vmatpush1.msra.mxu0 %v121
    %1069 = vmatprep.subr.mxu0 %v124
    %1070 = vmatpush1.msra.mxu0 %v123
    %1071 = vmatprep.subr.mxu0 %v126
    %1072 = vmatpush1.msra.mxu0 %v125
    %1073 = vmatprep.subr.mxu0 %v128
    %1074 = vmatpush1.msra.mxu0 %v127
    %1075 = vmatprep.subr.mxu0 %v130
    %1076 = vmatpush1.msra.mxu0 %v129
    %1077 = vmatprep.subr.mxu0 %v132
    %1078 = vmatpush1.msra.mxu0 %v131
    %1079 = vmatprep.subr.mxu0 %v134
    %1080 = vmatpush1.msra.mxu0 %v133
    %1081 = vmatprep.subr.mxu0 0.0
    %1082 = vmatpush1.msra.mxu0 0.0
    %1083 = vmatprep.subr.mxu0 0.0
    %1084 = vmatpush1.msra.mxu0 0.0
    %1085 = vmatprep.subr.mxu0 0.0
    %1086 = vmatpush1.msra.mxu0 0.0
    %1087 = vmatprep.subr.mxu0 0.0
    %1088 = vmatpush1.msra.mxu0 0.0
    %1089 = vmatprep.subr.mxu0 0.0
    %1090 = vmatpush1.msra.mxu0 0.0
    %1091 = vmatprep.subr.mxu0 0.0
    %1092 = vmatpush1.msra.mxu0 0.0
    %1093 = vmatprep.subr.mxu0 0.0
    %1094 = vmatpush1.msra.mxu0 0.0
    %1095 = vmatprep.subr.mxu0 0.0
    %1096 = vmatpush1.msra.mxu0 0.0
    %1097 = vmatprep.mubr.f32.mxu0 %v1016
    %1098 = vmatmul.mubr.f32.gmra.mrb[0].mxu0 %v992
    %v1099 = vpop.f32.mrb[0].mxu0
    %v1100 = vadd.f32 0.0, %v1099
    %v1101 = vpop.f32.mrb[0].mxu0
    %v1102 = vadd.f32 0.0, %v1101
    %1103 = vmatprep.mubr.f32.mxu0 %v1019
    %1104 = vmatmul.mubr.f32.gmra.mrb[0].mxu0 %v996
    %v1105 = vpop.f32.mrb[0].mxu0
    %v1106 = vadd.f32 0.0, %v1105
    %v1107 = vpop.f32.mrb[0].mxu0
    %v1108 = vadd.f32 0.0, %v1107
    %1109 = vmatprep.mubr.f32.mxu0 %v1022
    %1110 = vmatmul.mubr.f32.gmra.mrb[0].mxu0 %v1000
    %v1111 = vpop.f32.mrb[0].mxu0
    %v1112 = vadd.f32 0.0, %v1111
    %v1113 = vpop.f32.mrb[0].mxu0
    %v1114 = vadd.f32 0.0, %v1113
    %1115 = vmatprep.mubr.f32.mxu0 %v1025
    %1116 = vmatmul.mubr.f32.gmra.mrb[0].mxu0 %v1004
    %v1117 = vpop.f32.mrb[0].mxu0
    %v1118 = vadd.f32 0.0, %v1117
    %v1119 = vpop.f32.mrb[0].mxu0
    %v1120 = vadd.f32 0.0, %v1119
    %1121 = vmatprep.mubr.f32.mxu0 %v1028
    %1122 = vmatmul.mubr.f32.gmra.mrb[0].mxu0 %v1008
    %v1123 = vpop.f32.mrb[0].mxu0
    %v1124 = vadd.f32 0.0, %v1123
    %v1125 = vpop.f32.mrb[0].mxu0
    %v1126 = vadd.f32 0.0, %v1125
    %1127 = vmatprep.mubr.f32.mxu0 %v1031
    %1128 = vmatmul.mubr.f32.gmra.mrb[0].mxu0 %v1012
    %v1129 = vpop.f32.mrb[0].mxu0
    %v1130 = vadd.f32 0.0, %v1129
    %v1131 = vpop.f32.mrb[0].mxu0
    %v1132 = vadd.f32 0.0, %v1131
    %1133 = vdwg.mxu0
    %v1134 = vrcp.pop %v1100
    %v1135 = vrcp.pop %v1102
    %v1136 = vrcp.pop %v1106
    %v1137 = vrcp.pop %v1108
    %v1138 = vrcp.pop %v1112
    %v1139 = vrcp.pop %v1114
    %v1140 = vrcp.pop %v1118
    %v1141 = vrcp.pop %v1120
    %v1142 = vrcp.pop %v1124
    %v1143 = vrcp.pop %v1126
    %v1144 = vrcp.pop %v1130
    %v1145 = vrcp.pop %v1132
    %v1146 = vmul.f32 %v992, %v1134
    %v1147 = vmul.f32 %v994, %v1135
    %v1148 = vmul.f32 %v996, %v1136
    %v1149 = vmul.f32 %v998, %v1137
    %v1150 = vmul.f32 %v1000, %v1138
    %v1151 = vmul.f32 %v1002, %v1139
    %v1152 = vmul.f32 %v1004, %v1140
    %v1153 = vmul.f32 %v1006, %v1141
    %v1154 = vmul.f32 %v1008, %v1142
    %v1155 = vmul.f32 %v1010, %v1143
    %v1156 = vmul.f32 %v1012, %v1144
    %v1157 = vmul.f32 %v1014, %v1145
    %v1159 = vsel %vm155, %v1147, 0
    %v1162 = vsel %vm155, %v1149, 0
    %v1165 = vsel %vm155, %v1151, 0
    %v1168 = vsel %vm155, %v1153, 0
    %v1171 = vsel %vm155, %v1155, 0
    %v1174 = vsel %vm155, %v1157, 0
    %1176 = vmatprep.subr.mxu0 0.0
    %1177 = vmatpush1.msra.mxu0 %v740
    %1178 = vmatprep.subr.mxu0 0.0
    %1179 = vmatpush1.msra.mxu0 %v741
    %1180 = vmatprep.subr.mxu0 0.0
    %1181 = vmatpush1.msra.mxu0 %v742
    %1182 = vmatprep.subr.mxu0 0.0
    %1183 = vmatpush1.msra.mxu0 %v743
    %1184 = vmatprep.subr.mxu0 0.0
    %1185 = vmatpush1.msra.mxu0 %v744
    %1186 = vmatprep.subr.mxu0 0.0
    %1187 = vmatpush1.msra.mxu0 %v745
    %1188 = vmatprep.subr.mxu0 0.0
    %1189 = vmatpush1.msra.mxu0 %v746
    %1190 = vmatprep.subr.mxu0 0.0
    %1191 = vmatpush1.msra.mxu0 %v747
    %1192 = vmatprep.subr.mxu0 0.0
    %1193 = vmatpush1.msra.mxu0 %v748
    %1194 = vmatprep.subr.mxu0 0.0
    %1195 = vmatpush1.msra.mxu0 %v749
    %1196 = vmatprep.subr.mxu0 0.0
    %1197 = vmatpush1.msra.mxu0 %v750
    %1198 = vmatprep.subr.mxu0 0.0
    %1199 = vmatpush1.msra.mxu0 %v751
    %1200 = vmatprep.subr.mxu0 0.0
    %1201 = vmatpush1.msra.mxu0 %v752
    %1202 = vmatprep.subr.mxu0 0.0
    %1203 = vmatpush1.msra.mxu0 %v753
    %1204 = vmatprep.subr.mxu0 0.0
    %1205 = vmatpush1.msra.mxu0 %v754
    %1206 = vmatprep.subr.mxu0 0.0
    %1207 = vmatpush1.msra.mxu0 %v755
    %1208 = vmatprep.subr.mxu0 0.0
    %1209 = vmatpush1.msra.mxu0 %v756
    %1210 = vmatprep.subr.mxu0 0.0
    %1211 = vmatpush1.msra.mxu0 %v757
    %1212 = vmatprep.subr.mxu0 0.0
    %1213 = vmatpush1.msra.mxu0 %v758
    %1214 = vmatprep.subr.mxu0 0.0
    %1215 = vmatpush1.msra.mxu0 %v759
    %1216 = vmatprep.subr.mxu0 0.0
    %1217 = vmatpush1.msra.mxu0 %v760
    %1218 = vmatprep.subr.mxu0 0.0
    %1219 = vmatpush1.msra.mxu0 %v761
    %1220 = vmatprep.subr.mxu0 0.0
    %1221 = vmatpush1.msra.mxu0 %v762
    %1222 = vmatprep.subr.mxu0 0.0
    %1223 = vmatpush1.msra.mxu0 %v763
    %1224 = vmatprep.subr.mxu0 0.0
    %1225 = vmatpush1.msra.mxu0 0.0
    %1226 = vmatprep.subr.mxu0 0.0
    %1227 = vmatpush1.msra.mxu0 0.0
    %1228 = vmatprep.subr.mxu0 0.0
    %1229 = vmatpush1.msra.mxu0 0.0
    %1230 = vmatprep.subr.mxu0 0.0
    %1231 = vmatpush1.msra.mxu0 0.0
    %1232 = vmatprep.subr.mxu0 0.0
    %1233 = vmatpush1.msra.mxu0 0.0
    %1234 = vmatprep.subr.mxu0 0.0
    %1235 = vmatpush1.msra.mxu0 0.0
    %1236 = vmatprep.subr.mxu0 0.0
    %1237 = vmatpush1.msra.mxu0 0.0
    %1238 = vmatprep.subr.mxu0 0.0
    %1239 = vmatpush1.msra.mxu0 0.0
    %1240 = vmatprep.mubr.f32.mxu0 %v1159
    %1241 = vmatmul.mubr.f32.gmra.mrb[0].mxu0 %v1146
    %v1242 = vpop.f32.mrb[0].mxu0
    %v1243 = vadd.f32 0.0, %v1242
    %v1244 = vpop.f32.mrb[0].mxu0
    %1245 = vmatprep.mubr.f32.mxu0 %v1162
    %1246 = vmatmul.mubr.f32.gmra.mrb[0].mxu0 %v1148
    %v1247 = vpop.f32.mrb[0].mxu0
    %v1248 = vadd.f32 0.0, %v1247
    %v1249 = vpop.f32.mrb[0].mxu0
    %1250 = vmatprep.mubr.f32.mxu0 %v1165
    %1251 = vmatmul.mubr.f32.gmra.mrb[0].mxu0 %v1150
    %v1252 = vpop.f32.mrb[0].mxu0
    %v1253 = vadd.f32 0.0, %v1252
    %v1254 = vpop.f32.mrb[0].mxu0
    %1255 = vmatprep.mubr.f32.mxu0 %v1168
    %1256 = vmatmul.mubr.f32.gmra.mrb[0].mxu0 %v1152
    %v1257 = vpop.f32.mrb[0].mxu0
    %v1258 = vadd.f32 0.0, %v1257
    %v1259 = vpop.f32.mrb[0].mxu0
    %1260 = vmatprep.mubr.f32.mxu0 %v1171
    %1261 = vmatmul.mubr.f32.gmra.mrb[0].mxu0 %v1154
    %v1262 = vpop.f32.mrb[0].mxu0
    %v1263 = vadd.f32 0.0, %v1262
    %v1264 = vpop.f32.mrb[0].mxu0
    %1265 = vmatprep.mubr.f32.mxu0 %v1174
    %1266 = vmatmul.mubr.f32.gmra.mrb[0].mxu0 %v1156
    %v1267 = vpop.f32.mrb[0].mxu0
    %v1268 = vadd.f32 0.0, %v1267
    %v1269 = vpop.f32.mrb[0].mxu0
    %1270 = vdwg.mxu0
    %s1271 = scalar_lea.vmem %s8, 96
    %v1272 = vld [vmem:[%s1271] sm:$0xff]
    %v1273 = vld [vmem:[%s1271 + $0x8] sm:$0xff]
    %v1274 = vld [vmem:[%s1271 + $0x10] sm:$0xff]
    %v1275 = vld [vmem:[%s1271 + $0x18] sm:$0xff]
    %v1277 = vsel %vm272, %v1243, 0
    %v1280 = vsel %vm272, %v1248, 0
    %v1283 = vsel %vm272, %v1253, 0
    %v1286 = vsel %vm272, %v1258, 0
    %v1289 = vsel %vm272, %v1263, 0
    %v1292 = vsel %vm272, %v1268, 0
    %1294 = vmatprep.subr.mxu0 0.0
    %1295 = vmatpush1.msra.mxu0 %v1272
    %1296 = vmatprep.subr.mxu0 0.0
    %1297 = vmatpush1.msra.mxu0 %v1273
    %1298 = vmatprep.subr.mxu0 0.0
    %1299 = vmatpush1.msra.mxu0 %v1274
    %1300 = vmatprep.subr.mxu0 0.0
    %1301 = vmatpush1.msra.mxu0 %v1275
    %1302 = vmatprep.subr.mxu0 0.0
    %1303 = vmatpush1.msra.mxu0 0.0
    %1304 = vmatprep.subr.mxu0 0.0
    %1305 = vmatpush1.msra.mxu0 0.0
    %1306 = vmatprep.subr.mxu0 0.0
    %1307 = vmatpush1.msra.mxu0 0.0
    %1308 = vmatprep.subr.mxu0 0.0
    %1309 = vmatpush1.msra.mxu0 0.0
    %1310 = vmatprep.subr.mxu0 0.0
    %1311 = vmatpush1.msra.mxu0 0.0
    %1312 = vmatprep.subr.mxu0 0.0
    %1313 = vmatpush1.msra.mxu0 0.0
    %1314 = vmatprep.subr.mxu0 0.0
    %1315 = vmatpush1.msra.mxu0 0.0
    %1316 = vmatprep.subr.mxu0 0.0
    %1317 = vmatpush1.msra.mxu0 0.0
    %1318 = vmatprep.subr.mxu0 0.0
    %1319 = vmatpush1.msra.mxu0 0.0
    %1320 = vmatprep.subr.mxu0 0.0
    %1321 = vmatpush1.msra.mxu0 0.0
    %1322 = vmatprep.subr.mxu0 0.0
    %1323 = vmatpush1.msra.mxu0 0.0
    %1324 = vmatprep.subr.mxu0 0.0
    %1325 = vmatpush1.msra.mxu0 0.0
    %1326 = vmatprep.subr.mxu0 0.0
    %1327 = vmatpush1.msra.mxu0 0.0
    %1328 = vmatprep.subr.mxu0 0.0
    %1329 = vmatpush1.msra.mxu0 0.0
    %1330 = vmatprep.subr.mxu0 0.0
    %1331 = vmatpush1.msra.mxu0 0.0
    %1332 = vmatprep.subr.mxu0 0.0
    %1333 = vmatpush1.msra.mxu0 0.0
    %1334 = vmatprep.subr.mxu0 0.0
    %1335 = vmatpush1.msra.mxu0 0.0
    %1336 = vmatprep.subr.mxu0 0.0
    %1337 = vmatpush1.msra.mxu0 0.0
    %1338 = vmatprep.subr.mxu0 0.0
    %1339 = vmatpush1.msra.mxu0 0.0
    %1340 = vmatprep.subr.mxu0 0.0
    %1341 = vmatpush1.msra.mxu0 0.0
    %1342 = vmatprep.subr.mxu0 0.0
    %1343 = vmatpush1.msra.mxu0 0.0
    %1344 = vmatprep.subr.mxu0 0.0
    %1345 = vmatpush1.msra.mxu0 0.0
    %1346 = vmatprep.subr.mxu0 0.0
    %1347 = vmatpush1.msra.mxu0 0.0
    %1348 = vmatprep.subr.mxu0 0.0
    %1349 = vmatpush1.msra.mxu0 0.0
    %1350 = vmatprep.subr.mxu0 0.0
    %1351 = vmatpush1.msra.mxu0 0.0
    %1352 = vmatprep.subr.mxu0 0.0
    %1353 = vmatpush1.msra.mxu0 0.0
    %1354 = vmatprep.subr.mxu0 0.0
    %1355 = vmatpush1.msra.mxu0 0.0
    %1356 = vmatprep.subr.mxu0 0.0
    %1357 = vmatpush1.msra.mxu0 0.0
    %1358 = vmatprep.mubr.f32.mxu0 0.0
    %1359 = vmatmul.mubr.f32.gmra.mrb[0].mxu0 %v1277
    %v1360 = vpop.f32.mrb[0].mxu0
    %v1361 = vadd.f32 0.0, %v1360
    %v1362 = vpop.f32.mrb[0].mxu0
    %1363 = vmatprep.mubr.f32.mxu0 0.0
    %1364 = vmatmul.mubr.f32.gmra.mrb[0].mxu0 %v1280
    %v1365 = vpop.f32.mrb[0].mxu0
    %v1366 = vadd.f32 0.0, %v1365
    %v1367 = vpop.f32.mrb[0].mxu0
    %1368 = vmatprep.mubr.f32.mxu0 0.0
    %1369 = vmatmul.mubr.f32.gmra.mrb[0].mxu0 %v1283
    %v1370 = vpop.f32.mrb[0].mxu0
    %v1371 = vadd.f32 0.0, %v1370
    %v1372 = vpop.f32.mrb[0].mxu0
    %1373 = vmatprep.mubr.f32.mxu0 0.0
    %1374 = vmatmul.mubr.f32.gmra.mrb[0].mxu0 %v1286
    %v1375 = vpop.f32.mrb[0].mxu0
    %v1376 = vadd.f32 0.0, %v1375
    %v1377 = vpop.f32.mrb[0].mxu0
    %1378 = vmatprep.mubr.f32.mxu0 0.0
    %1379 = vmatmul.mubr.f32.gmra.mrb[0].mxu0 %v1289
    %v1380 = vpop.f32.mrb[0].mxu0
    %v1381 = vadd.f32 0.0, %v1380
    %v1382 = vpop.f32.mrb[0].mxu0
    %1383 = vmatprep.mubr.f32.mxu0 0.0
    %1384 = vmatmul.mubr.f32.gmra.mrb[0].mxu0 %v1292
    %v1385 = vpop.f32.mrb[0].mxu0
    %v1386 = vadd.f32 0.0, %v1385
    %v1387 = vpop.f32.mrb[0].mxu0
    %1388 = vdwg.mxu0
    %v1389 = vadd.f32 %v241, %v1361
    %v1390 = vadd.f32 %v246, %v1366
    %v1391 = vadd.f32 %v251, %v1371
    %v1392 = vadd.f32 %v256, %v1376
    %v1393 = vadd.f32 %v261, %v1381
    %v1394 = vadd.f32 %v266, %v1386
    %s1395 = scalar_lea.vmem %s9, 3
    %v1396 = vld [vmem:[%s1395] sm:$0x1]
    %v1398 = vlaneseq
    %v1399 = vshrl.u32 %v1398, 7
    %v1400 = vsub.s32 0, %v1399
    %v1401 = vrot.slane %v1396, %v1400
    %v1403 = vadd.f32 %v1389, %v1401
    %v1404 = vadd.f32 %v1390, %v1401
    %v1405 = vadd.f32 %v1391, %v1401
    %v1406 = vadd.f32 %v1392, %v1401
    %v1407 = vadd.f32 %v1393, %v1401
    %v1408 = vadd.f32 %v1394, %v1401
    %s1409 = scalar_lea.vmem %s7, 2
    %v1410 = vld [vmem:[%s1409] sm:$0x1]
    %s1411 = scalar_lea.vmem %s7, 3
    %v1412 = vld [vmem:[%s1411] sm:$0x1]
    %v1413 = vsel %vm272, %v1403, 0.0
    %1414 = vadd.xlane.f32.xlu0 %v1413
    %v1415 = vpop.xlane.xlu0 %1414
    %v1416 = vsel %vm272, %v1404, 0.0
    %1417 = vadd.xlane.f32.xlu0 %v1416
    %v1418 = vpop.xlane.xlu0 %1417
    %v1419 = vsel %vm272, %v1405, 0.0
    %1420 = vadd.xlane.f32.xlu0 %v1419
    %v1421 = vpop.xlane.xlu0 %1420
    %v1422 = vsel %vm272, %v1406, 0.0
    %1423 = vadd.xlane.f32.xlu0 %v1422
    %v1424 = vpop.xlane.xlu0 %1423
    %v1425 = vsel %vm272, %v1407, 0.0
    %1426 = vadd.xlane.f32.xlu0 %v1425
    %v1427 = vpop.xlane.xlu0 %1426
    %v1428 = vsel %vm272, %v1408, 0.0
    %1429 = vadd.xlane.f32.xlu0 %v1428
    %v1430 = vpop.xlane.xlu0 %1429
    %v1431 = vmul.f32 %v1415, %v291
    %v1432 = vmul.f32 %v1418, %v291
    %v1433 = vmul.f32 %v1421, %v291
    %v1434 = vmul.f32 %v1424, %v291
    %v1435 = vmul.f32 %v1427, %v291
    %v1436 = vmul.f32 %v1430, %v291
    %v1437 = vsub.f32 %v1403, %v1431
    %v1438 = vsub.f32 %v1404, %v1432
    %v1439 = vsub.f32 %v1405, %v1433
    %v1440 = vsub.f32 %v1406, %v1434
    %v1441 = vsub.f32 %v1407, %v1435
    %v1442 = vsub.f32 %v1408, %v1436
    %v1443 = vmul.f32 %v1437, %v1437
    %v1444 = vmul.f32 %v1438, %v1438
    %v1445 = vmul.f32 %v1439, %v1439
    %v1446 = vmul.f32 %v1440, %v1440
    %v1447 = vmul.f32 %v1441, %v1441
    %v1448 = vmul.f32 %v1442, %v1442
    %v1449 = vsel %vm272, %v1443, 0.0
    %1450 = vadd.xlane.f32.xlu0 %v1449
    %v1451 = vpop.xlane.xlu0 %1450
    %v1452 = vsel %vm272, %v1444, 0.0
    %1453 = vadd.xlane.f32.xlu0 %v1452
    %v1454 = vpop.xlane.xlu0 %1453
    %v1455 = vsel %vm272, %v1445, 0.0
    %1456 = vadd.xlane.f32.xlu0 %v1455
    %v1457 = vpop.xlane.xlu0 %1456
    %v1458 = vsel %vm272, %v1446, 0.0
    %1459 = vadd.xlane.f32.xlu0 %v1458
    %v1460 = vpop.xlane.xlu0 %1459
    %v1461 = vsel %vm272, %v1447, 0.0
    %1462 = vadd.xlane.f32.xlu0 %v1461
    %v1463 = vpop.xlane.xlu0 %1462
    %v1464 = vsel %vm272, %v1448, 0.0
    %1465 = vadd.xlane.f32.xlu0 %v1464
    %v1466 = vpop.xlane.xlu0 %1465
    %v1467 = vmul.f32 %v1451, %v291
    %v1468 = vmul.f32 %v1454, %v291
    %v1469 = vmul.f32 %v1457, %v291
    %v1470 = vmul.f32 %v1460, %v291
    %v1471 = vmul.f32 %v1463, %v291
    %v1472 = vmul.f32 %v1466, %v291
    %v1473 = vadd.f32 %v1467, 1e-05
    %v1474 = vadd.f32 %v1468, 1e-05
    %v1475 = vadd.f32 %v1469, 1e-05
    %v1476 = vadd.f32 %v1470, 1e-05
    %v1477 = vadd.f32 %v1471, 1e-05
    %v1478 = vadd.f32 %v1472, 1e-05
    %v1479 = vrsqrt.pop %v1473
    %v1480 = vrsqrt.pop %v1474
    %v1481 = vrsqrt.pop %v1475
    %v1482 = vrsqrt.pop %v1476
    %v1483 = vrsqrt.pop %v1477
    %v1484 = vrsqrt.pop %v1478
    %v1485 = vmul.f32 %v1437, %v1479
    %v1486 = vmul.f32 %v1438, %v1480
    %v1487 = vmul.f32 %v1439, %v1481
    %v1488 = vmul.f32 %v1440, %v1482
    %v1489 = vmul.f32 %v1441, %v1483
    %v1490 = vmul.f32 %v1442, %v1484
    %v1492 = vlaneseq
    %v1493 = vshrl.u32 %v1492, 7
    %v1494 = vsub.s32 0, %v1493
    %v1495 = vrot.slane %v1410, %v1494
    %v1497 = vmul.f32 %v1485, %v1495
    %v1498 = vmul.f32 %v1486, %v1495
    %v1499 = vmul.f32 %v1487, %v1495
    %v1500 = vmul.f32 %v1488, %v1495
    %v1501 = vmul.f32 %v1489, %v1495
    %v1502 = vmul.f32 %v1490, %v1495
    %v1504 = vlaneseq
    %v1505 = vshrl.u32 %v1504, 7
    %v1506 = vsub.s32 0, %v1505
    %v1507 = vrot.slane %v1412, %v1506
    %v1509 = vadd.f32 %v1497, %v1507
    %v1510 = vadd.f32 %v1498, %v1507
    %v1511 = vadd.f32 %v1499, %v1507
    %v1512 = vadd.f32 %v1500, %v1507
    %v1513 = vadd.f32 %v1501, %v1507
    %v1514 = vadd.f32 %v1502, %v1507
    %v1515 = vld [vmem:[%s10] sm:$0xff]
    %v1516 = vld [vmem:[%s10 + $0x8] sm:$0xff]
    %v1517 = vld [vmem:[%s10 + $0x10] sm:$0xff]
    %v1518 = vld [vmem:[%s10 + $0x18] sm:$0xff]
    %v1519 = vld [vmem:[%s11] sm:$0x1]
    %v1521 = vlaneseq
    %v1522 = vshrl.u32 %v1521, 7
    %v1523 = vsub.s32 0, %v1522
    %v1524 = vrot.slane %v1519, %v1523
    %v1527 = vsel %vm272, %v1509, 0
    %v1530 = vsel %vm272, %v1510, 0
    %v1533 = vsel %vm272, %v1511, 0
    %v1536 = vsel %vm272, %v1512, 0
    %v1539 = vsel %vm272, %v1513, 0
    %v1542 = vsel %vm272, %v1514, 0
    %1544 = vmatprep.subr.mxu0 0.0
    %1545 = vmatpush1.msra.mxu0 %v1515
    %1546 = vmatprep.subr.mxu0 0.0
    %1547 = vmatpush1.msra.mxu0 %v1516
    %1548 = vmatprep.subr.mxu0 0.0
    %1549 = vmatpush1.msra.mxu0 %v1517
    %1550 = vmatprep.subr.mxu0 0.0
    %1551 = vmatpush1.msra.mxu0 %v1518
    %1552 = vmatprep.subr.mxu0 0.0
    %1553 = vmatpush1.msra.mxu0 0.0
    %1554 = vmatprep.subr.mxu0 0.0
    %1555 = vmatpush1.msra.mxu0 0.0
    %1556 = vmatprep.subr.mxu0 0.0
    %1557 = vmatpush1.msra.mxu0 0.0
    %1558 = vmatprep.subr.mxu0 0.0
    %1559 = vmatpush1.msra.mxu0 0.0
    %1560 = vmatprep.subr.mxu0 0.0
    %1561 = vmatpush1.msra.mxu0 0.0
    %1562 = vmatprep.subr.mxu0 0.0
    %1563 = vmatpush1.msra.mxu0 0.0
    %1564 = vmatprep.subr.mxu0 0.0
    %1565 = vmatpush1.msra.mxu0 0.0
    %1566 = vmatprep.subr.mxu0 0.0
    %1567 = vmatpush1.msra.mxu0 0.0
    %1568 = vmatprep.subr.mxu0 0.0
    %1569 = vmatpush1.msra.mxu0 0.0
    %1570 = vmatprep.subr.mxu0 0.0
    %1571 = vmatpush1.msra.mxu0 0.0
    %1572 = vmatprep.subr.mxu0 0.0
    %1573 = vmatpush1.msra.mxu0 0.0
    %1574 = vmatprep.subr.mxu0 0.0
    %1575 = vmatpush1.msra.mxu0 0.0
    %1576 = vmatprep.subr.mxu0 0.0
    %1577 = vmatpush1.msra.mxu0 0.0
    %1578 = vmatprep.subr.mxu0 0.0
    %1579 = vmatpush1.msra.mxu0 0.0
    %1580 = vmatprep.subr.mxu0 0.0
    %1581 = vmatpush1.msra.mxu0 0.0
    %1582 = vmatprep.subr.mxu0 0.0
    %1583 = vmatpush1.msra.mxu0 0.0
    %1584 = vmatprep.subr.mxu0 0.0
    %1585 = vmatpush1.msra.mxu0 0.0
    %1586 = vmatprep.subr.mxu0 0.0
    %1587 = vmatpush1.msra.mxu0 0.0
    %1588 = vmatprep.subr.mxu0 0.0
    %1589 = vmatpush1.msra.mxu0 0.0
    %1590 = vmatprep.subr.mxu0 0.0
    %1591 = vmatpush1.msra.mxu0 0.0
    %1592 = vmatprep.subr.mxu0 0.0
    %1593 = vmatpush1.msra.mxu0 0.0
    %1594 = vmatprep.subr.mxu0 0.0
    %1595 = vmatpush1.msra.mxu0 0.0
    %1596 = vmatprep.subr.mxu0 0.0
    %1597 = vmatpush1.msra.mxu0 0.0
    %1598 = vmatprep.subr.mxu0 0.0
    %1599 = vmatpush1.msra.mxu0 0.0
    %1600 = vmatprep.subr.mxu0 0.0
    %1601 = vmatpush1.msra.mxu0 0.0
    %1602 = vmatprep.subr.mxu0 0.0
    %1603 = vmatpush1.msra.mxu0 0.0
    %1604 = vmatprep.subr.mxu0 0.0
    %1605 = vmatpush1.msra.mxu0 0.0
    %1606 = vmatprep.subr.mxu0 0.0
    %1607 = vmatpush1.msra.mxu0 0.0
    %1608 = vmatprep.mubr.f32.mxu0 0.0
    %1609 = vmatmul.mubr.f32.gmra.mrb[0].mxu0 %v1527
    %v1610 = vpop.f32.mrb[0].mxu0
    %v1611 = vadd.f32 %v1524, %v1610
    %v1612 = vpop.f32.mrb[0].mxu0
    %1613 = vmatprep.mubr.f32.mxu0 0.0
    %1614 = vmatmul.mubr.f32.gmra.mrb[0].mxu0 %v1530
    %v1615 = vpop.f32.mrb[0].mxu0
    %v1616 = vadd.f32 %v1524, %v1615
    %v1617 = vpop.f32.mrb[0].mxu0
    %1618 = vmatprep.mubr.f32.mxu0 0.0
    %1619 = vmatmul.mubr.f32.gmra.mrb[0].mxu0 %v1533
    %v1620 = vpop.f32.mrb[0].mxu0
    %v1621 = vadd.f32 %v1524, %v1620
    %v1622 = vpop.f32.mrb[0].mxu0
    %1623 = vmatprep.mubr.f32.mxu0 0.0
    %1624 = vmatmul.mubr.f32.gmra.mrb[0].mxu0 %v1536
    %v1625 = vpop.f32.mrb[0].mxu0
    %v1626 = vadd.f32 %v1524, %v1625
    %v1627 = vpop.f32.mrb[0].mxu0
    %1628 = vmatprep.mubr.f32.mxu0 0.0
    %1629 = vmatmul.mubr.f32.gmra.mrb[0].mxu0 %v1539
    %v1630 = vpop.f32.mrb[0].mxu0
    %v1631 = vadd.f32 %v1524, %v1630
    %v1632 = vpop.f32.mrb[0].mxu0
    %1633 = vmatprep.mubr.f32.mxu0 0.0
    %1634 = vmatmul.mubr.f32.gmra.mrb[0].mxu0 %v1542
    %v1635 = vpop.f32.mrb[0].mxu0
    %v1636 = vadd.f32 %v1524, %v1635
    %v1637 = vpop.f32.mrb[0].mxu0
    %1638 = vdwg.mxu0
    %v1639 = vmul.f32 %v1611, 0.5
    %v1640 = vmul.f32 %v1616, 0.5
    %v1641 = vmul.f32 %v1621, 0.5
    %v1642 = vmul.f32 %v1626, 0.5
    %v1643 = vmul.f32 %v1631, 0.5
    %v1644 = vmul.f32 %v1636, 0.5
    %v1645 = vmul.f32 %v1611, 0.044715
    %v1646 = vmul.f32 %v1616, 0.044715
    %v1647 = vmul.f32 %v1621, 0.044715
    %v1648 = vmul.f32 %v1626, 0.044715
    %v1649 = vmul.f32 %v1631, 0.044715
    %v1650 = vmul.f32 %v1636, 0.044715
    %v1651 = vmul.f32 %v1645, %v1611
    %v1652 = vmul.f32 %v1646, %v1616
    %v1653 = vmul.f32 %v1647, %v1621
    %v1654 = vmul.f32 %v1648, %v1626
    %v1655 = vmul.f32 %v1649, %v1631
    %v1656 = vmul.f32 %v1650, %v1636
    %v1657 = vmul.f32 %v1651, %v1611
    %v1658 = vmul.f32 %v1652, %v1616
    %v1659 = vmul.f32 %v1653, %v1621
    %v1660 = vmul.f32 %v1654, %v1626
    %v1661 = vmul.f32 %v1655, %v1631
    %v1662 = vmul.f32 %v1656, %v1636
    %v1663 = vadd.f32 %v1611, %v1657
    %v1664 = vadd.f32 %v1616, %v1658
    %v1665 = vadd.f32 %v1621, %v1659
    %v1666 = vadd.f32 %v1626, %v1660
    %v1667 = vadd.f32 %v1631, %v1661
    %v1668 = vadd.f32 %v1636, %v1662
    %v1669 = vmul.f32 %v1663, 0.7978846
    %v1670 = vmul.f32 %v1664, 0.7978846
    %v1671 = vmul.f32 %v1665, 0.7978846
    %v1672 = vmul.f32 %v1666, 0.7978846
    %v1673 = vmul.f32 %v1667, 0.7978846
    %v1674 = vmul.f32 %v1668, 0.7978846
    %v1675 = vtanh.pop %v1669
    %v1676 = vtanh.pop %v1670
    %v1677 = vtanh.pop %v1671
    %v1678 = vtanh.pop %v1672
    %v1679 = vtanh.pop %v1673
    %v1680 = vtanh.pop %v1674
    %v1681 = vadd.f32 %v1675, 1.0
    %v1682 = vadd.f32 %v1676, 1.0
    %v1683 = vadd.f32 %v1677, 1.0
    %v1684 = vadd.f32 %v1678, 1.0
    %v1685 = vadd.f32 %v1679, 1.0
    %v1686 = vadd.f32 %v1680, 1.0
    %v1687 = vmul.f32 %v1639, %v1681
    %v1688 = vmul.f32 %v1640, %v1682
    %v1689 = vmul.f32 %v1641, %v1683
    %v1690 = vmul.f32 %v1642, %v1684
    %v1691 = vmul.f32 %v1643, %v1685
    %v1692 = vmul.f32 %v1644, %v1686
    %v1693 = vld [vmem:[%s12] sm:$0xff]
    %v1694 = vld [vmem:[%s12 + $0x8] sm:$0xff]
    %v1695 = vld [vmem:[%s12 + $0x10] sm:$0xff]
    %v1696 = vld [vmem:[%s12 + $0x18] sm:$0xff]
    %v1697 = vld [vmem:[%s12 + $0x20] sm:$0xff]
    %v1698 = vld [vmem:[%s12 + $0x28] sm:$0xff]
    %v1699 = vld [vmem:[%s12 + $0x30] sm:$0xff]
    %v1700 = vld [vmem:[%s12 + $0x38] sm:$0xff]
    %v1701 = vld [vmem:[%s12 + $0x40] sm:$0xff]
    %v1702 = vld [vmem:[%s12 + $0x48] sm:$0xff]
    %v1703 = vld [vmem:[%s12 + $0x50] sm:$0xff]
    %v1704 = vld [vmem:[%s12 + $0x58] sm:$0xff]
    %v1705 = vld [vmem:[%s12 + $0x60] sm:$0xff]
    %v1706 = vld [vmem:[%s12 + $0x68] sm:$0xff]
    %v1707 = vld [vmem:[%s12 + $0x70] sm:$0xff]
    %v1708 = vld [vmem:[%s12 + $0x78] sm:$0xff]
    %1709 = vmatprep.subr.mxu0 0.0
    %1710 = vmatpush1.msra.mxu0 %v1693
    %1711 = vmatprep.subr.mxu0 0.0
    %1712 = vmatpush1.msra.mxu0 %v1694
    %1713 = vmatprep.subr.mxu0 0.0
    %1714 = vmatpush1.msra.mxu0 %v1695
    %1715 = vmatprep.subr.mxu0 0.0
    %1716 = vmatpush1.msra.mxu0 %v1696
    %1717 = vmatprep.subr.mxu0 0.0
    %1718 = vmatpush1.msra.mxu0 %v1697
    %1719 = vmatprep.subr.mxu0 0.0
    %1720 = vmatpush1.msra.mxu0 %v1698
    %1721 = vmatprep.subr.mxu0 0.0
    %1722 = vmatpush1.msra.mxu0 %v1699
    %1723 = vmatprep.subr.mxu0 0.0
    %1724 = vmatpush1.msra.mxu0 %v1700
    %1725 = vmatprep.subr.mxu0 0.0
    %1726 = vmatpush1.msra.mxu0 %v1701
    %1727 = vmatprep.subr.mxu0 0.0
    %1728 = vmatpush1.msra.mxu0 %v1702
    %1729 = vmatprep.subr.mxu0 0.0
    %1730 = vmatpush1.msra.mxu0 %v1703
    %1731 = vmatprep.subr.mxu0 0.0
    %1732 = vmatpush1.msra.mxu0 %v1704
    %1733 = vmatprep.subr.mxu0 0.0
    %1734 = vmatpush1.msra.mxu0 %v1705
    %1735 = vmatprep.subr.mxu0 0.0
    %1736 = vmatpush1.msra.mxu0 %v1706
    %1737 = vmatprep.subr.mxu0 0.0
    %1738 = vmatpush1.msra.mxu0 %v1707
    %1739 = vmatprep.subr.mxu0 0.0
    %1740 = vmatpush1.msra.mxu0 %v1708
    %1741 = vmatprep.subr.mxu0 0.0
    %1742 = vmatpush1.msra.mxu0 0.0
    %1743 = vmatprep.subr.mxu0 0.0
    %1744 = vmatpush1.msra.mxu0 0.0
    %1745 = vmatprep.subr.mxu0 0.0
    %1746 = vmatpush1.msra.mxu0 0.0
    %1747 = vmatprep.subr.mxu0 0.0
    %1748 = vmatpush1.msra.mxu0 0.0
    %1749 = vmatprep.subr.mxu0 0.0
    %1750 = vmatpush1.msra.mxu0 0.0
    %1751 = vmatprep.subr.mxu0 0.0
    %1752 = vmatpush1.msra.mxu0 0.0
    %1753 = vmatprep.subr.mxu0 0.0
    %1754 = vmatpush1.msra.mxu0 0.0
    %1755 = vmatprep.subr.mxu0 0.0
    %1756 = vmatpush1.msra.mxu0 0.0
    %1757 = vmatprep.subr.mxu0 0.0
    %1758 = vmatpush1.msra.mxu0 0.0
    %1759 = vmatprep.subr.mxu0 0.0
    %1760 = vmatpush1.msra.mxu0 0.0
    %1761 = vmatprep.subr.mxu0 0.0
    %1762 = vmatpush1.msra.mxu0 0.0
    %1763 = vmatprep.subr.mxu0 0.0
    %1764 = vmatpush1.msra.mxu0 0.0
    %1765 = vmatprep.subr.mxu0 0.0
    %1766 = vmatpush1.msra.mxu0 0.0
    %1767 = vmatprep.subr.mxu0 0.0
    %1768 = vmatpush1.msra.mxu0 0.0
    %1769 = vmatprep.subr.mxu0 0.0
    %1770 = vmatpush1.msra.mxu0 0.0
    %1771 = vmatprep.subr.mxu0 0.0
    %1772 = vmatpush1.msra.mxu0 0.0
    %1773 = vmatprep.mubr.f32.mxu0 0.0
    %1774 = vmatmul.mubr.f32.gmra.mrb[0].mxu0 %v1687
    %v1775 = vpop.f32.mrb[0].mxu0
    %v1776 = vadd.f32 0.0, %v1775
    %v1777 = vpop.f32.mrb[0].mxu0
    %1778 = vmatprep.mubr.f32.mxu0 0.0
    %1779 = vmatmul.mubr.f32.gmra.mrb[0].mxu0 %v1688
    %v1780 = vpop.f32.mrb[0].mxu0
    %v1781 = vadd.f32 0.0, %v1780
    %v1782 = vpop.f32.mrb[0].mxu0
    %1783 = vmatprep.mubr.f32.mxu0 0.0
    %1784 = vmatmul.mubr.f32.gmra.mrb[0].mxu0 %v1689
    %v1785 = vpop.f32.mrb[0].mxu0
    %v1786 = vadd.f32 0.0, %v1785
    %v1787 = vpop.f32.mrb[0].mxu0
    %1788 = vmatprep.mubr.f32.mxu0 0.0
    %1789 = vmatmul.mubr.f32.gmra.mrb[0].mxu0 %v1690
    %v1790 = vpop.f32.mrb[0].mxu0
    %v1791 = vadd.f32 0.0, %v1790
    %v1792 = vpop.f32.mrb[0].mxu0
    %1793 = vmatprep.mubr.f32.mxu0 0.0
    %1794 = vmatmul.mubr.f32.gmra.mrb[0].mxu0 %v1691
    %v1795 = vpop.f32.mrb[0].mxu0
    %v1796 = vadd.f32 0.0, %v1795
    %v1797 = vpop.f32.mrb[0].mxu0
    %1798 = vmatprep.mubr.f32.mxu0 0.0
    %1799 = vmatmul.mubr.f32.gmra.mrb[0].mxu0 %v1692
    %v1800 = vpop.f32.mrb[0].mxu0
    %v1801 = vadd.f32 0.0, %v1800
    %v1802 = vpop.f32.mrb[0].mxu0
    %1803 = vdwg.mxu0
    %v1804 = vadd.f32 %v1403, %v1776
    %v1805 = vadd.f32 %v1404, %v1781
    %v1806 = vadd.f32 %v1405, %v1786
    %v1807 = vadd.f32 %v1406, %v1791
    %v1808 = vadd.f32 %v1407, %v1796
    %v1809 = vadd.f32 %v1408, %v1801
    %s1810 = scalar_lea.vmem %s9, 4
    %v1811 = vld [vmem:[%s1810] sm:$0x1]
    %v1813 = vlaneseq
    %v1814 = vshrl.u32 %v1813, 7
    %v1815 = vsub.s32 0, %v1814
    %v1816 = vrot.slane %v1811, %v1815
    %v1818 = vadd.f32 %v1804, %v1816
    %v1819 = vadd.f32 %v1805, %v1816
    %v1820 = vadd.f32 %v1806, %v1816
    %v1821 = vadd.f32 %v1807, %v1816
    %v1822 = vadd.f32 %v1808, %v1816
    %v1823 = vadd.f32 %v1809, %v1816
    %s1824 = scalar_lea.vmem %s7, 4
    %v1825 = vld [vmem:[%s1824] sm:$0x1]
    %s1826 = scalar_lea.vmem %s7, 5
    %v1827 = vld [vmem:[%s1826] sm:$0x1]
    %v1828 = vsel %vm272, %v1818, 0.0
    %1829 = vadd.xlane.f32.xlu0 %v1828
    %v1830 = vpop.xlane.xlu0 %1829
    %v1831 = vsel %vm272, %v1819, 0.0
    %1832 = vadd.xlane.f32.xlu0 %v1831
    %v1833 = vpop.xlane.xlu0 %1832
    %v1834 = vsel %vm272, %v1820, 0.0
    %1835 = vadd.xlane.f32.xlu0 %v1834
    %v1836 = vpop.xlane.xlu0 %1835
    %v1837 = vsel %vm272, %v1821, 0.0
    %1838 = vadd.xlane.f32.xlu0 %v1837
    %v1839 = vpop.xlane.xlu0 %1838
    %v1840 = vsel %vm272, %v1822, 0.0
    %1841 = vadd.xlane.f32.xlu0 %v1840
    %v1842 = vpop.xlane.xlu0 %1841
    %v1843 = vsel %vm272, %v1823, 0.0
    %1844 = vadd.xlane.f32.xlu0 %v1843
    %v1845 = vpop.xlane.xlu0 %1844
    %v1846 = vmul.f32 %v1830, %v291
    %v1847 = vmul.f32 %v1833, %v291
    %v1848 = vmul.f32 %v1836, %v291
    %v1849 = vmul.f32 %v1839, %v291
    %v1850 = vmul.f32 %v1842, %v291
    %v1851 = vmul.f32 %v1845, %v291
    %v1852 = vsub.f32 %v1818, %v1846
    %v1853 = vsub.f32 %v1819, %v1847
    %v1854 = vsub.f32 %v1820, %v1848
    %v1855 = vsub.f32 %v1821, %v1849
    %v1856 = vsub.f32 %v1822, %v1850
    %v1857 = vsub.f32 %v1823, %v1851
    %v1858 = vmul.f32 %v1852, %v1852
    %v1859 = vmul.f32 %v1853, %v1853
    %v1860 = vmul.f32 %v1854, %v1854
    %v1861 = vmul.f32 %v1855, %v1855
    %v1862 = vmul.f32 %v1856, %v1856
    %v1863 = vmul.f32 %v1857, %v1857
    %v1864 = vsel %vm272, %v1858, 0.0
    %1865 = vadd.xlane.f32.xlu0 %v1864
    %v1866 = vpop.xlane.xlu0 %1865
    %v1867 = vsel %vm272, %v1859, 0.0
    %1868 = vadd.xlane.f32.xlu0 %v1867
    %v1869 = vpop.xlane.xlu0 %1868
    %v1870 = vsel %vm272, %v1860, 0.0
    %1871 = vadd.xlane.f32.xlu0 %v1870
    %v1872 = vpop.xlane.xlu0 %1871
    %v1873 = vsel %vm272, %v1861, 0.0
    %1874 = vadd.xlane.f32.xlu0 %v1873
    %v1875 = vpop.xlane.xlu0 %1874
    %v1876 = vsel %vm272, %v1862, 0.0
    %1877 = vadd.xlane.f32.xlu0 %v1876
    %v1878 = vpop.xlane.xlu0 %1877
    %v1879 = vsel %vm272, %v1863, 0.0
    %1880 = vadd.xlane.f32.xlu0 %v1879
    %v1881 = vpop.xlane.xlu0 %1880
    %v1882 = vmul.f32 %v1866, %v291
    %v1883 = vmul.f32 %v1869, %v291
    %v1884 = vmul.f32 %v1872, %v291
    %v1885 = vmul.f32 %v1875, %v291
    %v1886 = vmul.f32 %v1878, %v291
    %v1887 = vmul.f32 %v1881, %v291
    %v1888 = vadd.f32 %v1882, 1e-05
    %v1889 = vadd.f32 %v1883, 1e-05
    %v1890 = vadd.f32 %v1884, 1e-05
    %v1891 = vadd.f32 %v1885, 1e-05
    %v1892 = vadd.f32 %v1886, 1e-05
    %v1893 = vadd.f32 %v1887, 1e-05
    %v1894 = vrsqrt.pop %v1888
    %v1895 = vrsqrt.pop %v1889
    %v1896 = vrsqrt.pop %v1890
    %v1897 = vrsqrt.pop %v1891
    %v1898 = vrsqrt.pop %v1892
    %v1899 = vrsqrt.pop %v1893
    %v1900 = vmul.f32 %v1852, %v1894
    %v1901 = vmul.f32 %v1853, %v1895
    %v1902 = vmul.f32 %v1854, %v1896
    %v1903 = vmul.f32 %v1855, %v1897
    %v1904 = vmul.f32 %v1856, %v1898
    %v1905 = vmul.f32 %v1857, %v1899
    %v1907 = vlaneseq
    %v1908 = vshrl.u32 %v1907, 7
    %v1909 = vsub.s32 0, %v1908
    %v1910 = vrot.slane %v1825, %v1909
    %v1912 = vmul.f32 %v1900, %v1910
    %v1913 = vmul.f32 %v1901, %v1910
    %v1914 = vmul.f32 %v1902, %v1910
    %v1915 = vmul.f32 %v1903, %v1910
    %v1916 = vmul.f32 %v1904, %v1910
    %v1917 = vmul.f32 %v1905, %v1910
    %v1919 = vlaneseq
    %v1920 = vshrl.u32 %v1919, 7
    %v1921 = vsub.s32 0, %v1920
    %v1922 = vrot.slane %v1827, %v1921
    %v1924 = vadd.f32 %v1912, %v1922
    %v1925 = vadd.f32 %v1913, %v1922
    %v1926 = vadd.f32 %v1914, %v1922
    %v1927 = vadd.f32 %v1915, %v1922
    %v1928 = vadd.f32 %v1916, %v1922
    %v1929 = vadd.f32 %v1917, %v1922
    %s1930 = scalar_lea.vmem %s8, 128
    %v1931 = vld [vmem:[%s1930] sm:$0xff]
    %v1932 = vld [vmem:[%s1930 + $0x8] sm:$0xff]
    %v1933 = vld [vmem:[%s1930 + $0x10] sm:$0xff]
    %v1934 = vld [vmem:[%s1930 + $0x18] sm:$0xff]
    %s1935 = scalar_lea.vmem %s9, 5
    %v1936 = vld [vmem:[%s1935] sm:$0x1]
    %v1938 = vlaneseq
    %v1939 = vshrl.u32 %v1938, 7
    %v1940 = vsub.s32 0, %v1939
    %v1941 = vrot.slane %v1936, %v1940
    %v1944 = vsel %vm272, %v1924, 0
    %v1947 = vsel %vm272, %v1925, 0
    %v1950 = vsel %vm272, %v1926, 0
    %v1953 = vsel %vm272, %v1927, 0
    %v1956 = vsel %vm272, %v1928, 0
    %v1959 = vsel %vm272, %v1929, 0
    %1961 = vmatprep.subr.mxu0 0.0
    %1962 = vmatpush1.msra.mxu0 %v1931
    %1963 = vmatprep.subr.mxu0 0.0
    %1964 = vmatpush1.msra.mxu0 %v1932
    %1965 = vmatprep.subr.mxu0 0.0
    %1966 = vmatpush1.msra.mxu0 %v1933
    %1967 = vmatprep.subr.mxu0 0.0
    %1968 = vmatpush1.msra.mxu0 %v1934
    %1969 = vmatprep.subr.mxu0 0.0
    %1970 = vmatpush1.msra.mxu0 0.0
    %1971 = vmatprep.subr.mxu0 0.0
    %1972 = vmatpush1.msra.mxu0 0.0
    %1973 = vmatprep.subr.mxu0 0.0
    %1974 = vmatpush1.msra.mxu0 0.0
    %1975 = vmatprep.subr.mxu0 0.0
    %1976 = vmatpush1.msra.mxu0 0.0
    %1977 = vmatprep.subr.mxu0 0.0
    %1978 = vmatpush1.msra.mxu0 0.0
    %1979 = vmatprep.subr.mxu0 0.0
    %1980 = vmatpush1.msra.mxu0 0.0
    %1981 = vmatprep.subr.mxu0 0.0
    %1982 = vmatpush1.msra.mxu0 0.0
    %1983 = vmatprep.subr.mxu0 0.0
    %1984 = vmatpush1.msra.mxu0 0.0
    %1985 = vmatprep.subr.mxu0 0.0
    %1986 = vmatpush1.msra.mxu0 0.0
    %1987 = vmatprep.subr.mxu0 0.0
    %1988 = vmatpush1.msra.mxu0 0.0
    %1989 = vmatprep.subr.mxu0 0.0
    %1990 = vmatpush1.msra.mxu0 0.0
    %1991 = vmatprep.subr.mxu0 0.0
    %1992 = vmatpush1.msra.mxu0 0.0
    %1993 = vmatprep.subr.mxu0 0.0
    %1994 = vmatpush1.msra.mxu0 0.0
    %1995 = vmatprep.subr.mxu0 0.0
    %1996 = vmatpush1.msra.mxu0 0.0
    %1997 = vmatprep.subr.mxu0 0.0
    %1998 = vmatpush1.msra.mxu0 0.0
    %1999 = vmatprep.subr.mxu0 0.0
    %2000 = vmatpush1.msra.mxu0 0.0
    %2001 = vmatprep.subr.mxu0 0.0
    %2002 = vmatpush1.msra.mxu0 0.0
    %2003 = vmatprep.subr.mxu0 0.0
    %2004 = vmatpush1.msra.mxu0 0.0
    %2005 = vmatprep.subr.mxu0 0.0
    %2006 = vmatpush1.msra.mxu0 0.0
    %2007 = vmatprep.subr.mxu0 0.0
    %2008 = vmatpush1.msra.mxu0 0.0
    %2009 = vmatprep.subr.mxu0 0.0
    %2010 = vmatpush1.msra.mxu0 0.0
    %2011 = vmatprep.subr.mxu0 0.0
    %2012 = vmatpush1.msra.mxu0 0.0
    %2013 = vmatprep.subr.mxu0 0.0
    %2014 = vmatpush1.msra.mxu0 0.0
    %2015 = vmatprep.subr.mxu0 0.0
    %2016 = vmatpush1.msra.mxu0 0.0
    %2017 = vmatprep.subr.mxu0 0.0
    %2018 = vmatpush1.msra.mxu0 0.0
    %2019 = vmatprep.subr.mxu0 0.0
    %2020 = vmatpush1.msra.mxu0 0.0
    %2021 = vmatprep.subr.mxu0 0.0
    %2022 = vmatpush1.msra.mxu0 0.0
    %2023 = vmatprep.subr.mxu0 0.0
    %2024 = vmatpush1.msra.mxu0 0.0
    %2025 = vmatprep.mubr.f32.mxu0 0.0
    %2026 = vmatmul.mubr.f32.gmra.mrb[0].mxu0 %v1944
    %v2027 = vpop.f32.mrb[0].mxu0
    %v2028 = vadd.f32 %v1941, %v2027
    %v2029 = vpop.f32.mrb[0].mxu0
    %2030 = vmatprep.mubr.f32.mxu0 0.0
    %2031 = vmatmul.mubr.f32.gmra.mrb[0].mxu0 %v1947
    %v2032 = vpop.f32.mrb[0].mxu0
    %v2033 = vadd.f32 %v1941, %v2032
    %v2034 = vpop.f32.mrb[0].mxu0
    %2035 = vmatprep.mubr.f32.mxu0 0.0
    %2036 = vmatmul.mubr.f32.gmra.mrb[0].mxu0 %v1950
    %v2037 = vpop.f32.mrb[0].mxu0
    %v2038 = vadd.f32 %v1941, %v2037
    %v2039 = vpop.f32.mrb[0].mxu0
    %2040 = vmatprep.mubr.f32.mxu0 0.0
    %2041 = vmatmul.mubr.f32.gmra.mrb[0].mxu0 %v1953
    %v2042 = vpop.f32.mrb[0].mxu0
    %v2043 = vadd.f32 %v1941, %v2042
    %v2044 = vpop.f32.mrb[0].mxu0
    %2045 = vmatprep.mubr.f32.mxu0 0.0
    %2046 = vmatmul.mubr.f32.gmra.mrb[0].mxu0 %v1956
    %v2047 = vpop.f32.mrb[0].mxu0
    %v2048 = vadd.f32 %v1941, %v2047
    %v2049 = vpop.f32.mrb[0].mxu0
    %2050 = vmatprep.mubr.f32.mxu0 0.0
    %2051 = vmatmul.mubr.f32.gmra.mrb[0].mxu0 %v1959
    %v2052 = vpop.f32.mrb[0].mxu0
    %v2053 = vadd.f32 %v1941, %v2052
    %v2054 = vpop.f32.mrb[0].mxu0
    %2055 = vdwg.mxu0
    %s2056 = scalar_lea.vmem %s8, 160
    %v2057 = vld [vmem:[%s2056] sm:$0xff]
    %v2058 = vld [vmem:[%s2056 + $0x8] sm:$0xff]
    %v2059 = vld [vmem:[%s2056 + $0x10] sm:$0xff]
    %v2060 = vld [vmem:[%s2056 + $0x18] sm:$0xff]
    %s2061 = scalar_lea.vmem %s9, 6
    %v2062 = vld [vmem:[%s2061] sm:$0x1]
    %v2064 = vlaneseq
    %v2065 = vshrl.u32 %v2064, 7
    %v2066 = vsub.s32 0, %v2065
    %v2067 = vrot.slane %v2062, %v2066
    %2069 = vmatprep.subr.mxu0 0.0
    %2070 = vmatpush1.msra.mxu0 %v2057
    %2071 = vmatprep.subr.mxu0 0.0
    %2072 = vmatpush1.msra.mxu0 %v2058
    %2073 = vmatprep.subr.mxu0 0.0
    %2074 = vmatpush1.msra.mxu0 %v2059
    %2075 = vmatprep.subr.mxu0 0.0
    %2076 = vmatpush1.msra.mxu0 %v2060
    %2077 = vmatprep.subr.mxu0 0.0
    %2078 = vmatpush1.msra.mxu0 0.0
    %2079 = vmatprep.subr.mxu0 0.0
    %2080 = vmatpush1.msra.mxu0 0.0
    %2081 = vmatprep.subr.mxu0 0.0
    %2082 = vmatpush1.msra.mxu0 0.0
    %2083 = vmatprep.subr.mxu0 0.0
    %2084 = vmatpush1.msra.mxu0 0.0
    %2085 = vmatprep.subr.mxu0 0.0
    %2086 = vmatpush1.msra.mxu0 0.0
    %2087 = vmatprep.subr.mxu0 0.0
    %2088 = vmatpush1.msra.mxu0 0.0
    %2089 = vmatprep.subr.mxu0 0.0
    %2090 = vmatpush1.msra.mxu0 0.0
    %2091 = vmatprep.subr.mxu0 0.0
    %2092 = vmatpush1.msra.mxu0 0.0
    %2093 = vmatprep.subr.mxu0 0.0
    %2094 = vmatpush1.msra.mxu0 0.0
    %2095 = vmatprep.subr.mxu0 0.0
    %2096 = vmatpush1.msra.mxu0 0.0
    %2097 = vmatprep.subr.mxu0 0.0
    %2098 = vmatpush1.msra.mxu0 0.0
    %2099 = vmatprep.subr.mxu0 0.0
    %2100 = vmatpush1.msra.mxu0 0.0
    %2101 = vmatprep.subr.mxu0 0.0
    %2102 = vmatpush1.msra.mxu0 0.0
    %2103 = vmatprep.subr.mxu0 0.0
    %2104 = vmatpush1.msra.mxu0 0.0
    %2105 = vmatprep.subr.mxu0 0.0
    %2106 = vmatpush1.msra.mxu0 0.0
    %2107 = vmatprep.subr.mxu0 0.0
    %2108 = vmatpush1.msra.mxu0 0.0
    %2109 = vmatprep.subr.mxu0 0.0
    %2110 = vmatpush1.msra.mxu0 0.0
    %2111 = vmatprep.subr.mxu0 0.0
    %2112 = vmatpush1.msra.mxu0 0.0
    %2113 = vmatprep.subr.mxu0 0.0
    %2114 = vmatpush1.msra.mxu0 0.0
    %2115 = vmatprep.subr.mxu0 0.0
    %2116 = vmatpush1.msra.mxu0 0.0
    %2117 = vmatprep.subr.mxu0 0.0
    %2118 = vmatpush1.msra.mxu0 0.0
    %2119 = vmatprep.subr.mxu0 0.0
    %2120 = vmatpush1.msra.mxu0 0.0
    %2121 = vmatprep.subr.mxu0 0.0
    %2122 = vmatpush1.msra.mxu0 0.0
    %2123 = vmatprep.subr.mxu0 0.0
    %2124 = vmatpush1.msra.mxu0 0.0
    %2125 = vmatprep.subr.mxu0 0.0
    %2126 = vmatpush1.msra.mxu0 0.0
    %2127 = vmatprep.subr.mxu0 0.0
    %2128 = vmatpush1.msra.mxu0 0.0
    %2129 = vmatprep.subr.mxu0 0.0
    %2130 = vmatpush1.msra.mxu0 0.0
    %2131 = vmatprep.subr.mxu0 0.0
    %2132 = vmatpush1.msra.mxu0 0.0
    %2133 = vmatprep.mubr.f32.mxu0 0.0
    %2134 = vmatmul.mubr.f32.gmra.mrb[0].mxu0 %v1944
    %v2135 = vpop.f32.mrb[0].mxu0
    %v2136 = vadd.f32 %v2067, %v2135
    %v2137 = vpop.f32.mrb[0].mxu0
    %2138 = vmatprep.mubr.f32.mxu0 0.0
    %2139 = vmatmul.mubr.f32.gmra.mrb[0].mxu0 %v1947
    %v2140 = vpop.f32.mrb[0].mxu0
    %v2141 = vadd.f32 %v2067, %v2140
    %v2142 = vpop.f32.mrb[0].mxu0
    %2143 = vmatprep.mubr.f32.mxu0 0.0
    %2144 = vmatmul.mubr.f32.gmra.mrb[0].mxu0 %v1950
    %v2145 = vpop.f32.mrb[0].mxu0
    %v2146 = vadd.f32 %v2067, %v2145
    %v2147 = vpop.f32.mrb[0].mxu0
    %2148 = vmatprep.mubr.f32.mxu0 0.0
    %2149 = vmatmul.mubr.f32.gmra.mrb[0].mxu0 %v1953
    %v2150 = vpop.f32.mrb[0].mxu0
    %v2151 = vadd.f32 %v2067, %v2150
    %v2152 = vpop.f32.mrb[0].mxu0
    %2153 = vmatprep.mubr.f32.mxu0 0.0
    %2154 = vmatmul.mubr.f32.gmra.mrb[0].mxu0 %v1956
    %v2155 = vpop.f32.mrb[0].mxu0
    %v2156 = vadd.f32 %v2067, %v2155
    %v2157 = vpop.f32.mrb[0].mxu0
    %2158 = vmatprep.mubr.f32.mxu0 0.0
    %2159 = vmatmul.mubr.f32.gmra.mrb[0].mxu0 %v1959
    %v2160 = vpop.f32.mrb[0].mxu0
    %v2161 = vadd.f32 %v2067, %v2160
    %v2162 = vpop.f32.mrb[0].mxu0
    %2163 = vdwg.mxu0
    %s2164 = scalar_lea.vmem %s8, 192
    %v2165 = vld [vmem:[%s2164] sm:$0xff]
    %v2166 = vld [vmem:[%s2164 + $0x8] sm:$0xff]
    %v2167 = vld [vmem:[%s2164 + $0x10] sm:$0xff]
    %v2168 = vld [vmem:[%s2164 + $0x18] sm:$0xff]
    %s2169 = scalar_lea.vmem %s9, 7
    %v2170 = vld [vmem:[%s2169] sm:$0x1]
    %v2172 = vlaneseq
    %v2173 = vshrl.u32 %v2172, 7
    %v2174 = vsub.s32 0, %v2173
    %v2175 = vrot.slane %v2170, %v2174
    %2177 = vmatprep.subr.mxu0 0.0
    %2178 = vmatpush1.msra.mxu0 %v2165
    %2179 = vmatprep.subr.mxu0 0.0
    %2180 = vmatpush1.msra.mxu0 %v2166
    %2181 = vmatprep.subr.mxu0 0.0
    %2182 = vmatpush1.msra.mxu0 %v2167
    %2183 = vmatprep.subr.mxu0 0.0
    %2184 = vmatpush1.msra.mxu0 %v2168
    %2185 = vmatprep.subr.mxu0 0.0
    %2186 = vmatpush1.msra.mxu0 0.0
    %2187 = vmatprep.subr.mxu0 0.0
    %2188 = vmatpush1.msra.mxu0 0.0
    %2189 = vmatprep.subr.mxu0 0.0
    %2190 = vmatpush1.msra.mxu0 0.0
    %2191 = vmatprep.subr.mxu0 0.0
    %2192 = vmatpush1.msra.mxu0 0.0
    %2193 = vmatprep.subr.mxu0 0.0
    %2194 = vmatpush1.msra.mxu0 0.0
    %2195 = vmatprep.subr.mxu0 0.0
    %2196 = vmatpush1.msra.mxu0 0.0
    %2197 = vmatprep.subr.mxu0 0.0
    %2198 = vmatpush1.msra.mxu0 0.0
    %2199 = vmatprep.subr.mxu0 0.0
    %2200 = vmatpush1.msra.mxu0 0.0
    %2201 = vmatprep.subr.mxu0 0.0
    %2202 = vmatpush1.msra.mxu0 0.0
    %2203 = vmatprep.subr.mxu0 0.0
    %2204 = vmatpush1.msra.mxu0 0.0
    %2205 = vmatprep.subr.mxu0 0.0
    %2206 = vmatpush1.msra.mxu0 0.0
    %2207 = vmatprep.subr.mxu0 0.0
    %2208 = vmatpush1.msra.mxu0 0.0
    %2209 = vmatprep.subr.mxu0 0.0
    %2210 = vmatpush1.msra.mxu0 0.0
    %2211 = vmatprep.subr.mxu0 0.0
    %2212 = vmatpush1.msra.mxu0 0.0
    %2213 = vmatprep.subr.mxu0 0.0
    %2214 = vmatpush1.msra.mxu0 0.0
    %2215 = vmatprep.subr.mxu0 0.0
    %2216 = vmatpush1.msra.mxu0 0.0
    %2217 = vmatprep.subr.mxu0 0.0
    %2218 = vmatpush1.msra.mxu0 0.0
    %2219 = vmatprep.subr.mxu0 0.0
    %2220 = vmatpush1.msra.mxu0 0.0
    %2221 = vmatprep.subr.mxu0 0.0
    %2222 = vmatpush1.msra.mxu0 0.0
    %2223 = vmatprep.subr.mxu0 0.0
    %2224 = vmatpush1.msra.mxu0 0.0
    %2225 = vmatprep.subr.mxu0 0.0
    %2226 = vmatpush1.msra.mxu0 0.0
    %2227 = vmatprep.subr.mxu0 0.0
    %2228 = vmatpush1.msra.mxu0 0.0
    %2229 = vmatprep.subr.mxu0 0.0
    %2230 = vmatpush1.msra.mxu0 0.0
    %2231 = vmatprep.subr.mxu0 0.0
    %2232 = vmatpush1.msra.mxu0 0.0
    %2233 = vmatprep.subr.mxu0 0.0
    %2234 = vmatpush1.msra.mxu0 0.0
    %2235 = vmatprep.subr.mxu0 0.0
    %2236 = vmatpush1.msra.mxu0 0.0
    %2237 = vmatprep.subr.mxu0 0.0
    %2238 = vmatpush1.msra.mxu0 0.0
    %2239 = vmatprep.subr.mxu0 0.0
    %2240 = vmatpush1.msra.mxu0 0.0
    %2241 = vmatprep.mubr.f32.mxu0 0.0
    %2242 = vmatmul.mubr.f32.gmra.mrb[0].mxu0 %v1944
    %v2243 = vpop.f32.mrb[0].mxu0
    %v2244 = vadd.f32 %v2175, %v2243
    %v2245 = vpop.f32.mrb[0].mxu0
    %2246 = vmatprep.mubr.f32.mxu0 0.0
    %2247 = vmatmul.mubr.f32.gmra.mrb[0].mxu0 %v1947
    %v2248 = vpop.f32.mrb[0].mxu0
    %v2249 = vadd.f32 %v2175, %v2248
    %v2250 = vpop.f32.mrb[0].mxu0
    %2251 = vmatprep.mubr.f32.mxu0 0.0
    %2252 = vmatmul.mubr.f32.gmra.mrb[0].mxu0 %v1950
    %v2253 = vpop.f32.mrb[0].mxu0
    %v2254 = vadd.f32 %v2175, %v2253
    %v2255 = vpop.f32.mrb[0].mxu0
    %2256 = vmatprep.mubr.f32.mxu0 0.0
    %2257 = vmatmul.mubr.f32.gmra.mrb[0].mxu0 %v1953
    %v2258 = vpop.f32.mrb[0].mxu0
    %v2259 = vadd.f32 %v2175, %v2258
    %v2260 = vpop.f32.mrb[0].mxu0
    %2261 = vmatprep.mubr.f32.mxu0 0.0
    %2262 = vmatmul.mubr.f32.gmra.mrb[0].mxu0 %v1956
    %v2263 = vpop.f32.mrb[0].mxu0
    %v2264 = vadd.f32 %v2175, %v2263
    %v2265 = vpop.f32.mrb[0].mxu0
    %2266 = vmatprep.mubr.f32.mxu0 0.0
    %2267 = vmatmul.mubr.f32.gmra.mrb[0].mxu0 %v1959
    %v2268 = vpop.f32.mrb[0].mxu0
    %v2269 = vadd.f32 %v2175, %v2268
    %v2270 = vpop.f32.mrb[0].mxu0
    %2271 = vdwg.mxu0
    %v2272 = vmul.f32 %v2136, %v51
    %v2273 = vmul.f32 %v2141, %v52
    %v2274 = vmul.f32 %v2146, %v53
    %v2275 = vmul.f32 %v2151, %v54
    %v2276 = vmul.f32 %v2156, %v55
    %v2277 = vmul.f32 %v2161, %v56
    %v2278 = vmul.f32 %v2136, %v57
    %v2279 = vmul.f32 %v2141, %v58
    %v2280 = vmul.f32 %v2146, %v59
    %v2281 = vmul.f32 %v2151, %v60
    %v2282 = vmul.f32 %v2156, %v61
    %v2283 = vmul.f32 %v2161, %v62
    %v2284 = vmul.f32 %v2136, %v63
    %v2285 = vmul.f32 %v2141, %v64
    %v2286 = vmul.f32 %v2146, %v65
    %v2287 = vmul.f32 %v2151, %v66
    %v2288 = vmul.f32 %v2156, %v67
    %v2289 = vmul.f32 %v2161, %v68
    %v2290 = vmul.f32 %v2136, %v69
    %v2291 = vmul.f32 %v2141, %v70
    %v2292 = vmul.f32 %v2146, %v71
    %v2293 = vmul.f32 %v2151, %v72
    %v2294 = vmul.f32 %v2156, %v73
    %v2295 = vmul.f32 %v2161, %v74
    %v2296 = vmul.f32 %v2244, %v51
    %v2297 = vmul.f32 %v2249, %v52
    %v2298 = vmul.f32 %v2254, %v53
    %v2299 = vmul.f32 %v2259, %v54
    %v2300 = vmul.f32 %v2264, %v55
    %v2301 = vmul.f32 %v2269, %v56
    %v2302 = vmul.f32 %v2244, %v57
    %v2303 = vmul.f32 %v2249, %v58
    %v2304 = vmul.f32 %v2254, %v59
    %v2305 = vmul.f32 %v2259, %v60
    %v2306 = vmul.f32 %v2264, %v61
    %v2307 = vmul.f32 %v2269, %v62
    %v2308 = vmul.f32 %v2244, %v63
    %v2309 = vmul.f32 %v2249, %v64
    %v2310 = vmul.f32 %v2254, %v65
    %v2311 = vmul.f32 %v2259, %v66
    %v2312 = vmul.f32 %v2264, %v67
    %v2313 = vmul.f32 %v2269, %v68
    %v2314 = vmul.f32 %v2244, %v69
    %v2315 = vmul.f32 %v2249, %v70
    %v2316 = vmul.f32 %v2254, %v71
    %v2317 = vmul.f32 %v2259, %v72
    %v2318 = vmul.f32 %v2264, %v73
    %v2319 = vmul.f32 %v2269, %v74
    %v2321 = vsel %vm272, %v2028, 0
    %v2324 = vsel %vm272, %v2033, 0
    %v2327 = vsel %vm272, %v2038, 0
    %v2330 = vsel %vm272, %v2043, 0
    %v2333 = vsel %vm272, %v2048, 0
    %v2336 = vsel %vm272, %v2053, 0
    %v2339 = vsel %vm272, %v2272, 0
    %v2342 = vsel %vm272, %v2273, 0
    %v2345 = vsel %vm272, %v2274, 0
    %v2348 = vsel %vm272, %v2275, 0
    %v2351 = vsel %vm272, %v2276, 0
    %v2354 = vsel %vm272, %v2277, 0
    %v2357 = vsel %vm272, %v2278, 0
    %v2360 = vsel %vm272, %v2279, 0
    %v2363 = vsel %vm272, %v2280, 0
    %v2366 = vsel %vm272, %v2281, 0
    %v2369 = vsel %vm272, %v2282, 0
    %v2372 = vsel %vm272, %v2283, 0
    %v2375 = vsel %vm272, %v2284, 0
    %v2378 = vsel %vm272, %v2285, 0
    %v2381 = vsel %vm272, %v2286, 0
    %v2384 = vsel %vm272, %v2287, 0
    %v2387 = vsel %vm272, %v2288, 0
    %v2390 = vsel %vm272, %v2289, 0
    %v2393 = vsel %vm272, %v2290, 0
    %v2396 = vsel %vm272, %v2291, 0
    %v2399 = vsel %vm272, %v2292, 0
    %v2402 = vsel %vm272, %v2293, 0
    %v2405 = vsel %vm272, %v2294, 0
    %v2408 = vsel %vm272, %v2295, 0
    %2410 = vmatprep.subr.mxu0 0.0
    %2411 = vmatpush1.xpose.msra.mxu0 %v2339
    %2412 = vmatprep.subr.mxu0 0.0
    %2413 = vmatpush1.xpose.msra.mxu0 %v2342
    %2414 = vmatprep.subr.mxu0 0.0
    %2415 = vmatpush1.xpose.msra.mxu0 %v2345
    %2416 = vmatprep.subr.mxu0 0.0
    %2417 = vmatpush1.xpose.msra.mxu0 %v2348
    %2418 = vmatprep.subr.mxu0 0.0
    %2419 = vmatpush1.xpose.msra.mxu0 %v2351
    %2420 = vmatprep.subr.mxu0 0.0
    %2421 = vmatpush1.xpose.msra.mxu0 %v2354
    %2422 = vmatprep.subr.mxu0 0.0
    %2423 = vmatpush1.xpose.msra.mxu0 %v2357
    %2424 = vmatprep.subr.mxu0 0.0
    %2425 = vmatpush1.xpose.msra.mxu0 %v2360
    %2426 = vmatprep.subr.mxu0 0.0
    %2427 = vmatpush1.xpose.msra.mxu0 %v2363
    %2428 = vmatprep.subr.mxu0 0.0
    %2429 = vmatpush1.xpose.msra.mxu0 %v2366
    %2430 = vmatprep.subr.mxu0 0.0
    %2431 = vmatpush1.xpose.msra.mxu0 %v2369
    %2432 = vmatprep.subr.mxu0 0.0
    %2433 = vmatpush1.xpose.msra.mxu0 %v2372
    %2434 = vmatprep.subr.mxu0 0.0
    %2435 = vmatpush1.xpose.msra.mxu0 %v2375
    %2436 = vmatprep.subr.mxu0 0.0
    %2437 = vmatpush1.xpose.msra.mxu0 %v2378
    %2438 = vmatprep.subr.mxu0 0.0
    %2439 = vmatpush1.xpose.msra.mxu0 %v2381
    %2440 = vmatprep.subr.mxu0 0.0
    %2441 = vmatpush1.xpose.msra.mxu0 %v2384
    %2442 = vmatprep.subr.mxu0 0.0
    %2443 = vmatpush1.xpose.msra.mxu0 %v2387
    %2444 = vmatprep.subr.mxu0 0.0
    %2445 = vmatpush1.xpose.msra.mxu0 %v2390
    %2446 = vmatprep.subr.mxu0 0.0
    %2447 = vmatpush1.xpose.msra.mxu0 %v2393
    %2448 = vmatprep.subr.mxu0 0.0
    %2449 = vmatpush1.xpose.msra.mxu0 %v2396
    %2450 = vmatprep.subr.mxu0 0.0
    %2451 = vmatpush1.xpose.msra.mxu0 %v2399
    %2452 = vmatprep.subr.mxu0 0.0
    %2453 = vmatpush1.xpose.msra.mxu0 %v2402
    %2454 = vmatprep.subr.mxu0 0.0
    %2455 = vmatpush1.xpose.msra.mxu0 %v2405
    %2456 = vmatprep.subr.mxu0 0.0
    %2457 = vmatpush1.xpose.msra.mxu0 %v2408
    %2458 = vmatprep.subr.mxu0 0.0
    %2459 = vmatpush1.xpose.msra.mxu0 0.0
    %2460 = vmatprep.subr.mxu0 0.0
    %2461 = vmatpush1.xpose.msra.mxu0 0.0
    %2462 = vmatprep.subr.mxu0 0.0
    %2463 = vmatpush1.xpose.msra.mxu0 0.0
    %2464 = vmatprep.subr.mxu0 0.0
    %2465 = vmatpush1.xpose.msra.mxu0 0.0
    %2466 = vmatprep.subr.mxu0 0.0
    %2467 = vmatpush1.xpose.msra.mxu0 0.0
    %2468 = vmatprep.subr.mxu0 0.0
    %2469 = vmatpush1.xpose.msra.mxu0 0.0
    %2470 = vmatprep.subr.mxu0 0.0
    %2471 = vmatpush1.xpose.msra.mxu0 0.0
    %2472 = vmatprep.subr.mxu0 0.0
    %2473 = vmatpush1.xpose.msra.mxu0 0.0
    %2474 = vmatprep.mubr.f32.mxu0 0.0
    %2475 = vmatmul.mubr.f32.gmra.mrb[0].mxu0 %v2321
    %v2476 = vpop.f32.mrb[0].mxu0
    %v2477 = vadd.f32 %v75, %v2476
    %v2478 = vpop.f32.mrb[0].mxu0
    %v2479 = vadd.f32 %v76, %v2478
    %2480 = vmatprep.mubr.f32.mxu0 0.0
    %2481 = vmatmul.mubr.f32.gmra.mrb[0].mxu0 %v2324
    %v2482 = vpop.f32.mrb[0].mxu0
    %v2483 = vadd.f32 %v77, %v2482
    %v2484 = vpop.f32.mrb[0].mxu0
    %v2485 = vadd.f32 %v78, %v2484
    %2486 = vmatprep.mubr.f32.mxu0 0.0
    %2487 = vmatmul.mubr.f32.gmra.mrb[0].mxu0 %v2327
    %v2488 = vpop.f32.mrb[0].mxu0
    %v2489 = vadd.f32 %v79, %v2488
    %v2490 = vpop.f32.mrb[0].mxu0
    %v2491 = vadd.f32 %v80, %v2490
    %2492 = vmatprep.mubr.f32.mxu0 0.0
    %2493 = vmatmul.mubr.f32.gmra.mrb[0].mxu0 %v2330
    %v2494 = vpop.f32.mrb[0].mxu0
    %v2495 = vadd.f32 %v81, %v2494
    %v2496 = vpop.f32.mrb[0].mxu0
    %v2497 = vadd.f32 %v82, %v2496
    %2498 = vmatprep.mubr.f32.mxu0 0.0
    %2499 = vmatmul.mubr.f32.gmra.mrb[0].mxu0 %v2333
    %v2500 = vpop.f32.mrb[0].mxu0
    %v2501 = vadd.f32 %v83, %v2500
    %v2502 = vpop.f32.mrb[0].mxu0
    %v2503 = vadd.f32 %v84, %v2502
    %2504 = vmatprep.mubr.f32.mxu0 0.0
    %2505 = vmatmul.mubr.f32.gmra.mrb[0].mxu0 %v2336
    %v2506 = vpop.f32.mrb[0].mxu0
    %v2507 = vadd.f32 %v85, %v2506
    %v2508 = vpop.f32.mrb[0].mxu0
    %v2509 = vadd.f32 %v86, %v2508
    %2510 = vdwg.mxu0
    %v2511 = vsel %vm155, %v2479, -inf
    %v2512 = vmax.f32 %v2477, %v2511
    %2513 = vmax.xlane.f32.xlu0 %v2512
    %v2514 = vpop.xlane.xlu0 %2513
    %v2515 = vsel %vm155, %v2485, -inf
    %v2516 = vmax.f32 %v2483, %v2515
    %2517 = vmax.xlane.f32.xlu0 %v2516
    %v2518 = vpop.xlane.xlu0 %2517
    %v2519 = vsel %vm155, %v2491, -inf
    %v2520 = vmax.f32 %v2489, %v2519
    %2521 = vmax.xlane.f32.xlu0 %v2520
    %v2522 = vpop.xlane.xlu0 %2521
    %v2523 = vsel %vm155, %v2497, -inf
    %v2524 = vmax.f32 %v2495, %v2523
    %2525 = vmax.xlane.f32.xlu0 %v2524
    %v2526 = vpop.xlane.xlu0 %2525
    %v2527 = vsel %vm155, %v2503, -inf
    %v2528 = vmax.f32 %v2501, %v2527
    %2529 = vmax.xlane.f32.xlu0 %v2528
    %v2530 = vpop.xlane.xlu0 %2529
    %v2531 = vsel %vm155, %v2509, -inf
    %v2532 = vmax.f32 %v2507, %v2531
    %2533 = vmax.xlane.f32.xlu0 %v2532
    %v2534 = vpop.xlane.xlu0 %2533
    %v2535 = vsub.f32 %v2477, %v2514
    %v2536 = vsub.f32 %v2479, %v2514
    %v2537 = vsub.f32 %v2483, %v2518
    %v2538 = vsub.f32 %v2485, %v2518
    %v2539 = vsub.f32 %v2489, %v2522
    %v2540 = vsub.f32 %v2491, %v2522
    %v2541 = vsub.f32 %v2495, %v2526
    %v2542 = vsub.f32 %v2497, %v2526
    %v2543 = vsub.f32 %v2501, %v2530
    %v2544 = vsub.f32 %v2503, %v2530
    %v2545 = vsub.f32 %v2507, %v2534
    %v2546 = vsub.f32 %v2509, %v2534
    %v2547 = vmul.f32 %v2535, 1.442695
    %v2548 = vpow.pop %v2547
    %v2549 = vmul.f32 %v2536, 1.442695
    %v2550 = vpow.pop %v2549
    %v2551 = vmul.f32 %v2537, 1.442695
    %v2552 = vpow.pop %v2551
    %v2553 = vmul.f32 %v2538, 1.442695
    %v2554 = vpow.pop %v2553
    %v2555 = vmul.f32 %v2539, 1.442695
    %v2556 = vpow.pop %v2555
    %v2557 = vmul.f32 %v2540, 1.442695
    %v2558 = vpow.pop %v2557
    %v2559 = vmul.f32 %v2541, 1.442695
    %v2560 = vpow.pop %v2559
    %v2561 = vmul.f32 %v2542, 1.442695
    %v2562 = vpow.pop %v2561
    %v2563 = vmul.f32 %v2543, 1.442695
    %v2564 = vpow.pop %v2563
    %v2565 = vmul.f32 %v2544, 1.442695
    %v2566 = vpow.pop %v2565
    %v2567 = vmul.f32 %v2545, 1.442695
    %v2568 = vpow.pop %v2567
    %v2569 = vmul.f32 %v2546, 1.442695
    %v2570 = vpow.pop %v2569
    %v2572 = vsel %vm155, %v2550, 0
    %v2575 = vsel %vm155, %v2554, 0
    %v2578 = vsel %vm155, %v2558, 0
    %v2581 = vsel %vm155, %v2562, 0
    %v2584 = vsel %vm155, %v2566, 0
    %v2587 = vsel %vm155, %v2570, 0
    %2589 = vmatprep.subr.mxu0 %v88
    %2590 = vmatpush1.msra.mxu0 %v87
    %2591 = vmatprep.subr.mxu0 %v90
    %2592 = vmatpush1.msra.mxu0 %v89
    %2593 = vmatprep.subr.mxu0 %v92
    %2594 = vmatpush1.msra.mxu0 %v91
    %2595 = vmatprep.subr.mxu0 %v94
    %2596 = vmatpush1.msra.mxu0 %v93
    %2597 = vmatprep.subr.mxu0 %v96
    %2598 = vmatpush1.msra.mxu0 %v95
    %2599 = vmatprep.subr.mxu0 %v98
    %2600 = vmatpush1.msra.mxu0 %v97
    %2601 = vmatprep.subr.mxu0 %v100
    %2602 = vmatpush1.msra.mxu0 %v99
    %2603 = vmatprep.subr.mxu0 %v102
    %2604 = vmatpush1.msra.mxu0 %v101
    %2605 = vmatprep.subr.mxu0 %v104
    %2606 = vmatpush1.msra.mxu0 %v103
    %2607 = vmatprep.subr.mxu0 %v106
    %2608 = vmatpush1.msra.mxu0 %v105
    %2609 = vmatprep.subr.mxu0 %v108
    %2610 = vmatpush1.msra.mxu0 %v107
    %2611 = vmatprep.subr.mxu0 %v110
    %2612 = vmatpush1.msra.mxu0 %v109
    %2613 = vmatprep.subr.mxu0 %v112
    %2614 = vmatpush1.msra.mxu0 %v111
    %2615 = vmatprep.subr.mxu0 %v114
    %2616 = vmatpush1.msra.mxu0 %v113
    %2617 = vmatprep.subr.mxu0 %v116
    %2618 = vmatpush1.msra.mxu0 %v115
    %2619 = vmatprep.subr.mxu0 %v118
    %2620 = vmatpush1.msra.mxu0 %v117
    %2621 = vmatprep.subr.mxu0 %v120
    %2622 = vmatpush1.msra.mxu0 %v119
    %2623 = vmatprep.subr.mxu0 %v122
    %2624 = vmatpush1.msra.mxu0 %v121
    %2625 = vmatprep.subr.mxu0 %v124
    %2626 = vmatpush1.msra.mxu0 %v123
    %2627 = vmatprep.subr.mxu0 %v126
    %2628 = vmatpush1.msra.mxu0 %v125
    %2629 = vmatprep.subr.mxu0 %v128
    %2630 = vmatpush1.msra.mxu0 %v127
    %2631 = vmatprep.subr.mxu0 %v130
    %2632 = vmatpush1.msra.mxu0 %v129
    %2633 = vmatprep.subr.mxu0 %v132
    %2634 = vmatpush1.msra.mxu0 %v131
    %2635 = vmatprep.subr.mxu0 %v134
    %2636 = vmatpush1.msra.mxu0 %v133
    %2637 = vmatprep.subr.mxu0 0.0
    %2638 = vmatpush1.msra.mxu0 0.0
    %2639 = vmatprep.subr.mxu0 0.0
    %2640 = vmatpush1.msra.mxu0 0.0
    %2641 = vmatprep.subr.mxu0 0.0
    %2642 = vmatpush1.msra.mxu0 0.0
    %2643 = vmatprep.subr.mxu0 0.0
    %2644 = vmatpush1.msra.mxu0 0.0
    %2645 = vmatprep.subr.mxu0 0.0
    %2646 = vmatpush1.msra.mxu0 0.0
    %2647 = vmatprep.subr.mxu0 0.0
    %2648 = vmatpush1.msra.mxu0 0.0
    %2649 = vmatprep.subr.mxu0 0.0
    %2650 = vmatpush1.msra.mxu0 0.0
    %2651 = vmatprep.subr.mxu0 0.0
    %2652 = vmatpush1.msra.mxu0 0.0
    %2653 = vmatprep.mubr.f32.mxu0 %v2572
    %2654 = vmatmul.mubr.f32.gmra.mrb[0].mxu0 %v2548
    %v2655 = vpop.f32.mrb[0].mxu0
    %v2656 = vadd.f32 0.0, %v2655
    %v2657 = vpop.f32.mrb[0].mxu0
    %v2658 = vadd.f32 0.0, %v2657
    %2659 = vmatprep.mubr.f32.mxu0 %v2575
    %2660 = vmatmul.mubr.f32.gmra.mrb[0].mxu0 %v2552
    %v2661 = vpop.f32.mrb[0].mxu0
    %v2662 = vadd.f32 0.0, %v2661
    %v2663 = vpop.f32.mrb[0].mxu0
    %v2664 = vadd.f32 0.0, %v2663
    %2665 = vmatprep.mubr.f32.mxu0 %v2578
    %2666 = vmatmul.mubr.f32.gmra.mrb[0].mxu0 %v2556
    %v2667 = vpop.f32.mrb[0].mxu0
    %v2668 = vadd.f32 0.0, %v2667
    %v2669 = vpop.f32.mrb[0].mxu0
    %v2670 = vadd.f32 0.0, %v2669
    %2671 = vmatprep.mubr.f32.mxu0 %v2581
    %2672 = vmatmul.mubr.f32.gmra.mrb[0].mxu0 %v2560
    %v2673 = vpop.f32.mrb[0].mxu0
    %v2674 = vadd.f32 0.0, %v2673
    %v2675 = vpop.f32.mrb[0].mxu0
    %v2676 = vadd.f32 0.0, %v2675
    %2677 = vmatprep.mubr.f32.mxu0 %v2584
    %2678 = vmatmul.mubr.f32.gmra.mrb[0].mxu0 %v2564
    %v2679 = vpop.f32.mrb[0].mxu0
    %v2680 = vadd.f32 0.0, %v2679
    %v2681 = vpop.f32.mrb[0].mxu0
    %v2682 = vadd.f32 0.0, %v2681
    %2683 = vmatprep.mubr.f32.mxu0 %v2587
    %2684 = vmatmul.mubr.f32.gmra.mrb[0].mxu0 %v2568
    %v2685 = vpop.f32.mrb[0].mxu0
    %v2686 = vadd.f32 0.0, %v2685
    %v2687 = vpop.f32.mrb[0].mxu0
    %v2688 = vadd.f32 0.0, %v2687
    %2689 = vdwg.mxu0
    %v2690 = vrcp.pop %v2656
    %v2691 = vrcp.pop %v2658
    %v2692 = vrcp.pop %v2662
    %v2693 = vrcp.pop %v2664
    %v2694 = vrcp.pop %v2668
    %v2695 = vrcp.pop %v2670
    %v2696 = vrcp.pop %v2674
    %v2697 = vrcp.pop %v2676
    %v2698 = vrcp.pop %v2680
    %v2699 = vrcp.pop %v2682
    %v2700 = vrcp.pop %v2686
    %v2701 = vrcp.pop %v2688
    %v2702 = vmul.f32 %v2548, %v2690
    %v2703 = vmul.f32 %v2550, %v2691
    %v2704 = vmul.f32 %v2552, %v2692
    %v2705 = vmul.f32 %v2554, %v2693
    %v2706 = vmul.f32 %v2556, %v2694
    %v2707 = vmul.f32 %v2558, %v2695
    %v2708 = vmul.f32 %v2560, %v2696
    %v2709 = vmul.f32 %v2562, %v2697
    %v2710 = vmul.f32 %v2564, %v2698
    %v2711 = vmul.f32 %v2566, %v2699
    %v2712 = vmul.f32 %v2568, %v2700
    %v2713 = vmul.f32 %v2570, %v2701
    %v2715 = vsel %vm155, %v2703, 0
    %v2718 = vsel %vm155, %v2705, 0
    %v2721 = vsel %vm155, %v2707, 0
    %v2724 = vsel %vm155, %v2709, 0
    %v2727 = vsel %vm155, %v2711, 0
    %v2730 = vsel %vm155, %v2713, 0
    %2732 = vmatprep.subr.mxu0 0.0
    %2733 = vmatpush1.msra.mxu0 %v2296
    %2734 = vmatprep.subr.mxu0 0.0
    %2735 = vmatpush1.msra.mxu0 %v2297
    %2736 = vmatprep.subr.mxu0 0.0
    %2737 = vmatpush1.msra.mxu0 %v2298
    %2738 = vmatprep.subr.mxu0 0.0
    %2739 = vmatpush1.msra.mxu0 %v2299
    %2740 = vmatprep.subr.mxu0 0.0
    %2741 = vmatpush1.msra.mxu0 %v2300
    %2742 = vmatprep.subr.mxu0 0.0
    %2743 = vmatpush1.msra.mxu0 %v2301
    %2744 = vmatprep.subr.mxu0 0.0
    %2745 = vmatpush1.msra.mxu0 %v2302
    %2746 = vmatprep.subr.mxu0 0.0
    %2747 = vmatpush1.msra.mxu0 %v2303
    %2748 = vmatprep.subr.mxu0 0.0
    %2749 = vmatpush1.msra.mxu0 %v2304
    %2750 = vmatprep.subr.mxu0 0.0
    %2751 = vmatpush1.msra.mxu0 %v2305
    %2752 = vmatprep.subr.mxu0 0.0
    %2753 = vmatpush1.msra.mxu0 %v2306
    %2754 = vmatprep.subr.mxu0 0.0
    %2755 = vmatpush1.msra.mxu0 %v2307
    %2756 = vmatprep.subr.mxu0 0.0
    %2757 = vmatpush1.msra.mxu0 %v2308
    %2758 = vmatprep.subr.mxu0 0.0
    %2759 = vmatpush1.msra.mxu0 %v2309
    %2760 = vmatprep.subr.mxu0 0.0
    %2761 = vmatpush1.msra.mxu0 %v2310
    %2762 = vmatprep.subr.mxu0 0.0
    %2763 = vmatpush1.msra.mxu0 %v2311
    %2764 = vmatprep.subr.mxu0 0.0
    %2765 = vmatpush1.msra.mxu0 %v2312
    %2766 = vmatprep.subr.mxu0 0.0
    %2767 = vmatpush1.msra.mxu0 %v2313
    %2768 = vmatprep.subr.mxu0 0.0
    %2769 = vmatpush1.msra.mxu0 %v2314
    %2770 = vmatprep.subr.mxu0 0.0
    %2771 = vmatpush1.msra.mxu0 %v2315
    %2772 = vmatprep.subr.mxu0 0.0
    %2773 = vmatpush1.msra.mxu0 %v2316
    %2774 = vmatprep.subr.mxu0 0.0
    %2775 = vmatpush1.msra.mxu0 %v2317
    %2776 = vmatprep.subr.mxu0 0.0
    %2777 = vmatpush1.msra.mxu0 %v2318
    %2778 = vmatprep.subr.mxu0 0.0
    %2779 = vmatpush1.msra.mxu0 %v2319
    %2780 = vmatprep.subr.mxu0 0.0
    %2781 = vmatpush1.msra.mxu0 0.0
    %2782 = vmatprep.subr.mxu0 0.0
    %2783 = vmatpush1.msra.mxu0 0.0
    %2784 = vmatprep.subr.mxu0 0.0
    %2785 = vmatpush1.msra.mxu0 0.0
    %2786 = vmatprep.subr.mxu0 0.0
    %2787 = vmatpush1.msra.mxu0 0.0
    %2788 = vmatprep.subr.mxu0 0.0
    %2789 = vmatpush1.msra.mxu0 0.0
    %2790 = vmatprep.subr.mxu0 0.0
    %2791 = vmatpush1.msra.mxu0 0.0
    %2792 = vmatprep.subr.mxu0 0.0
    %2793 = vmatpush1.msra.mxu0 0.0
    %2794 = vmatprep.subr.mxu0 0.0
    %2795 = vmatpush1.msra.mxu0 0.0
    %2796 = vmatprep.mubr.f32.mxu0 %v2715
    %2797 = vmatmul.mubr.f32.gmra.mrb[0].mxu0 %v2702
    %v2798 = vpop.f32.mrb[0].mxu0
    %v2799 = vadd.f32 0.0, %v2798
    %v2800 = vpop.f32.mrb[0].mxu0
    %2801 = vmatprep.mubr.f32.mxu0 %v2718
    %2802 = vmatmul.mubr.f32.gmra.mrb[0].mxu0 %v2704
    %v2803 = vpop.f32.mrb[0].mxu0
    %v2804 = vadd.f32 0.0, %v2803
    %v2805 = vpop.f32.mrb[0].mxu0
    %2806 = vmatprep.mubr.f32.mxu0 %v2721
    %2807 = vmatmul.mubr.f32.gmra.mrb[0].mxu0 %v2706
    %v2808 = vpop.f32.mrb[0].mxu0
    %v2809 = vadd.f32 0.0, %v2808
    %v2810 = vpop.f32.mrb[0].mxu0
    %2811 = vmatprep.mubr.f32.mxu0 %v2724
    %2812 = vmatmul.mubr.f32.gmra.mrb[0].mxu0 %v2708
    %v2813 = vpop.f32.mrb[0].mxu0
    %v2814 = vadd.f32 0.0, %v2813
    %v2815 = vpop.f32.mrb[0].mxu0
    %2816 = vmatprep.mubr.f32.mxu0 %v2727
    %2817 = vmatmul.mubr.f32.gmra.mrb[0].mxu0 %v2710
    %v2818 = vpop.f32.mrb[0].mxu0
    %v2819 = vadd.f32 0.0, %v2818
    %v2820 = vpop.f32.mrb[0].mxu0
    %2821 = vmatprep.mubr.f32.mxu0 %v2730
    %2822 = vmatmul.mubr.f32.gmra.mrb[0].mxu0 %v2712
    %v2823 = vpop.f32.mrb[0].mxu0
    %v2824 = vadd.f32 0.0, %v2823
    %v2825 = vpop.f32.mrb[0].mxu0
    %2826 = vdwg.mxu0
    %s2827 = scalar_lea.vmem %s8, 224
    %v2828 = vld [vmem:[%s2827] sm:$0xff]
    %v2829 = vld [vmem:[%s2827 + $0x8] sm:$0xff]
    %v2830 = vld [vmem:[%s2827 + $0x10] sm:$0xff]
    %v2831 = vld [vmem:[%s2827 + $0x18] sm:$0xff]
    %v2833 = vsel %vm272, %v2799, 0
    %v2836 = vsel %vm272, %v2804, 0
    %v2839 = vsel %vm272, %v2809, 0
    %v2842 = vsel %vm272, %v2814, 0
    %v2845 = vsel %vm272, %v2819, 0
    %v2848 = vsel %vm272, %v2824, 0
    %2850 = vmatprep.subr.mxu0 0.0
    %2851 = vmatpush1.msra.mxu0 %v2828
    %2852 = vmatprep.subr.mxu0 0.0
    %2853 = vmatpush1.msra.mxu0 %v2829
    %2854 = vmatprep.subr.mxu0 0.0
    %2855 = vmatpush1.msra.mxu0 %v2830
    %2856 = vmatprep.subr.mxu0 0.0
    %2857 = vmatpush1.msra.mxu0 %v2831
    %2858 = vmatprep.subr.mxu0 0.0
    %2859 = vmatpush1.msra.mxu0 0.0
    %2860 = vmatprep.subr.mxu0 0.0
    %2861 = vmatpush1.msra.mxu0 0.0
    %2862 = vmatprep.subr.mxu0 0.0
    %2863 = vmatpush1.msra.mxu0 0.0
    %2864 = vmatprep.subr.mxu0 0.0
    %2865 = vmatpush1.msra.mxu0 0.0
    %2866 = vmatprep.subr.mxu0 0.0
    %2867 = vmatpush1.msra.mxu0 0.0
    %2868 = vmatprep.subr.mxu0 0.0
    %2869 = vmatpush1.msra.mxu0 0.0
    %2870 = vmatprep.subr.mxu0 0.0
    %2871 = vmatpush1.msra.mxu0 0.0
    %2872 = vmatprep.subr.mxu0 0.0
    %2873 = vmatpush1.msra.mxu0 0.0
    %2874 = vmatprep.subr.mxu0 0.0
    %2875 = vmatpush1.msra.mxu0 0.0
    %2876 = vmatprep.subr.mxu0 0.0
    %2877 = vmatpush1.msra.mxu0 0.0
    %2878 = vmatprep.subr.mxu0 0.0
    %2879 = vmatpush1.msra.mxu0 0.0
    %2880 = vmatprep.subr.mxu0 0.0
    %2881 = vmatpush1.msra.mxu0 0.0
    %2882 = vmatprep.subr.mxu0 0.0
    %2883 = vmatpush1.msra.mxu0 0.0
    %2884 = vmatprep.subr.mxu0 0.0
    %2885 = vmatpush1.msra.mxu0 0.0
    %2886 = vmatprep.subr.mxu0 0.0
    %2887 = vmatpush1.msra.mxu0 0.0
    %2888 = vmatprep.subr.mxu0 0.0
    %2889 = vmatpush1.msra.mxu0 0.0
    %2890 = vmatprep.subr.mxu0 0.0
    %2891 = vmatpush1.msra.mxu0 0.0
    %2892 = vmatprep.subr.mxu0 0.0
    %2893 = vmatpush1.msra.mxu0 0.0
    %2894 = vmatprep.subr.mxu0 0.0
    %2895 = vmatpush1.msra.mxu0 0.0
    %2896 = vmatprep.subr.mxu0 0.0
    %2897 = vmatpush1.msra.mxu0 0.0
    %2898 = vmatprep.subr.mxu0 0.0
    %2899 = vmatpush1.msra.mxu0 0.0
    %2900 = vmatprep.subr.mxu0 0.0
    %2901 = vmatpush1.msra.mxu0 0.0
    %2902 = vmatprep.subr.mxu0 0.0
    %2903 = vmatpush1.msra.mxu0 0.0
    %2904 = vmatprep.subr.mxu0 0.0
    %2905 = vmatpush1.msra.mxu0 0.0
    %2906 = vmatprep.subr.mxu0 0.0
    %2907 = vmatpush1.msra.mxu0 0.0
    %2908 = vmatprep.subr.mxu0 0.0
    %2909 = vmatpush1.msra.mxu0 0.0
    %2910 = vmatprep.subr.mxu0 0.0
    %2911 = vmatpush1.msra.mxu0 0.0
    %2912 = vmatprep.subr.mxu0 0.0
    %2913 = vmatpush1.msra.mxu0 0.0
    %2914 = vmatprep.mubr.f32.mxu0 0.0
    %2915 = vmatmul.mubr.f32.gmra.mrb[0].mxu0 %v2833
    %v2916 = vpop.f32.mrb[0].mxu0
    %v2917 = vadd.f32 0.0, %v2916
    %v2918 = vpop.f32.mrb[0].mxu0
    %2919 = vmatprep.mubr.f32.mxu0 0.0
    %2920 = vmatmul.mubr.f32.gmra.mrb[0].mxu0 %v2836
    %v2921 = vpop.f32.mrb[0].mxu0
    %v2922 = vadd.f32 0.0, %v2921
    %v2923 = vpop.f32.mrb[0].mxu0
    %2924 = vmatprep.mubr.f32.mxu0 0.0
    %2925 = vmatmul.mubr.f32.gmra.mrb[0].mxu0 %v2839
    %v2926 = vpop.f32.mrb[0].mxu0
    %v2927 = vadd.f32 0.0, %v2926
    %v2928 = vpop.f32.mrb[0].mxu0
    %2929 = vmatprep.mubr.f32.mxu0 0.0
    %2930 = vmatmul.mubr.f32.gmra.mrb[0].mxu0 %v2842
    %v2931 = vpop.f32.mrb[0].mxu0
    %v2932 = vadd.f32 0.0, %v2931
    %v2933 = vpop.f32.mrb[0].mxu0
    %2934 = vmatprep.mubr.f32.mxu0 0.0
    %2935 = vmatmul.mubr.f32.gmra.mrb[0].mxu0 %v2845
    %v2936 = vpop.f32.mrb[0].mxu0
    %v2937 = vadd.f32 0.0, %v2936
    %v2938 = vpop.f32.mrb[0].mxu0
    %2939 = vmatprep.mubr.f32.mxu0 0.0
    %2940 = vmatmul.mubr.f32.gmra.mrb[0].mxu0 %v2848
    %v2941 = vpop.f32.mrb[0].mxu0
    %v2942 = vadd.f32 0.0, %v2941
    %v2943 = vpop.f32.mrb[0].mxu0
    %2944 = vdwg.mxu0
    %v2945 = vadd.f32 %v1818, %v2917
    %v2946 = vadd.f32 %v1819, %v2922
    %v2947 = vadd.f32 %v1820, %v2927
    %v2948 = vadd.f32 %v1821, %v2932
    %v2949 = vadd.f32 %v1822, %v2937
    %v2950 = vadd.f32 %v1823, %v2942
    %s2951 = scalar_lea.vmem %s9, 8
    %v2952 = vld [vmem:[%s2951] sm:$0x1]
    %v2954 = vlaneseq
    %v2955 = vshrl.u32 %v2954, 7
    %v2956 = vsub.s32 0, %v2955
    %v2957 = vrot.slane %v2952, %v2956
    %v2959 = vadd.f32 %v2945, %v2957
    %v2960 = vadd.f32 %v2946, %v2957
    %v2961 = vadd.f32 %v2947, %v2957
    %v2962 = vadd.f32 %v2948, %v2957
    %v2963 = vadd.f32 %v2949, %v2957
    %v2964 = vadd.f32 %v2950, %v2957
    %s2965 = scalar_lea.vmem %s7, 6
    %v2966 = vld [vmem:[%s2965] sm:$0x1]
    %s2967 = scalar_lea.vmem %s7, 7
    %v2968 = vld [vmem:[%s2967] sm:$0x1]
    %v2969 = vsel %vm272, %v2959, 0.0
    %2970 = vadd.xlane.f32.xlu0 %v2969
    %v2971 = vpop.xlane.xlu0 %2970
    %v2972 = vsel %vm272, %v2960, 0.0
    %2973 = vadd.xlane.f32.xlu0 %v2972
    %v2974 = vpop.xlane.xlu0 %2973
    %v2975 = vsel %vm272, %v2961, 0.0
    %2976 = vadd.xlane.f32.xlu0 %v2975
    %v2977 = vpop.xlane.xlu0 %2976
    %v2978 = vsel %vm272, %v2962, 0.0
    %2979 = vadd.xlane.f32.xlu0 %v2978
    %v2980 = vpop.xlane.xlu0 %2979
    %v2981 = vsel %vm272, %v2963, 0.0
    %2982 = vadd.xlane.f32.xlu0 %v2981
    %v2983 = vpop.xlane.xlu0 %2982
    %v2984 = vsel %vm272, %v2964, 0.0
    %2985 = vadd.xlane.f32.xlu0 %v2984
    %v2986 = vpop.xlane.xlu0 %2985
    %v2987 = vmul.f32 %v2971, %v291
    %v2988 = vmul.f32 %v2974, %v291
    %v2989 = vmul.f32 %v2977, %v291
    %v2990 = vmul.f32 %v2980, %v291
    %v2991 = vmul.f32 %v2983, %v291
    %v2992 = vmul.f32 %v2986, %v291
    %v2993 = vsub.f32 %v2959, %v2987
    %v2994 = vsub.f32 %v2960, %v2988
    %v2995 = vsub.f32 %v2961, %v2989
    %v2996 = vsub.f32 %v2962, %v2990
    %v2997 = vsub.f32 %v2963, %v2991
    %v2998 = vsub.f32 %v2964, %v2992
    %v2999 = vmul.f32 %v2993, %v2993
    %v3000 = vmul.f32 %v2994, %v2994
    %v3001 = vmul.f32 %v2995, %v2995
    %v3002 = vmul.f32 %v2996, %v2996
    %v3003 = vmul.f32 %v2997, %v2997
    %v3004 = vmul.f32 %v2998, %v2998
    %v3005 = vsel %vm272, %v2999, 0.0
    %3006 = vadd.xlane.f32.xlu0 %v3005
    %v3007 = vpop.xlane.xlu0 %3006
    %v3008 = vsel %vm272, %v3000, 0.0
    %3009 = vadd.xlane.f32.xlu0 %v3008
    %v3010 = vpop.xlane.xlu0 %3009
    %v3011 = vsel %vm272, %v3001, 0.0
    %3012 = vadd.xlane.f32.xlu0 %v3011
    %v3013 = vpop.xlane.xlu0 %3012
    %v3014 = vsel %vm272, %v3002, 0.0
    %3015 = vadd.xlane.f32.xlu0 %v3014
    %v3016 = vpop.xlane.xlu0 %3015
    %v3017 = vsel %vm272, %v3003, 0.0
    %3018 = vadd.xlane.f32.xlu0 %v3017
    %v3019 = vpop.xlane.xlu0 %3018
    %v3020 = vsel %vm272, %v3004, 0.0
    %3021 = vadd.xlane.f32.xlu0 %v3020
    %v3022 = vpop.xlane.xlu0 %3021
    %v3023 = vmul.f32 %v3007, %v291
    %v3024 = vmul.f32 %v3010, %v291
    %v3025 = vmul.f32 %v3013, %v291
    %v3026 = vmul.f32 %v3016, %v291
    %v3027 = vmul.f32 %v3019, %v291
    %v3028 = vmul.f32 %v3022, %v291
    %v3029 = vadd.f32 %v3023, 1e-05
    %v3030 = vadd.f32 %v3024, 1e-05
    %v3031 = vadd.f32 %v3025, 1e-05
    %v3032 = vadd.f32 %v3026, 1e-05
    %v3033 = vadd.f32 %v3027, 1e-05
    %v3034 = vadd.f32 %v3028, 1e-05
    %v3035 = vrsqrt.pop %v3029
    %v3036 = vrsqrt.pop %v3030
    %v3037 = vrsqrt.pop %v3031
    %v3038 = vrsqrt.pop %v3032
    %v3039 = vrsqrt.pop %v3033
    %v3040 = vrsqrt.pop %v3034
    %v3041 = vmul.f32 %v2993, %v3035
    %v3042 = vmul.f32 %v2994, %v3036
    %v3043 = vmul.f32 %v2995, %v3037
    %v3044 = vmul.f32 %v2996, %v3038
    %v3045 = vmul.f32 %v2997, %v3039
    %v3046 = vmul.f32 %v2998, %v3040
    %v3048 = vlaneseq
    %v3049 = vshrl.u32 %v3048, 7
    %v3050 = vsub.s32 0, %v3049
    %v3051 = vrot.slane %v2966, %v3050
    %v3053 = vmul.f32 %v3041, %v3051
    %v3054 = vmul.f32 %v3042, %v3051
    %v3055 = vmul.f32 %v3043, %v3051
    %v3056 = vmul.f32 %v3044, %v3051
    %v3057 = vmul.f32 %v3045, %v3051
    %v3058 = vmul.f32 %v3046, %v3051
    %v3060 = vlaneseq
    %v3061 = vshrl.u32 %v3060, 7
    %v3062 = vsub.s32 0, %v3061
    %v3063 = vrot.slane %v2968, %v3062
    %v3065 = vadd.f32 %v3053, %v3063
    %v3066 = vadd.f32 %v3054, %v3063
    %v3067 = vadd.f32 %v3055, %v3063
    %v3068 = vadd.f32 %v3056, %v3063
    %v3069 = vadd.f32 %v3057, %v3063
    %v3070 = vadd.f32 %v3058, %v3063
    %s3071 = scalar_lea.vmem %s10, 32
    %v3072 = vld [vmem:[%s3071] sm:$0xff]
    %v3073 = vld [vmem:[%s3071 + $0x8] sm:$0xff]
    %v3074 = vld [vmem:[%s3071 + $0x10] sm:$0xff]
    %v3075 = vld [vmem:[%s3071 + $0x18] sm:$0xff]
    %s3076 = scalar_lea.vmem %s11, 1
    %v3077 = vld [vmem:[%s3076] sm:$0x1]
    %v3079 = vlaneseq
    %v3080 = vshrl.u32 %v3079, 7
    %v3081 = vsub.s32 0, %v3080
    %v3082 = vrot.slane %v3077, %v3081
    %v3085 = vsel %vm272, %v3065, 0
    %v3088 = vsel %vm272, %v3066, 0
    %v3091 = vsel %vm272, %v3067, 0
    %v3094 = vsel %vm272, %v3068, 0
    %v3097 = vsel %vm272, %v3069, 0
    %v3100 = vsel %vm272, %v3070, 0
    %3102 = vmatprep.subr.mxu0 0.0
    %3103 = vmatpush1.msra.mxu0 %v3072
    %3104 = vmatprep.subr.mxu0 0.0
    %3105 = vmatpush1.msra.mxu0 %v3073
    %3106 = vmatprep.subr.mxu0 0.0
    %3107 = vmatpush1.msra.mxu0 %v3074
    %3108 = vmatprep.subr.mxu0 0.0
    %3109 = vmatpush1.msra.mxu0 %v3075
    %3110 = vmatprep.subr.mxu0 0.0
    %3111 = vmatpush1.msra.mxu0 0.0
    %3112 = vmatprep.subr.mxu0 0.0
    %3113 = vmatpush1.msra.mxu0 0.0
    %3114 = vmatprep.subr.mxu0 0.0
    %3115 = vmatpush1.msra.mxu0 0.0
    %3116 = vmatprep.subr.mxu0 0.0
    %3117 = vmatpush1.msra.mxu0 0.0
    %3118 = vmatprep.subr.mxu0 0.0
    %3119 = vmatpush1.msra.mxu0 0.0
    %3120 = vmatprep.subr.mxu0 0.0
    %3121 = vmatpush1.msra.mxu0 0.0
    %3122 = vmatprep.subr.mxu0 0.0
    %3123 = vmatpush1.msra.mxu0 0.0
    %3124 = vmatprep.subr.mxu0 0.0
    %3125 = vmatpush1.msra.mxu0 0.0
    %3126 = vmatprep.subr.mxu0 0.0
    %3127 = vmatpush1.msra.mxu0 0.0
    %3128 = vmatprep.subr.mxu0 0.0
    %3129 = vmatpush1.msra.mxu0 0.0
    %3130 = vmatprep.subr.mxu0 0.0
    %3131 = vmatpush1.msra.mxu0 0.0
    %3132 = vmatprep.subr.mxu0 0.0
    %3133 = vmatpush1.msra.mxu0 0.0
    %3134 = vmatprep.subr.mxu0 0.0
    %3135 = vmatpush1.msra.mxu0 0.0
    %3136 = vmatprep.subr.mxu0 0.0
    %3137 = vmatpush1.msra.mxu0 0.0
    %3138 = vmatprep.subr.mxu0 0.0
    %3139 = vmatpush1.msra.mxu0 0.0
    %3140 = vmatprep.subr.mxu0 0.0
    %3141 = vmatpush1.msra.mxu0 0.0
    %3142 = vmatprep.subr.mxu0 0.0
    %3143 = vmatpush1.msra.mxu0 0.0
    %3144 = vmatprep.subr.mxu0 0.0
    %3145 = vmatpush1.msra.mxu0 0.0
    %3146 = vmatprep.subr.mxu0 0.0
    %3147 = vmatpush1.msra.mxu0 0.0
    %3148 = vmatprep.subr.mxu0 0.0
    %3149 = vmatpush1.msra.mxu0 0.0
    %3150 = vmatprep.subr.mxu0 0.0
    %3151 = vmatpush1.msra.mxu0 0.0
    %3152 = vmatprep.subr.mxu0 0.0
    %3153 = vmatpush1.msra.mxu0 0.0
    %3154 = vmatprep.subr.mxu0 0.0
    %3155 = vmatpush1.msra.mxu0 0.0
    %3156 = vmatprep.subr.mxu0 0.0
    %3157 = vmatpush1.msra.mxu0 0.0
    %3158 = vmatprep.subr.mxu0 0.0
    %3159 = vmatpush1.msra.mxu0 0.0
    %3160 = vmatprep.subr.mxu0 0.0
    %3161 = vmatpush1.msra.mxu0 0.0
    %3162 = vmatprep.subr.mxu0 0.0
    %3163 = vmatpush1.msra.mxu0 0.0
    %3164 = vmatprep.subr.mxu0 0.0
    %3165 = vmatpush1.msra.mxu0 0.0
    %3166 = vmatprep.mubr.f32.mxu0 0.0
    %3167 = vmatmul.mubr.f32.gmra.mrb[0].mxu0 %v3085
    %v3168 = vpop.f32.mrb[0].mxu0
    %v3169 = vadd.f32 %v3082, %v3168
    %v3170 = vpop.f32.mrb[0].mxu0
    %3171 = vmatprep.mubr.f32.mxu0 0.0
    %3172 = vmatmul.mubr.f32.gmra.mrb[0].mxu0 %v3088
    %v3173 = vpop.f32.mrb[0].mxu0
    %v3174 = vadd.f32 %v3082, %v3173
    %v3175 = vpop.f32.mrb[0].mxu0
    %3176 = vmatprep.mubr.f32.mxu0 0.0
    %3177 = vmatmul.mubr.f32.gmra.mrb[0].mxu0 %v3091
    %v3178 = vpop.f32.mrb[0].mxu0
    %v3179 = vadd.f32 %v3082, %v3178
    %v3180 = vpop.f32.mrb[0].mxu0
    %3181 = vmatprep.mubr.f32.mxu0 0.0
    %3182 = vmatmul.mubr.f32.gmra.mrb[0].mxu0 %v3094
    %v3183 = vpop.f32.mrb[0].mxu0
    %v3184 = vadd.f32 %v3082, %v3183
    %v3185 = vpop.f32.mrb[0].mxu0
    %3186 = vmatprep.mubr.f32.mxu0 0.0
    %3187 = vmatmul.mubr.f32.gmra.mrb[0].mxu0 %v3097
    %v3188 = vpop.f32.mrb[0].mxu0
    %v3189 = vadd.f32 %v3082, %v3188
    %v3190 = vpop.f32.mrb[0].mxu0
    %3191 = vmatprep.mubr.f32.mxu0 0.0
    %3192 = vmatmul.mubr.f32.gmra.mrb[0].mxu0 %v3100
    %v3193 = vpop.f32.mrb[0].mxu0
    %v3194 = vadd.f32 %v3082, %v3193
    %v3195 = vpop.f32.mrb[0].mxu0
    %3196 = vdwg.mxu0
    %v3197 = vmul.f32 %v3169, 0.5
    %v3198 = vmul.f32 %v3174, 0.5
    %v3199 = vmul.f32 %v3179, 0.5
    %v3200 = vmul.f32 %v3184, 0.5
    %v3201 = vmul.f32 %v3189, 0.5
    %v3202 = vmul.f32 %v3194, 0.5
    %v3203 = vmul.f32 %v3169, 0.044715
    %v3204 = vmul.f32 %v3174, 0.044715
    %v3205 = vmul.f32 %v3179, 0.044715
    %v3206 = vmul.f32 %v3184, 0.044715
    %v3207 = vmul.f32 %v3189, 0.044715
    %v3208 = vmul.f32 %v3194, 0.044715
    %v3209 = vmul.f32 %v3203, %v3169
    %v3210 = vmul.f32 %v3204, %v3174
    %v3211 = vmul.f32 %v3205, %v3179
    %v3212 = vmul.f32 %v3206, %v3184
    %v3213 = vmul.f32 %v3207, %v3189
    %v3214 = vmul.f32 %v3208, %v3194
    %v3215 = vmul.f32 %v3209, %v3169
    %v3216 = vmul.f32 %v3210, %v3174
    %v3217 = vmul.f32 %v3211, %v3179
    %v3218 = vmul.f32 %v3212, %v3184
    %v3219 = vmul.f32 %v3213, %v3189
    %v3220 = vmul.f32 %v3214, %v3194
    %v3221 = vadd.f32 %v3169, %v3215
    %v3222 = vadd.f32 %v3174, %v3216
    %v3223 = vadd.f32 %v3179, %v3217
    %v3224 = vadd.f32 %v3184, %v3218
    %v3225 = vadd.f32 %v3189, %v3219
    %v3226 = vadd.f32 %v3194, %v3220
    %v3227 = vmul.f32 %v3221, 0.7978846
    %v3228 = vmul.f32 %v3222, 0.7978846
    %v3229 = vmul.f32 %v3223, 0.7978846
    %v3230 = vmul.f32 %v3224, 0.7978846
    %v3231 = vmul.f32 %v3225, 0.7978846
    %v3232 = vmul.f32 %v3226, 0.7978846
    %v3233 = vtanh.pop %v3227
    %v3234 = vtanh.pop %v3228
    %v3235 = vtanh.pop %v3229
    %v3236 = vtanh.pop %v3230
    %v3237 = vtanh.pop %v3231
    %v3238 = vtanh.pop %v3232
    %v3239 = vadd.f32 %v3233, 1.0
    %v3240 = vadd.f32 %v3234, 1.0
    %v3241 = vadd.f32 %v3235, 1.0
    %v3242 = vadd.f32 %v3236, 1.0
    %v3243 = vadd.f32 %v3237, 1.0
    %v3244 = vadd.f32 %v3238, 1.0
    %v3245 = vmul.f32 %v3197, %v3239
    %v3246 = vmul.f32 %v3198, %v3240
    %v3247 = vmul.f32 %v3199, %v3241
    %v3248 = vmul.f32 %v3200, %v3242
    %v3249 = vmul.f32 %v3201, %v3243
    %v3250 = vmul.f32 %v3202, %v3244
    %s3251 = scalar_lea.vmem %s12, 128
    %v3252 = vld [vmem:[%s3251] sm:$0xff]
    %v3253 = vld [vmem:[%s3251 + $0x8] sm:$0xff]
    %v3254 = vld [vmem:[%s3251 + $0x10] sm:$0xff]
    %v3255 = vld [vmem:[%s3251 + $0x18] sm:$0xff]
    %v3256 = vld [vmem:[%s3251 + $0x20] sm:$0xff]
    %v3257 = vld [vmem:[%s3251 + $0x28] sm:$0xff]
    %v3258 = vld [vmem:[%s3251 + $0x30] sm:$0xff]
    %v3259 = vld [vmem:[%s3251 + $0x38] sm:$0xff]
    %v3260 = vld [vmem:[%s3251 + $0x40] sm:$0xff]
    %v3261 = vld [vmem:[%s3251 + $0x48] sm:$0xff]
    %v3262 = vld [vmem:[%s3251 + $0x50] sm:$0xff]
    %v3263 = vld [vmem:[%s3251 + $0x58] sm:$0xff]
    %v3264 = vld [vmem:[%s3251 + $0x60] sm:$0xff]
    %v3265 = vld [vmem:[%s3251 + $0x68] sm:$0xff]
    %v3266 = vld [vmem:[%s3251 + $0x70] sm:$0xff]
    %v3267 = vld [vmem:[%s3251 + $0x78] sm:$0xff]
    %3268 = vmatprep.subr.mxu0 0.0
    %3269 = vmatpush1.msra.mxu0 %v3252
    %3270 = vmatprep.subr.mxu0 0.0
    %3271 = vmatpush1.msra.mxu0 %v3253
    %3272 = vmatprep.subr.mxu0 0.0
    %3273 = vmatpush1.msra.mxu0 %v3254
    %3274 = vmatprep.subr.mxu0 0.0
    %3275 = vmatpush1.msra.mxu0 %v3255
    %3276 = vmatprep.subr.mxu0 0.0
    %3277 = vmatpush1.msra.mxu0 %v3256
    %3278 = vmatprep.subr.mxu0 0.0
    %3279 = vmatpush1.msra.mxu0 %v3257
    %3280 = vmatprep.subr.mxu0 0.0
    %3281 = vmatpush1.msra.mxu0 %v3258
    %3282 = vmatprep.subr.mxu0 0.0
    %3283 = vmatpush1.msra.mxu0 %v3259
    %3284 = vmatprep.subr.mxu0 0.0
    %3285 = vmatpush1.msra.mxu0 %v3260
    %3286 = vmatprep.subr.mxu0 0.0
    %3287 = vmatpush1.msra.mxu0 %v3261
    %3288 = vmatprep.subr.mxu0 0.0
    %3289 = vmatpush1.msra.mxu0 %v3262
    %3290 = vmatprep.subr.mxu0 0.0
    %3291 = vmatpush1.msra.mxu0 %v3263
    %3292 = vmatprep.subr.mxu0 0.0
    %3293 = vmatpush1.msra.mxu0 %v3264
    %3294 = vmatprep.subr.mxu0 0.0
    %3295 = vmatpush1.msra.mxu0 %v3265
    %3296 = vmatprep.subr.mxu0 0.0
    %3297 = vmatpush1.msra.mxu0 %v3266
    %3298 = vmatprep.subr.mxu0 0.0
    %3299 = vmatpush1.msra.mxu0 %v3267
    %3300 = vmatprep.subr.mxu0 0.0
    %3301 = vmatpush1.msra.mxu0 0.0
    %3302 = vmatprep.subr.mxu0 0.0
    %3303 = vmatpush1.msra.mxu0 0.0
    %3304 = vmatprep.subr.mxu0 0.0
    %3305 = vmatpush1.msra.mxu0 0.0
    %3306 = vmatprep.subr.mxu0 0.0
    %3307 = vmatpush1.msra.mxu0 0.0
    %3308 = vmatprep.subr.mxu0 0.0
    %3309 = vmatpush1.msra.mxu0 0.0
    %3310 = vmatprep.subr.mxu0 0.0
    %3311 = vmatpush1.msra.mxu0 0.0
    %3312 = vmatprep.subr.mxu0 0.0
    %3313 = vmatpush1.msra.mxu0 0.0
    %3314 = vmatprep.subr.mxu0 0.0
    %3315 = vmatpush1.msra.mxu0 0.0
    %3316 = vmatprep.subr.mxu0 0.0
    %3317 = vmatpush1.msra.mxu0 0.0
    %3318 = vmatprep.subr.mxu0 0.0
    %3319 = vmatpush1.msra.mxu0 0.0
    %3320 = vmatprep.subr.mxu0 0.0
    %3321 = vmatpush1.msra.mxu0 0.0
    %3322 = vmatprep.subr.mxu0 0.0
    %3323 = vmatpush1.msra.mxu0 0.0
    %3324 = vmatprep.subr.mxu0 0.0
    %3325 = vmatpush1.msra.mxu0 0.0
    %3326 = vmatprep.subr.mxu0 0.0
    %3327 = vmatpush1.msra.mxu0 0.0
    %3328 = vmatprep.subr.mxu0 0.0
    %3329 = vmatpush1.msra.mxu0 0.0
    %3330 = vmatprep.subr.mxu0 0.0
    %3331 = vmatpush1.msra.mxu0 0.0
    %3332 = vmatprep.mubr.f32.mxu0 0.0
    %3333 = vmatmul.mubr.f32.gmra.mrb[0].mxu0 %v3245
    %v3334 = vpop.f32.mrb[0].mxu0
    %v3335 = vadd.f32 0.0, %v3334
    %v3336 = vpop.f32.mrb[0].mxu0
    %3337 = vmatprep.mubr.f32.mxu0 0.0
    %3338 = vmatmul.mubr.f32.gmra.mrb[0].mxu0 %v3246
    %v3339 = vpop.f32.mrb[0].mxu0
    %v3340 = vadd.f32 0.0, %v3339
    %v3341 = vpop.f32.mrb[0].mxu0
    %3342 = vmatprep.mubr.f32.mxu0 0.0
    %3343 = vmatmul.mubr.f32.gmra.mrb[0].mxu0 %v3247
    %v3344 = vpop.f32.mrb[0].mxu0
    %v3345 = vadd.f32 0.0, %v3344
    %v3346 = vpop.f32.mrb[0].mxu0
    %3347 = vmatprep.mubr.f32.mxu0 0.0
    %3348 = vmatmul.mubr.f32.gmra.mrb[0].mxu0 %v3248
    %v3349 = vpop.f32.mrb[0].mxu0
    %v3350 = vadd.f32 0.0, %v3349
    %v3351 = vpop.f32.mrb[0].mxu0
    %3352 = vmatprep.mubr.f32.mxu0 0.0
    %3353 = vmatmul.mubr.f32.gmra.mrb[0].mxu0 %v3249
    %v3354 = vpop.f32.mrb[0].mxu0
    %v3355 = vadd.f32 0.0, %v3354
    %v3356 = vpop.f32.mrb[0].mxu0
    %3357 = vmatprep.mubr.f32.mxu0 0.0
    %3358 = vmatmul.mubr.f32.gmra.mrb[0].mxu0 %v3250
    %v3359 = vpop.f32.mrb[0].mxu0
    %v3360 = vadd.f32 0.0, %v3359
    %v3361 = vpop.f32.mrb[0].mxu0
    %3362 = vdwg.mxu0
    %v3363 = vadd.f32 %v2959, %v3335
    %v3364 = vadd.f32 %v2960, %v3340
    %v3365 = vadd.f32 %v2961, %v3345
    %v3366 = vadd.f32 %v2962, %v3350
    %v3367 = vadd.f32 %v2963, %v3355
    %v3368 = vadd.f32 %v2964, %v3360
    %s3369 = scalar_lea.vmem %s9, 9
    %v3370 = vld [vmem:[%s3369] sm:$0x1]
    %v3372 = vlaneseq
    %v3373 = vshrl.u32 %v3372, 7
    %v3374 = vsub.s32 0, %v3373
    %v3375 = vrot.slane %v3370, %v3374
    %v3377 = vadd.f32 %v3363, %v3375
    %v3378 = vadd.f32 %v3364, %v3375
    %v3379 = vadd.f32 %v3365, %v3375
    %v3380 = vadd.f32 %v3366, %v3375
    %v3381 = vadd.f32 %v3367, %v3375
    %v3382 = vadd.f32 %v3368, %v3375
    %v3383 = vld [vmem:[%s6] sm:$0x3]
    %vm3384 = vcmask 392192
    %v3386 = vsel %vm3384, %v3383, 0
    %3388 = vmatprep.subr.mxu0 0.0
    %3389 = vmatpush1.msra.mxu0 %v3377
    %3390 = vmatprep.subr.mxu0 0.0
    %3391 = vmatpush1.msra.mxu0 %v3378
    %3392 = vmatprep.subr.mxu0 0.0
    %3393 = vmatpush1.msra.mxu0 %v3379
    %3394 = vmatprep.subr.mxu0 0.0
    %3395 = vmatpush1.msra.mxu0 %v3380
    %3396 = vmatprep.subr.mxu0 0.0
    %3397 = vmatpush1.msra.mxu0 %v3381
    %3398 = vmatprep.subr.mxu0 0.0
    %3399 = vmatpush1.msra.mxu0 %v3382
    %3400 = vmatprep.subr.mxu0 0.0
    %3401 = vmatpush1.msra.mxu0 0.0
    %3402 = vmatprep.subr.mxu0 0.0
    %3403 = vmatpush1.msra.mxu0 0.0
    %3404 = vmatprep.subr.mxu0 0.0
    %3405 = vmatpush1.msra.mxu0 0.0
    %3406 = vmatprep.subr.mxu0 0.0
    %3407 = vmatpush1.msra.mxu0 0.0
    %3408 = vmatprep.subr.mxu0 0.0
    %3409 = vmatpush1.msra.mxu0 0.0
    %3410 = vmatprep.subr.mxu0 0.0
    %3411 = vmatpush1.msra.mxu0 0.0
    %3412 = vmatprep.subr.mxu0 0.0
    %3413 = vmatpush1.msra.mxu0 0.0
    %3414 = vmatprep.subr.mxu0 0.0
    %3415 = vmatpush1.msra.mxu0 0.0
    %3416 = vmatprep.subr.mxu0 0.0
    %3417 = vmatpush1.msra.mxu0 0.0
    %3418 = vmatprep.subr.mxu0 0.0
    %3419 = vmatpush1.msra.mxu0 0.0
    %3420 = vmatprep.subr.mxu0 0.0
    %3421 = vmatpush1.msra.mxu0 0.0
    %3422 = vmatprep.subr.mxu0 0.0
    %3423 = vmatpush1.msra.mxu0 0.0
    %3424 = vmatprep.subr.mxu0 0.0
    %3425 = vmatpush1.msra.mxu0 0.0
    %3426 = vmatprep.subr.mxu0 0.0
    %3427 = vmatpush1.msra.mxu0 0.0
    %3428 = vmatprep.subr.mxu0 0.0
    %3429 = vmatpush1.msra.mxu0 0.0
    %3430 = vmatprep.subr.mxu0 0.0
    %3431 = vmatpush1.msra.mxu0 0.0
    %3432 = vmatprep.subr.mxu0 0.0
    %3433 = vmatpush1.msra.mxu0 0.0
    %3434 = vmatprep.subr.mxu0 0.0
    %3435 = vmatpush1.msra.mxu0 0.0
    %3436 = vmatprep.subr.mxu0 0.0
    %3437 = vmatpush1.msra.mxu0 0.0
    %3438 = vmatprep.subr.mxu0 0.0
    %3439 = vmatpush1.msra.mxu0 0.0
    %3440 = vmatprep.subr.mxu0 0.0
    %3441 = vmatpush1.msra.mxu0 0.0
    %3442 = vmatprep.subr.mxu0 0.0
    %3443 = vmatpush1.msra.mxu0 0.0
    %3444 = vmatprep.subr.mxu0 0.0
    %3445 = vmatpush1.msra.mxu0 0.0
    %3446 = vmatprep.subr.mxu0 0.0
    %3447 = vmatpush1.msra.mxu0 0.0
    %3448 = vmatprep.subr.mxu0 0.0
    %3449 = vmatpush1.msra.mxu0 0.0
    %3450 = vmatprep.subr.mxu0 0.0
    %3451 = vmatpush1.msra.mxu0 0.0
    %3452 = vmatprep.mubr.f32.mxu0 0.0
    %3453 = vmatmul.mubr.f32.gmra.mrb[0].mxu0 %v3386
    %v3454 = vpop.f32.mrb[0].mxu0
    %v3455 = vadd.f32 0.0, %v3454
    %v3456 = vpop.f32.mrb[0].mxu0
    %3457 = vdwg.mxu0
    %s3458 = scalar_lea.vmem %s7, 8
    %v3459 = vld [vmem:[%s3458] sm:$0x1]
    %s3460 = scalar_lea.vmem %s7, 9
    %v3461 = vld [vmem:[%s3460] sm:$0x1]
    %vm3462 = vcmask 254976
    %v3463 = vsel %vm3462, %v3455, 0.0
    %3464 = vadd.xlane.f32.xlu0 %v3463
    %v3465 = vpop.xlane.xlu0 %3464
    %v3466 = vmul.f32 %v3465, %v291
    %v3467 = vsub.f32 %v3455, %v3466
    %v3468 = vmul.f32 %v3467, %v3467
    %v3469 = vsel %vm3462, %v3468, 0.0
    %3470 = vadd.xlane.f32.xlu0 %v3469
    %v3471 = vpop.xlane.xlu0 %3470
    %v3472 = vmul.f32 %v3471, %v291
    %v3473 = vadd.f32 %v3472, 1e-05
    %v3474 = vrsqrt.pop %v3473
    %v3475 = vmul.f32 %v3467, %v3474
    %v3477 = vlaneseq
    %v3478 = vshrl.u32 %v3477, 7
    %v3479 = vsub.s32 0, %v3478
    %v3480 = vrot.slane %v3459, %v3479
    %v3482 = vmul.f32 %v3475, %v3480
    %v3484 = vlaneseq
    %v3485 = vshrl.u32 %v3484, 7
    %v3486 = vsub.s32 0, %v3485
    %v3487 = vrot.slane %v3461, %v3486
    %v3489 = vadd.f32 %v3482, %v3487
    %v3490 = vld [vmem:[%s13] sm:$0xff]
    %v3491 = vld [vmem:[%s13 + $0x8] sm:$0xff]
    %v3492 = vld [vmem:[%s13 + $0x10] sm:$0xff]
    %v3493 = vld [vmem:[%s13 + $0x18] sm:$0xff]
    %v3494 = vld [vmem:[%s14] sm:$0x1]
    %v3496 = vlaneseq
    %v3497 = vshrl.u32 %v3496, 7
    %v3498 = vsub.s32 0, %v3497
    %v3499 = vrot.slane %v3494, %v3498
    %v3502 = vsel %vm272, %v3489, 0
    %3504 = vmatprep.subr.mxu0 0.0
    %3505 = vmatpush1.msra.mxu0 %v3490
    %3506 = vmatprep.subr.mxu0 0.0
    %3507 = vmatpush1.msra.mxu0 %v3491
    %3508 = vmatprep.subr.mxu0 0.0
    %3509 = vmatpush1.msra.mxu0 %v3492
    %3510 = vmatprep.subr.mxu0 0.0
    %3511 = vmatpush1.msra.mxu0 %v3493
    %3512 = vmatprep.subr.mxu0 0.0
    %3513 = vmatpush1.msra.mxu0 0.0
    %3514 = vmatprep.subr.mxu0 0.0
    %3515 = vmatpush1.msra.mxu0 0.0
    %3516 = vmatprep.subr.mxu0 0.0
    %3517 = vmatpush1.msra.mxu0 0.0
    %3518 = vmatprep.subr.mxu0 0.0
    %3519 = vmatpush1.msra.mxu0 0.0
    %3520 = vmatprep.subr.mxu0 0.0
    %3521 = vmatpush1.msra.mxu0 0.0
    %3522 = vmatprep.subr.mxu0 0.0
    %3523 = vmatpush1.msra.mxu0 0.0
    %3524 = vmatprep.subr.mxu0 0.0
    %3525 = vmatpush1.msra.mxu0 0.0
    %3526 = vmatprep.subr.mxu0 0.0
    %3527 = vmatpush1.msra.mxu0 0.0
    %3528 = vmatprep.subr.mxu0 0.0
    %3529 = vmatpush1.msra.mxu0 0.0
    %3530 = vmatprep.subr.mxu0 0.0
    %3531 = vmatpush1.msra.mxu0 0.0
    %3532 = vmatprep.subr.mxu0 0.0
    %3533 = vmatpush1.msra.mxu0 0.0
    %3534 = vmatprep.subr.mxu0 0.0
    %3535 = vmatpush1.msra.mxu0 0.0
    %3536 = vmatprep.subr.mxu0 0.0
    %3537 = vmatpush1.msra.mxu0 0.0
    %3538 = vmatprep.subr.mxu0 0.0
    %3539 = vmatpush1.msra.mxu0 0.0
    %3540 = vmatprep.subr.mxu0 0.0
    %3541 = vmatpush1.msra.mxu0 0.0
    %3542 = vmatprep.subr.mxu0 0.0
    %3543 = vmatpush1.msra.mxu0 0.0
    %3544 = vmatprep.subr.mxu0 0.0
    %3545 = vmatpush1.msra.mxu0 0.0
    %3546 = vmatprep.subr.mxu0 0.0
    %3547 = vmatpush1.msra.mxu0 0.0
    %3548 = vmatprep.subr.mxu0 0.0
    %3549 = vmatpush1.msra.mxu0 0.0
    %3550 = vmatprep.subr.mxu0 0.0
    %3551 = vmatpush1.msra.mxu0 0.0
    %3552 = vmatprep.subr.mxu0 0.0
    %3553 = vmatpush1.msra.mxu0 0.0
    %3554 = vmatprep.subr.mxu0 0.0
    %3555 = vmatpush1.msra.mxu0 0.0
    %3556 = vmatprep.subr.mxu0 0.0
    %3557 = vmatpush1.msra.mxu0 0.0
    %3558 = vmatprep.subr.mxu0 0.0
    %3559 = vmatpush1.msra.mxu0 0.0
    %3560 = vmatprep.subr.mxu0 0.0
    %3561 = vmatpush1.msra.mxu0 0.0
    %3562 = vmatprep.subr.mxu0 0.0
    %3563 = vmatpush1.msra.mxu0 0.0
    %3564 = vmatprep.subr.mxu0 0.0
    %3565 = vmatpush1.msra.mxu0 0.0
    %3566 = vmatprep.subr.mxu0 0.0
    %3567 = vmatpush1.msra.mxu0 0.0
    %3568 = vmatprep.mubr.f32.mxu0 0.0
    %3569 = vmatmul.mubr.f32.gmra.mrb[0].mxu0 %v3502
    %v3570 = vpop.f32.mrb[0].mxu0
    %v3571 = vadd.f32 %v3499, %v3570
    %v3572 = vpop.f32.mrb[0].mxu0
    %3573 = vdwg.mxu0
    %3574 = vst [vmem:[#allocation2] sm:$0x3] %v3571
    // Predicated region
    $region62: #{vit_forward.1} parent=1 // pred_check
      _
    $region63: #{vit_forward.1} parent=1 // pred_check_branch
      %3576 = sbr.rel (0) target = $region65
    $region64: #{vit_forward.1} parent=1 // pred_region
      %s3578 = ssub.s32 32, 32
      %3579 = vsyncadd [#allocation3], %s3578
      %s3581 = sshll.u32 [#allocation2], 4
      %s3582 = int_to_ptr.vmem [resolvable:$true] %s3581
      %3584 = dma.vmem_to_hbm [thread:$0]  %s3582, 32, %s15, [#allocation3]
    $region65: #{vit_forward.1} parent=1 // pred_fallthru
      _
    // Predicated region
    $region66: #{vit_forward.1} parent=1 // pred_check
      _
    $region67: #{vit_forward.1} parent=1 // pred_check_branch
      %3586 = sbr.rel (0) target = $region69
    $region68: #{vit_forward.1} parent=1 // pred_region
      %3587 = dma.done [#allocation3], 32
    $region69: #{vit_forward.1} parent=1 // pred_fallthru
      _
    %3588 = vsyncpa [#allocation3], 1

</llo_original>
